<compile_context>
chip_gen: v5e
topology: v5e:2x2
jax: 0.10.0
libtpu: 0.0.40
codegen_flags: <defaults>
</compile_context>

<pallas_src>
import math
from functools import partial

import jax
import jax.numpy as jnp
from jax.experimental import pallas as pl
from jax.experimental.pallas import tpu as pltpu

EPS = 1e-5


# ----------------------------------------------------------------- kernel ---

def _rcl_fused_kernel(x_ref, wc_ref, ws_ref, hw_ref, out_ref, *, H, W, steps):
    """All `steps` recurrent iterations of SpikingRCLbn6 in one invocation.

    x_ref   : (Cp, S)        lane-dense padded input (f32), step-invariant
    wc_ref  : (9, Cp, Cp)    recurrent conv weight, one (Co,Ci) slab per tap (bf16)
    ws_ref  : (9, Cp, Cp)    shortcut conv weight (bf16)
    hw_ref  : (2, S)         int32 per-position (h, w) coordinates within an image
    out_ref : (steps, Cp, S) per-step outputs (f32)
    """
    Cp, S = x_ref.shape
    inv_n = 1.0 / S                       # BN count = N*H*W (S is unpadded)

    # ---- 3x3 zero-padding validity masks, built on-chip once per call. ----
    hh = hw_ref[0:1, :]                   # (1, S) int32 row index within image
    ww = hw_ref[1:2, :]                   # (1, S) int32 col index within image
    masks = []
    for t in range(9):
        dh, dw = t // 3 - 1, t % 3 - 1
        if t == 4:                        # center tap: mask is all-ones
            masks.append(None)
            continue
        ok = ((hh + dh >= 0) & (hh + dh < H) &
              (ww + dw >= 0) & (ww + dw < W))
        masks.append(ok.astype(jnp.float32))          # (1, S), broadcast later

    def conv3x3(a, w_ref):
        # a: (Cp, S) f32.  Nine accumulated MXU dots over XLU lane-rolled
        # taps; bf16 operands, f32 accumulation.  No im2col buffer.
        acc = jnp.zeros((Cp, S), jnp.float32)
        for t in range(9):
            dh, dw = t // 3 - 1, t % 3 - 1
            d = dh * W + dw               # flat spatial offset of tap t
            shifted = a if d == 0 else pltpu.roll(a, shift=(-d) % S, axis=1)
            if t != 4:
                shifted = shifted * masks[t]
            acc = acc + jnp.dot(w_ref[t], shifted.astype(jnp.bfloat16),
                                preferred_element_type=jnp.float32)
        return acc

    def batchnorm(z):
        # Training-mode BN (gamma=1, beta=0), all f32, two-pass variance.
        mean = jnp.sum(z, axis=-1, keepdims=True) * inv_n
        zc = z - mean
        var = jnp.sum(zc * zc, axis=-1, keepdims=True) * inv_n
        return zc * jax.lax.rsqrt(var + EPS)

    # ---- step 0: BN(shortcut(x)) is step-invariant -> hoisted & reused. ---
    bnsc = batchnorm(conv3x3(x_ref[...], ws_ref))
    last = jnp.maximum(bnsc, 0.0)
    out_ref[0] = last

    # ---- steps 1..steps-1 (steps is small & static -> static unroll). -----
    for step in range(1, steps):
        z = batchnorm(conv3x3(last, wc_ref)) + bnsc
        last = jnp.maximum(z, 0.0)
        out_ref[step] = last


# --------------------------------------------------------------- wrappers ---

def _pack_weight_taps(w_oihw, cp):
    """PyTorch OIHW (Co,Ci,3,3) -> (9, Cp, Cp) bf16; tap index t = kh*3 + kw."""
    co, ci = w_oihw.shape[0], w_oihw.shape[1]
    w_t = jnp.transpose(w_oihw, (2, 3, 0, 1)).reshape(9, co, ci)
    w_t = jnp.pad(w_t, ((0, 0), (0, cp - co), (0, cp - ci)))
    return w_t.astype(jnp.bfloat16)


@partial(jax.jit, static_argnames=("steps",))
def spiking_rcl_bn6_forward(x_nchw, w_conv, w_short, *, steps):
    """Runs all recurrent steps fused; returns (steps, N, C, H, W) outputs."""
    N, C, H, W = x_nchw.shape
    S = N * H * W
    Cp = max(8, -(-C // 8) * 8)                       # sublane-aligned channels
    # Blocks below are full-array, so S need not be a multiple of 128 for
    # correctness; pad S to a lane multiple (folding the pad into the masks
    # and keeping inv_n at the true count) only if odd sizes ever matter.

    # Lane-dense (Cp, S) activation layout; pad channels with zeros.
    x_cs = jnp.transpose(x_nchw, (1, 0, 2, 3)).reshape(C, S)
    x_cs = jnp.pad(x_cs, ((0, Cp - C), (0, 0))).astype(jnp.float32)
    wc = _pack_weight_taps(w_conv, Cp)
    ws = _pack_weight_taps(w_short, Cp)

    # Compact per-position (h, w) coordinates; the masks themselves are built
    # on-chip from compares (no vector int div/mod inside the kernel).
    s = jnp.arange(S, dtype=jnp.int32)
    hw = jnp.stack([(s // W) % H, s % W], axis=0)     # (2, S) int32

    outs = pl.pallas_call(
        partial(_rcl_fused_kernel, H=H, W=W, steps=steps),
        out_shape=jax.ShapeDtypeStruct((steps, Cp, S), jnp.float32),
        grid_spec=pltpu.PrefetchScalarGridSpec(
            num_scalar_prefetch=0,
            grid=(1,),                                # single launch, single step
            in_specs=[
                pl.BlockSpec((Cp, S), lambda i: (0, 0)),          # x
                pl.BlockSpec((9, Cp, Cp), lambda i: (0, 0, 0)),   # conv weight
                pl.BlockSpec((9, Cp, Cp), lambda i: (0, 0, 0)),   # shortcut wt
                pl.BlockSpec((2, S), lambda i: (0, 0)),           # (h, w) coords
            ],
            out_specs=pl.BlockSpec((steps, Cp, S), lambda i: (0, 0, 0)),
        ),
        compiler_params=pltpu.CompilerParams(
            dimension_semantics=("arbitrary",)),
    )(x_cs, wc, ws, hw)

    outs = outs[:, :C, :].reshape(steps, C, N, H, W)
    return jnp.transpose(outs, (0, 2, 1, 3, 4))       # (steps, N, C, H, W)


class SpikingRCLbn6:
    """JAX/Pallas port of the recurrent conv block (training-mode BN)."""

    # TODO(synk): BatchNorm running_mean/running_var momentum updates are
    # training-only side state and are not tracked; they never affect the
    # returned activations in training mode.

    def __init__(self, inplanes, steps=4, key=None):
        self.inplanes = inplanes
        self.steps = steps
        if key is None:
            key = jax.random.PRNGKey(0)
        k1, k2 = jax.random.split(key)
        # PyTorch init: normal_(0, sqrt(2 / (kh*kw*out_channels))), OIHW.
        std = math.sqrt(2.0 / (3 * 3 * inplanes))
        self.conv_w = std * jax.random.normal(
            k1, (inplanes, inplanes, 3, 3), jnp.float32)
        self.shortcut_w = std * jax.random.normal(
            k2, (inplanes, inplanes, 3, 3), jnp.float32)

    def __call__(self, x_nchw):
        # Equivalent to calling the PyTorch forward() `steps` times on the
        # same input x; returns the stacked per-step outputs (NCHW).
        return spiking_rcl_bn6_forward(x_nchw, self.conv_w, self.shortcut_w,
                                       steps=self.steps)


# -------------------------------------------------- pure-JAX reference ------

def _reference_forward(x, w_conv, w_short, steps, operand_dtype=jnp.float32):
    """Module semantics.  operand_dtype=bfloat16 mimics the kernel's bf16 MXU
    operands (weights/activations rounded to bf16, f32 accumulation)."""
    f32 = jnp.float32

    def conv(a, w):
        a = a.astype(operand_dtype).astype(f32)
        w = w.astype(operand_dtype).astype(f32)
        return jax.lax.conv_general_dilated(
            a, w, window_strides=(1, 1), padding=((1, 1), (1, 1)),
            dimension_numbers=("NCHW", "OIHW", "NCHW"),
            precision=jax.lax.Precision.HIGHEST)

    def bn(z):
        m = jnp.mean(z, axis=(0, 2, 3), keepdims=True)
        v = jnp.mean((z - m) ** 2, axis=(0, 2, 3), keepdims=True)
        return (z - m) * jax.lax.rsqrt(v + EPS)

    outs, last = [], None
    for i in range(steps):
        if i == 0:
            z = bn(conv(x, w_short))
        else:
            z = bn(conv(last, w_conv)) + bn(conv(x, w_short))
        out = jnp.maximum(z, 0.0)          # relu(z); bn[0](z) is discarded
        outs.append(out)
        last = out
    return jnp.stack(outs, axis=0)


# -------------------------------------------------------------------- main --

if __name__ == "__main__":
    inplanes, steps = 4, 4
    batch, spatial = 2, 16

    key = jax.random.PRNGKey(0)
    k_mod, k_x = jax.random.split(key)

    module = SpikingRCLbn6(inplanes, steps=steps, key=k_mod)
    x = jax.random.normal(k_x, (batch, inplanes, spatial, spatial),
                          jnp.float32)

    outs = jax.block_until_ready(module(x))
    assert outs.shape == (steps, batch, inplanes, spatial, spatial)
    assert bool(jnp.all(jnp.isfinite(outs)))

    # Tight check: reference with the same bf16 operand rounding — isolates
    # kernel structure / BN / ReLU from the intentional bf16 matmul precision.
    ref_bf16 = _reference_forward(x, module.conv_w, module.shortcut_w, steps,
                                  operand_dtype=jnp.bfloat16)
    err_tight = float(jnp.max(jnp.abs(outs - ref_bf16)))
    assert bool(jnp.allclose(outs, ref_bf16, rtol=2e-2, atol=2e-2)), err_tight

    # Loose check: exact f32 module semantics (bounds the total bf16 drift
    # accumulated across the 4 recurrent steps).
    ref_f32 = _reference_forward(x, module.conv_w, module.shortcut_w, steps)
    err_loose = float(jnp.max(jnp.abs(outs - ref_f32)))
    assert bool(jnp.allclose(outs, ref_f32, rtol=1e-1, atol=1e-1)), err_loose

    print("KERNEL_OK")
</pallas_src>

<mosaic_0001>
module attributes {stable_mosaic.version = 11 : i64} {
  func.func @_rcl_fused_kernel(%arg0: i32, %arg1: memref<8x512xf32, #tpu.memory_space<vmem>>, %arg2: memref<9x8x8xbf16, #tpu.memory_space<vmem>>, %arg3: memref<9x8x8xbf16, #tpu.memory_space<vmem>>, %arg4: memref<2x512xi32, #tpu.memory_space<vmem>>, %arg5: memref<4x8x512xf32, #tpu.memory_space<vmem>>) attributes {dimension_semantics = [#tpu.dimension_semantics<arbitrary>], iteration_bounds = array<i64: 1>, scalar_prefetch = 0 : i64, scratch_operands = 0 : i64, tpu.core_type = #tpu.core_type<tc>, window_params = [{pipeline_mode = #tpu.pipeline_mode<synchronous>, transform_indices = @transform_0, window_bounds = array<i64: 8, 512>}, {pipeline_mode = #tpu.pipeline_mode<synchronous>, transform_indices = @transform_1, window_bounds = array<i64: 9, 8, 8>}, {pipeline_mode = #tpu.pipeline_mode<synchronous>, transform_indices = @transform_2, window_bounds = array<i64: 9, 8, 8>}, {pipeline_mode = #tpu.pipeline_mode<synchronous>, transform_indices = @transform_3, window_bounds = array<i64: 2, 512>}, {pipeline_mode = #tpu.pipeline_mode<synchronous>, transform_indices = @transform_4, window_bounds = array<i64: 4, 8, 512>}]} {
    %c0 = arith.constant 0 : index
    %c0_0 = arith.constant 0 : index
    %0 = vector.load %arg4[%c0, %c0_0] : memref<2x512xi32, #tpu.memory_space<vmem>>, vector<1x512xi32>
    %c1 = arith.constant 1 : index
    %c0_1 = arith.constant 0 : index
    %1 = vector.load %arg4[%c1, %c0_1] : memref<2x512xi32, #tpu.memory_space<vmem>>, vector<1x512xi32>
    %c-1_i32 = arith.constant -1 : i32
    %2 = vector.broadcast %c-1_i32 : i32 to vector<1x512xi32>
    %3 = arith.addi %0, %2 : vector<1x512xi32>
    %c0_i32 = arith.constant 0 : i32
    %4 = vector.broadcast %c0_i32 : i32 to vector<1x512xi32>
    %5 = arith.cmpi sge, %3, %4 : vector<1x512xi32>
    %c-1_i32_2 = arith.constant -1 : i32
    %6 = vector.broadcast %c-1_i32_2 : i32 to vector<1x512xi32>
    %7 = arith.addi %0, %6 : vector<1x512xi32>
    %c16_i32 = arith.constant 16 : i32
    %8 = vector.broadcast %c16_i32 : i32 to vector<1x512xi32>
    %9 = arith.cmpi slt, %7, %8 : vector<1x512xi32>
    %10 = arith.andi %5, %9 : vector<1x512xi1>
    %c-1_i32_3 = arith.constant -1 : i32
    %11 = vector.broadcast %c-1_i32_3 : i32 to vector<1x512xi32>
    %12 = arith.addi %1, %11 : vector<1x512xi32>
    %c0_i32_4 = arith.constant 0 : i32
    %13 = vector.broadcast %c0_i32_4 : i32 to vector<1x512xi32>
    %14 = arith.cmpi sge, %12, %13 : vector<1x512xi32>
    %15 = arith.andi %10, %14 : vector<1x512xi1>
    %c-1_i32_5 = arith.constant -1 : i32
    %16 = vector.broadcast %c-1_i32_5 : i32 to vector<1x512xi32>
    %17 = arith.addi %1, %16 : vector<1x512xi32>
    %c16_i32_6 = arith.constant 16 : i32
    %18 = vector.broadcast %c16_i32_6 : i32 to vector<1x512xi32>
    %19 = arith.cmpi slt, %17, %18 : vector<1x512xi32>
    %20 = arith.andi %15, %19 : vector<1x512xi1>
    %21 = arith.extui %20 : vector<1x512xi1> to vector<1x512xi32>
    %22 = arith.sitofp %21 : vector<1x512xi32> to vector<1x512xf32>
    %c-1_i32_7 = arith.constant -1 : i32
    %23 = vector.broadcast %c-1_i32_7 : i32 to vector<1x512xi32>
    %24 = arith.addi %0, %23 : vector<1x512xi32>
    %c0_i32_8 = arith.constant 0 : i32
    %25 = vector.broadcast %c0_i32_8 : i32 to vector<1x512xi32>
    %26 = arith.cmpi sge, %24, %25 : vector<1x512xi32>
    %c-1_i32_9 = arith.constant -1 : i32
    %27 = vector.broadcast %c-1_i32_9 : i32 to vector<1x512xi32>
    %28 = arith.addi %0, %27 : vector<1x512xi32>
    %c16_i32_10 = arith.constant 16 : i32
    %29 = vector.broadcast %c16_i32_10 : i32 to vector<1x512xi32>
    %30 = arith.cmpi slt, %28, %29 : vector<1x512xi32>
    %31 = arith.andi %26, %30 : vector<1x512xi1>
    %c0_i32_11 = arith.constant 0 : i32
    %32 = vector.broadcast %c0_i32_11 : i32 to vector<1x512xi32>
    %33 = arith.addi %1, %32 : vector<1x512xi32>
    %c0_i32_12 = arith.constant 0 : i32
    %34 = vector.broadcast %c0_i32_12 : i32 to vector<1x512xi32>
    %35 = arith.cmpi sge, %33, %34 : vector<1x512xi32>
    %36 = arith.andi %31, %35 : vector<1x512xi1>
    %c0_i32_13 = arith.constant 0 : i32
    %37 = vector.broadcast %c0_i32_13 : i32 to vector<1x512xi32>
    %38 = arith.addi %1, %37 : vector<1x512xi32>
    %c16_i32_14 = arith.constant 16 : i32
    %39 = vector.broadcast %c16_i32_14 : i32 to vector<1x512xi32>
    %40 = arith.cmpi slt, %38, %39 : vector<1x512xi32>
    %41 = arith.andi %36, %40 : vector<1x512xi1>
    %42 = arith.extui %41 : vector<1x512xi1> to vector<1x512xi32>
    %43 = arith.sitofp %42 : vector<1x512xi32> to vector<1x512xf32>
    %c-1_i32_15 = arith.constant -1 : i32
    %44 = vector.broadcast %c-1_i32_15 : i32 to vector<1x512xi32>
    %45 = arith.addi %0, %44 : vector<1x512xi32>
    %c0_i32_16 = arith.constant 0 : i32
    %46 = vector.broadcast %c0_i32_16 : i32 to vector<1x512xi32>
    %47 = arith.cmpi sge, %45, %46 : vector<1x512xi32>
    %c-1_i32_17 = arith.constant -1 : i32
    %48 = vector.broadcast %c-1_i32_17 : i32 to vector<1x512xi32>
    %49 = arith.addi %0, %48 : vector<1x512xi32>
    %c16_i32_18 = arith.constant 16 : i32
    %50 = vector.broadcast %c16_i32_18 : i32 to vector<1x512xi32>
    %51 = arith.cmpi slt, %49, %50 : vector<1x512xi32>
    %52 = arith.andi %47, %51 : vector<1x512xi1>
    %c1_i32 = arith.constant 1 : i32
    %53 = vector.broadcast %c1_i32 : i32 to vector<1x512xi32>
    %54 = arith.addi %1, %53 : vector<1x512xi32>
    %c0_i32_19 = arith.constant 0 : i32
    %55 = vector.broadcast %c0_i32_19 : i32 to vector<1x512xi32>
    %56 = arith.cmpi sge, %54, %55 : vector<1x512xi32>
    %57 = arith.andi %52, %56 : vector<1x512xi1>
    %c1_i32_20 = arith.constant 1 : i32
    %58 = vector.broadcast %c1_i32_20 : i32 to vector<1x512xi32>
    %59 = arith.addi %1, %58 : vector<1x512xi32>
    %c16_i32_21 = arith.constant 16 : i32
    %60 = vector.broadcast %c16_i32_21 : i32 to vector<1x512xi32>
    %61 = arith.cmpi slt, %59, %60 : vector<1x512xi32>
    %62 = arith.andi %57, %61 : vector<1x512xi1>
    %63 = arith.extui %62 : vector<1x512xi1> to vector<1x512xi32>
    %64 = arith.sitofp %63 : vector<1x512xi32> to vector<1x512xf32>
    %c0_i32_22 = arith.constant 0 : i32
    %65 = vector.broadcast %c0_i32_22 : i32 to vector<1x512xi32>
    %66 = arith.addi %0, %65 : vector<1x512xi32>
    %c0_i32_23 = arith.constant 0 : i32
    %67 = vector.broadcast %c0_i32_23 : i32 to vector<1x512xi32>
    %68 = arith.cmpi sge, %66, %67 : vector<1x512xi32>
    %c0_i32_24 = arith.constant 0 : i32
    %69 = vector.broadcast %c0_i32_24 : i32 to vector<1x512xi32>
    %70 = arith.addi %0, %69 : vector<1x512xi32>
    %c16_i32_25 = arith.constant 16 : i32
    %71 = vector.broadcast %c16_i32_25 : i32 to vector<1x512xi32>
    %72 = arith.cmpi slt, %70, %71 : vector<1x512xi32>
    %73 = arith.andi %68, %72 : vector<1x512xi1>
    %c-1_i32_26 = arith.constant -1 : i32
    %74 = vector.broadcast %c-1_i32_26 : i32 to vector<1x512xi32>
    %75 = arith.addi %1, %74 : vector<1x512xi32>
    %c0_i32_27 = arith.constant 0 : i32
    %76 = vector.broadcast %c0_i32_27 : i32 to vector<1x512xi32>
    %77 = arith.cmpi sge, %75, %76 : vector<1x512xi32>
    %78 = arith.andi %73, %77 : vector<1x512xi1>
    %c-1_i32_28 = arith.constant -1 : i32
    %79 = vector.broadcast %c-1_i32_28 : i32 to vector<1x512xi32>
    %80 = arith.addi %1, %79 : vector<1x512xi32>
    %c16_i32_29 = arith.constant 16 : i32
    %81 = vector.broadcast %c16_i32_29 : i32 to vector<1x512xi32>
    %82 = arith.cmpi slt, %80, %81 : vector<1x512xi32>
    %83 = arith.andi %78, %82 : vector<1x512xi1>
    %84 = arith.extui %83 : vector<1x512xi1> to vector<1x512xi32>
    %85 = arith.sitofp %84 : vector<1x512xi32> to vector<1x512xf32>
    %c0_i32_30 = arith.constant 0 : i32
    %86 = vector.broadcast %c0_i32_30 : i32 to vector<1x512xi32>
    %87 = arith.addi %0, %86 : vector<1x512xi32>
    %c0_i32_31 = arith.constant 0 : i32
    %88 = vector.broadcast %c0_i32_31 : i32 to vector<1x512xi32>
    %89 = arith.cmpi sge, %87, %88 : vector<1x512xi32>
    %c0_i32_32 = arith.constant 0 : i32
    %90 = vector.broadcast %c0_i32_32 : i32 to vector<1x512xi32>
    %91 = arith.addi %0, %90 : vector<1x512xi32>
    %c16_i32_33 = arith.constant 16 : i32
    %92 = vector.broadcast %c16_i32_33 : i32 to vector<1x512xi32>
    %93 = arith.cmpi slt, %91, %92 : vector<1x512xi32>
    %94 = arith.andi %89, %93 : vector<1x512xi1>
    %c1_i32_34 = arith.constant 1 : i32
    %95 = vector.broadcast %c1_i32_34 : i32 to vector<1x512xi32>
    %96 = arith.addi %1, %95 : vector<1x512xi32>
    %c0_i32_35 = arith.constant 0 : i32
    %97 = vector.broadcast %c0_i32_35 : i32 to vector<1x512xi32>
    %98 = arith.cmpi sge, %96, %97 : vector<1x512xi32>
    %99 = arith.andi %94, %98 : vector<1x512xi1>
    %c1_i32_36 = arith.constant 1 : i32
    %100 = vector.broadcast %c1_i32_36 : i32 to vector<1x512xi32>
    %101 = arith.addi %1, %100 : vector<1x512xi32>
    %c16_i32_37 = arith.constant 16 : i32
    %102 = vector.broadcast %c16_i32_37 : i32 to vector<1x512xi32>
    %103 = arith.cmpi slt, %101, %102 : vector<1x512xi32>
    %104 = arith.andi %99, %103 : vector<1x512xi1>
    %105 = arith.extui %104 : vector<1x512xi1> to vector<1x512xi32>
    %106 = arith.sitofp %105 : vector<1x512xi32> to vector<1x512xf32>
    %c1_i32_38 = arith.constant 1 : i32
    %107 = vector.broadcast %c1_i32_38 : i32 to vector<1x512xi32>
    %108 = arith.addi %0, %107 : vector<1x512xi32>
    %c0_i32_39 = arith.constant 0 : i32
    %109 = vector.broadcast %c0_i32_39 : i32 to vector<1x512xi32>
    %110 = arith.cmpi sge, %108, %109 : vector<1x512xi32>
    %c1_i32_40 = arith.constant 1 : i32
    %111 = vector.broadcast %c1_i32_40 : i32 to vector<1x512xi32>
    %112 = arith.addi %0, %111 : vector<1x512xi32>
    %c16_i32_41 = arith.constant 16 : i32
    %113 = vector.broadcast %c16_i32_41 : i32 to vector<1x512xi32>
    %114 = arith.cmpi slt, %112, %113 : vector<1x512xi32>
    %115 = arith.andi %110, %114 : vector<1x512xi1>
    %c-1_i32_42 = arith.constant -1 : i32
    %116 = vector.broadcast %c-1_i32_42 : i32 to vector<1x512xi32>
    %117 = arith.addi %1, %116 : vector<1x512xi32>
    %c0_i32_43 = arith.constant 0 : i32
    %118 = vector.broadcast %c0_i32_43 : i32 to vector<1x512xi32>
    %119 = arith.cmpi sge, %117, %118 : vector<1x512xi32>
    %120 = arith.andi %115, %119 : vector<1x512xi1>
    %c-1_i32_44 = arith.constant -1 : i32
    %121 = vector.broadcast %c-1_i32_44 : i32 to vector<1x512xi32>
    %122 = arith.addi %1, %121 : vector<1x512xi32>
    %c16_i32_45 = arith.constant 16 : i32
    %123 = vector.broadcast %c16_i32_45 : i32 to vector<1x512xi32>
    %124 = arith.cmpi slt, %122, %123 : vector<1x512xi32>
    %125 = arith.andi %120, %124 : vector<1x512xi1>
    %126 = arith.extui %125 : vector<1x512xi1> to vector<1x512xi32>
    %127 = arith.sitofp %126 : vector<1x512xi32> to vector<1x512xf32>
    %c1_i32_46 = arith.constant 1 : i32
    %128 = vector.broadcast %c1_i32_46 : i32 to vector<1x512xi32>
    %129 = arith.addi %0, %128 : vector<1x512xi32>
    %c0_i32_47 = arith.constant 0 : i32
    %130 = vector.broadcast %c0_i32_47 : i32 to vector<1x512xi32>
    %131 = arith.cmpi sge, %129, %130 : vector<1x512xi32>
    %c1_i32_48 = arith.constant 1 : i32
    %132 = vector.broadcast %c1_i32_48 : i32 to vector<1x512xi32>
    %133 = arith.addi %0, %132 : vector<1x512xi32>
    %c16_i32_49 = arith.constant 16 : i32
    %134 = vector.broadcast %c16_i32_49 : i32 to vector<1x512xi32>
    %135 = arith.cmpi slt, %133, %134 : vector<1x512xi32>
    %136 = arith.andi %131, %135 : vector<1x512xi1>
    %c0_i32_50 = arith.constant 0 : i32
    %137 = vector.broadcast %c0_i32_50 : i32 to vector<1x512xi32>
    %138 = arith.addi %1, %137 : vector<1x512xi32>
    %c0_i32_51 = arith.constant 0 : i32
    %139 = vector.broadcast %c0_i32_51 : i32 to vector<1x512xi32>
    %140 = arith.cmpi sge, %138, %139 : vector<1x512xi32>
    %141 = arith.andi %136, %140 : vector<1x512xi1>
    %c0_i32_52 = arith.constant 0 : i32
    %142 = vector.broadcast %c0_i32_52 : i32 to vector<1x512xi32>
    %143 = arith.addi %1, %142 : vector<1x512xi32>
    %c16_i32_53 = arith.constant 16 : i32
    %144 = vector.broadcast %c16_i32_53 : i32 to vector<1x512xi32>
    %145 = arith.cmpi slt, %143, %144 : vector<1x512xi32>
    %146 = arith.andi %141, %145 : vector<1x512xi1>
    %147 = arith.extui %146 : vector<1x512xi1> to vector<1x512xi32>
    %148 = arith.sitofp %147 : vector<1x512xi32> to vector<1x512xf32>
    %c1_i32_54 = arith.constant 1 : i32
    %149 = vector.broadcast %c1_i32_54 : i32 to vector<1x512xi32>
    %150 = arith.addi %0, %149 : vector<1x512xi32>
    %c0_i32_55 = arith.constant 0 : i32
    %151 = vector.broadcast %c0_i32_55 : i32 to vector<1x512xi32>
    %152 = arith.cmpi sge, %150, %151 : vector<1x512xi32>
    %c1_i32_56 = arith.constant 1 : i32
    %153 = vector.broadcast %c1_i32_56 : i32 to vector<1x512xi32>
    %154 = arith.addi %0, %153 : vector<1x512xi32>
    %c16_i32_57 = arith.constant 16 : i32
    %155 = vector.broadcast %c16_i32_57 : i32 to vector<1x512xi32>
    %156 = arith.cmpi slt, %154, %155 : vector<1x512xi32>
    %157 = arith.andi %152, %156 : vector<1x512xi1>
    %c1_i32_58 = arith.constant 1 : i32
    %158 = vector.broadcast %c1_i32_58 : i32 to vector<1x512xi32>
    %159 = arith.addi %1, %158 : vector<1x512xi32>
    %c0_i32_59 = arith.constant 0 : i32
    %160 = vector.broadcast %c0_i32_59 : i32 to vector<1x512xi32>
    %161 = arith.cmpi sge, %159, %160 : vector<1x512xi32>
    %162 = arith.andi %157, %161 : vector<1x512xi1>
    %c1_i32_60 = arith.constant 1 : i32
    %163 = vector.broadcast %c1_i32_60 : i32 to vector<1x512xi32>
    %164 = arith.addi %1, %163 : vector<1x512xi32>
    %c16_i32_61 = arith.constant 16 : i32
    %165 = vector.broadcast %c16_i32_61 : i32 to vector<1x512xi32>
    %166 = arith.cmpi slt, %164, %165 : vector<1x512xi32>
    %167 = arith.andi %162, %166 : vector<1x512xi1>
    %168 = arith.extui %167 : vector<1x512xi1> to vector<1x512xi32>
    %169 = arith.sitofp %168 : vector<1x512xi32> to vector<1x512xf32>
    %c0_62 = arith.constant 0 : index
    %c0_63 = arith.constant 0 : index
    %170 = vector.load %arg1[%c0_62, %c0_63] : memref<8x512xf32, #tpu.memory_space<vmem>>, vector<8x512xf32>
    %cst = arith.constant 0.000000e+00 : f32
    %171 = vector.broadcast %cst : f32 to vector<8x512xf32>
    %c17_i32 = arith.constant 17 : i32
    %172 = tpu.dynamic_rotate %170 by %c17_i32 dim 1 : vector<8x512xf32>, i32 -> vector<8x512xf32>
    %173 = vector.broadcast %22 : vector<1x512xf32> to vector<8x512xf32>
    %174 = arith.mulf %172, %173 : vector<8x512xf32>
    %c0_64 = arith.constant 0 : index
    %c0_65 = arith.constant 0 : index
    %c0_66 = arith.constant 0 : index
    %175 = vector.load %arg3[%c0_64, %c0_65, %c0_66] : memref<9x8x8xbf16, #tpu.memory_space<vmem>>, vector<1x8x8xbf16>
    %176 = vector.shape_cast %175 : vector<1x8x8xbf16> to vector<8x8xbf16>
    %177 = arith.truncf %174 : vector<8x512xf32> to vector<8x512xbf16>
    %cst_67 = arith.constant dense<0.000000e+00> : vector<8x512xf32>
    %178 = tpu.matmul %176, %177, %cst_67 {dimension_numbers = #tpu.dot_dimension_numbers<[1], [0], [0], [1], [0, 0, 1, 1], [], []>} : vector<8x8xbf16>, vector<8x512xbf16>, vector<8x512xf32> -> vector<8x512xf32>
    %179 = arith.addf %171, %178 : vector<8x512xf32>
    %c16_i32_68 = arith.constant 16 : i32
    %180 = tpu.dynamic_rotate %170 by %c16_i32_68 dim 1 : vector<8x512xf32>, i32 -> vector<8x512xf32>
    %181 = vector.broadcast %43 : vector<1x512xf32> to vector<8x512xf32>
    %182 = arith.mulf %180, %181 : vector<8x512xf32>
    %c1_69 = arith.constant 1 : index
    %c0_70 = arith.constant 0 : index
    %c0_71 = arith.constant 0 : index
    %183 = vector.load %arg3[%c1_69, %c0_70, %c0_71] : memref<9x8x8xbf16, #tpu.memory_space<vmem>>, vector<1x8x8xbf16>
    %184 = vector.shape_cast %183 : vector<1x8x8xbf16> to vector<8x8xbf16>
    %185 = arith.truncf %182 : vector<8x512xf32> to vector<8x512xbf16>
    %cst_72 = arith.constant dense<0.000000e+00> : vector<8x512xf32>
    %186 = tpu.matmul %184, %185, %cst_72 {dimension_numbers = #tpu.dot_dimension_numbers<[1], [0], [0], [1], [0, 0, 1, 1], [], []>} : vector<8x8xbf16>, vector<8x512xbf16>, vector<8x512xf32> -> vector<8x512xf32>
    %187 = arith.addf %179, %186 : vector<8x512xf32>
    %c15_i32 = arith.constant 15 : i32
    %188 = tpu.dynamic_rotate %170 by %c15_i32 dim 1 : vector<8x512xf32>, i32 -> vector<8x512xf32>
    %189 = vector.broadcast %64 : vector<1x512xf32> to vector<8x512xf32>
    %190 = arith.mulf %188, %189 : vector<8x512xf32>
    %c2 = arith.constant 2 : index
    %c0_73 = arith.constant 0 : index
    %c0_74 = arith.constant 0 : index
    %191 = vector.load %arg3[%c2, %c0_73, %c0_74] : memref<9x8x8xbf16, #tpu.memory_space<vmem>>, vector<1x8x8xbf16>
    %192 = vector.shape_cast %191 : vector<1x8x8xbf16> to vector<8x8xbf16>
    %193 = arith.truncf %190 : vector<8x512xf32> to vector<8x512xbf16>
    %cst_75 = arith.constant dense<0.000000e+00> : vector<8x512xf32>
    %194 = tpu.matmul %192, %193, %cst_75 {dimension_numbers = #tpu.dot_dimension_numbers<[1], [0], [0], [1], [0, 0, 1, 1], [], []>} : vector<8x8xbf16>, vector<8x512xbf16>, vector<8x512xf32> -> vector<8x512xf32>
    %195 = arith.addf %187, %194 : vector<8x512xf32>
    %c1_i32_76 = arith.constant 1 : i32
    %196 = tpu.dynamic_rotate %170 by %c1_i32_76 dim 1 : vector<8x512xf32>, i32 -> vector<8x512xf32>
    %197 = vector.broadcast %85 : vector<1x512xf32> to vector<8x512xf32>
    %198 = arith.mulf %196, %197 : vector<8x512xf32>
    %c3 = arith.constant 3 : index
    %c0_77 = arith.constant 0 : index
    %c0_78 = arith.constant 0 : index
    %199 = vector.load %arg3[%c3, %c0_77, %c0_78] : memref<9x8x8xbf16, #tpu.memory_space<vmem>>, vector<1x8x8xbf16>
    %200 = vector.shape_cast %199 : vector<1x8x8xbf16> to vector<8x8xbf16>
    %201 = arith.truncf %198 : vector<8x512xf32> to vector<8x512xbf16>
    %cst_79 = arith.constant dense<0.000000e+00> : vector<8x512xf32>
    %202 = tpu.matmul %200, %201, %cst_79 {dimension_numbers = #tpu.dot_dimension_numbers<[1], [0], [0], [1], [0, 0, 1, 1], [], []>} : vector<8x8xbf16>, vector<8x512xbf16>, vector<8x512xf32> -> vector<8x512xf32>
    %203 = arith.addf %195, %202 : vector<8x512xf32>
    %c4 = arith.constant 4 : index
    %c0_80 = arith.constant 0 : index
    %c0_81 = arith.constant 0 : index
    %204 = vector.load %arg3[%c4, %c0_80, %c0_81] : memref<9x8x8xbf16, #tpu.memory_space<vmem>>, vector<1x8x8xbf16>
    %205 = vector.shape_cast %204 : vector<1x8x8xbf16> to vector<8x8xbf16>
    %206 = arith.truncf %170 : vector<8x512xf32> to vector<8x512xbf16>
    %cst_82 = arith.constant dense<0.000000e+00> : vector<8x512xf32>
    %207 = tpu.matmul %205, %206, %cst_82 {dimension_numbers = #tpu.dot_dimension_numbers<[1], [0], [0], [1], [0, 0, 1, 1], [], []>} : vector<8x8xbf16>, vector<8x512xbf16>, vector<8x512xf32> -> vector<8x512xf32>
    %208 = arith.addf %203, %207 : vector<8x512xf32>
    %c511_i32 = arith.constant 511 : i32
    %209 = tpu.dynamic_rotate %170 by %c511_i32 dim 1 : vector<8x512xf32>, i32 -> vector<8x512xf32>
    %210 = vector.broadcast %106 : vector<1x512xf32> to vector<8x512xf32>
    %211 = arith.mulf %209, %210 : vector<8x512xf32>
    %c5 = arith.constant 5 : index
    %c0_83 = arith.constant 0 : index
    %c0_84 = arith.constant 0 : index
    %212 = vector.load %arg3[%c5, %c0_83, %c0_84] : memref<9x8x8xbf16, #tpu.memory_space<vmem>>, vector<1x8x8xbf16>
    %213 = vector.shape_cast %212 : vector<1x8x8xbf16> to vector<8x8xbf16>
    %214 = arith.truncf %211 : vector<8x512xf32> to vector<8x512xbf16>
    %cst_85 = arith.constant dense<0.000000e+00> : vector<8x512xf32>
    %215 = tpu.matmul %213, %214, %cst_85 {dimension_numbers = #tpu.dot_dimension_numbers<[1], [0], [0], [1], [0, 0, 1, 1], [], []>} : vector<8x8xbf16>, vector<8x512xbf16>, vector<8x512xf32> -> vector<8x512xf32>
    %216 = arith.addf %208, %215 : vector<8x512xf32>
    %c497_i32 = arith.constant 497 : i32
    %217 = tpu.dynamic_rotate %170 by %c497_i32 dim 1 : vector<8x512xf32>, i32 -> vector<8x512xf32>
    %218 = vector.broadcast %127 : vector<1x512xf32> to vector<8x512xf32>
    %219 = arith.mulf %217, %218 : vector<8x512xf32>
    %c6 = arith.constant 6 : index
    %c0_86 = arith.constant 0 : index
    %c0_87 = arith.constant 0 : index
    %220 = vector.load %arg3[%c6, %c0_86, %c0_87] : memref<9x8x8xbf16, #tpu.memory_space<vmem>>, vector<1x8x8xbf16>
    %221 = vector.shape_cast %220 : vector<1x8x8xbf16> to vector<8x8xbf16>
    %222 = arith.truncf %219 : vector<8x512xf32> to vector<8x512xbf16>
    %cst_88 = arith.constant dense<0.000000e+00> : vector<8x512xf32>
    %223 = tpu.matmul %221, %222, %cst_88 {dimension_numbers = #tpu.dot_dimension_numbers<[1], [0], [0], [1], [0, 0, 1, 1], [], []>} : vector<8x8xbf16>, vector<8x512xbf16>, vector<8x512xf32> -> vector<8x512xf32>
    %224 = arith.addf %216, %223 : vector<8x512xf32>
    %c496_i32 = arith.constant 496 : i32
    %225 = tpu.dynamic_rotate %170 by %c496_i32 dim 1 : vector<8x512xf32>, i32 -> vector<8x512xf32>
    %226 = vector.broadcast %148 : vector<1x512xf32> to vector<8x512xf32>
    %227 = arith.mulf %225, %226 : vector<8x512xf32>
    %c7 = arith.constant 7 : index
    %c0_89 = arith.constant 0 : index
    %c0_90 = arith.constant 0 : index
    %228 = vector.load %arg3[%c7, %c0_89, %c0_90] : memref<9x8x8xbf16, #tpu.memory_space<vmem>>, vector<1x8x8xbf16>
    %229 = vector.shape_cast %228 : vector<1x8x8xbf16> to vector<8x8xbf16>
    %230 = arith.truncf %227 : vector<8x512xf32> to vector<8x512xbf16>
    %cst_91 = arith.constant dense<0.000000e+00> : vector<8x512xf32>
    %231 = tpu.matmul %229, %230, %cst_91 {dimension_numbers = #tpu.dot_dimension_numbers<[1], [0], [0], [1], [0, 0, 1, 1], [], []>} : vector<8x8xbf16>, vector<8x512xbf16>, vector<8x512xf32> -> vector<8x512xf32>
    %232 = arith.addf %224, %231 : vector<8x512xf32>
    %c495_i32 = arith.constant 495 : i32
    %233 = tpu.dynamic_rotate %170 by %c495_i32 dim 1 : vector<8x512xf32>, i32 -> vector<8x512xf32>
    %234 = vector.broadcast %169 : vector<1x512xf32> to vector<8x512xf32>
    %235 = arith.mulf %233, %234 : vector<8x512xf32>
    %c8 = arith.constant 8 : index
    %c0_92 = arith.constant 0 : index
    %c0_93 = arith.constant 0 : index
    %236 = vector.load %arg3[%c8, %c0_92, %c0_93] : memref<9x8x8xbf16, #tpu.memory_space<vmem>>, vector<1x8x8xbf16>
    %237 = vector.shape_cast %236 : vector<1x8x8xbf16> to vector<8x8xbf16>
    %238 = arith.truncf %235 : vector<8x512xf32> to vector<8x512xbf16>
    %cst_94 = arith.constant dense<0.000000e+00> : vector<8x512xf32>
    %239 = tpu.matmul %237, %238, %cst_94 {dimension_numbers = #tpu.dot_dimension_numbers<[1], [0], [0], [1], [0, 0, 1, 1], [], []>} : vector<8x8xbf16>, vector<8x512xbf16>, vector<8x512xf32> -> vector<8x512xf32>
    %240 = arith.addf %232, %239 : vector<8x512xf32>
    %cst_95 = arith.constant dense<0.000000e+00> : vector<8xf32>
    %241 = vector.multi_reduction <add>, %240, %cst_95 [1] : vector<8x512xf32> to vector<8xf32>
    %242 = vector.shape_cast %241 : vector<8xf32> to vector<8x1xf32>
    %cst_96 = arith.constant 0.001953125 : f32
    %243 = vector.broadcast %cst_96 : f32 to vector<8x1xf32>
    %244 = arith.mulf %242, %243 : vector<8x1xf32>
    %245 = vector.broadcast %244 : vector<8x1xf32> to vector<8x512xf32>
    %246 = arith.subf %240, %245 : vector<8x512xf32>
    %247 = arith.mulf %246, %246 : vector<8x512xf32>
    %cst_97 = arith.constant dense<0.000000e+00> : vector<8xf32>
    %248 = vector.multi_reduction <add>, %247, %cst_97 [1] : vector<8x512xf32> to vector<8xf32>
    %249 = vector.shape_cast %248 : vector<8xf32> to vector<8x1xf32>
    %cst_98 = arith.constant 0.001953125 : f32
    %250 = vector.broadcast %cst_98 : f32 to vector<8x1xf32>
    %251 = arith.mulf %249, %250 : vector<8x1xf32>
    %cst_99 = arith.constant 9.99999974E-6 : f32
    %252 = vector.broadcast %cst_99 : f32 to vector<8x1xf32>
    %253 = arith.addf %251, %252 : vector<8x1xf32>
    %254 = math.rsqrt %253 : vector<8x1xf32>
    %255 = vector.broadcast %254 : vector<8x1xf32> to vector<8x512xf32>
    %256 = arith.mulf %246, %255 : vector<8x512xf32>
    %cst_100 = arith.constant 0.000000e+00 : f32
    %257 = vector.broadcast %cst_100 : f32 to vector<8x512xf32>
    %258 = arith.maximumf %256, %257 : vector<8x512xf32>
    %c0_101 = arith.constant 0 : index
    %c0_102 = arith.constant 0 : index
    %c0_103 = arith.constant 0 : index
    %259 = vector.load %arg5[%c0_101, %c0_102, %c0_103] : memref<4x8x512xf32, #tpu.memory_space<vmem>>, vector<1x8x512xf32>
    %260 = vector.shape_cast %259 : vector<1x8x512xf32> to vector<8x512xf32>
    %261 = vector.shape_cast %258 : vector<8x512xf32> to vector<1x8x512xf32>
    tpu.vector_store %arg5[%c0_101, %c0_102, %c0_103], %261 {strides = array<i32>} : memref<4x8x512xf32, #tpu.memory_space<vmem>>, vector<1x8x512xf32>,
    %cst_104 = arith.constant 0.000000e+00 : f32
    %262 = vector.broadcast %cst_104 : f32 to vector<8x512xf32>
    %c17_i32_105 = arith.constant 17 : i32
    %263 = tpu.dynamic_rotate %258 by %c17_i32_105 dim 1 : vector<8x512xf32>, i32 -> vector<8x512xf32>
    %264 = vector.broadcast %22 : vector<1x512xf32> to vector<8x512xf32>
    %265 = arith.mulf %263, %264 : vector<8x512xf32>
    %c0_106 = arith.constant 0 : index
    %c0_107 = arith.constant 0 : index
    %c0_108 = arith.constant 0 : index
    %266 = vector.load %arg2[%c0_106, %c0_107, %c0_108] : memref<9x8x8xbf16, #tpu.memory_space<vmem>>, vector<1x8x8xbf16>
    %267 = vector.shape_cast %266 : vector<1x8x8xbf16> to vector<8x8xbf16>
    %268 = arith.truncf %265 : vector<8x512xf32> to vector<8x512xbf16>
    %cst_109 = arith.constant dense<0.000000e+00> : vector<8x512xf32>
    %269 = tpu.matmul %267, %268, %cst_109 {dimension_numbers = #tpu.dot_dimension_numbers<[1], [0], [0], [1], [0, 0, 1, 1], [], []>} : vector<8x8xbf16>, vector<8x512xbf16>, vector<8x512xf32> -> vector<8x512xf32>
    %270 = arith.addf %262, %269 : vector<8x512xf32>
    %c16_i32_110 = arith.constant 16 : i32
    %271 = tpu.dynamic_rotate %258 by %c16_i32_110 dim 1 : vector<8x512xf32>, i32 -> vector<8x512xf32>
    %272 = vector.broadcast %43 : vector<1x512xf32> to vector<8x512xf32>
    %273 = arith.mulf %271, %272 : vector<8x512xf32>
    %c1_111 = arith.constant 1 : index
    %c0_112 = arith.constant 0 : index
    %c0_113 = arith.constant 0 : index
    %274 = vector.load %arg2[%c1_111, %c0_112, %c0_113] : memref<9x8x8xbf16, #tpu.memory_space<vmem>>, vector<1x8x8xbf16>
    %275 = vector.shape_cast %274 : vector<1x8x8xbf16> to vector<8x8xbf16>
    %276 = arith.truncf %273 : vector<8x512xf32> to vector<8x512xbf16>
    %cst_114 = arith.constant dense<0.000000e+00> : vector<8x512xf32>
    %277 = tpu.matmul %275, %276, %cst_114 {dimension_numbers = #tpu.dot_dimension_numbers<[1], [0], [0], [1], [0, 0, 1, 1], [], []>} : vector<8x8xbf16>, vector<8x512xbf16>, vector<8x512xf32> -> vector<8x512xf32>
    %278 = arith.addf %270, %277 : vector<8x512xf32>
    %c15_i32_115 = arith.constant 15 : i32
    %279 = tpu.dynamic_rotate %258 by %c15_i32_115 dim 1 : vector<8x512xf32>, i32 -> vector<8x512xf32>
    %280 = vector.broadcast %64 : vector<1x512xf32> to vector<8x512xf32>
    %281 = arith.mulf %279, %280 : vector<8x512xf32>
    %c2_116 = arith.constant 2 : index
    %c0_117 = arith.constant 0 : index
    %c0_118 = arith.constant 0 : index
    %282 = vector.load %arg2[%c2_116, %c0_117, %c0_118] : memref<9x8x8xbf16, #tpu.memory_space<vmem>>, vector<1x8x8xbf16>
    %283 = vector.shape_cast %282 : vector<1x8x8xbf16> to vector<8x8xbf16>
    %284 = arith.truncf %281 : vector<8x512xf32> to vector<8x512xbf16>
    %cst_119 = arith.constant dense<0.000000e+00> : vector<8x512xf32>
    %285 = tpu.matmul %283, %284, %cst_119 {dimension_numbers = #tpu.dot_dimension_numbers<[1], [0], [0], [1], [0, 0, 1, 1], [], []>} : vector<8x8xbf16>, vector<8x512xbf16>, vector<8x512xf32> -> vector<8x512xf32>
    %286 = arith.addf %278, %285 : vector<8x512xf32>
    %c1_i32_120 = arith.constant 1 : i32
    %287 = tpu.dynamic_rotate %258 by %c1_i32_120 dim 1 : vector<8x512xf32>, i32 -> vector<8x512xf32>
    %288 = vector.broadcast %85 : vector<1x512xf32> to vector<8x512xf32>
    %289 = arith.mulf %287, %288 : vector<8x512xf32>
    %c3_121 = arith.constant 3 : index
    %c0_122 = arith.constant 0 : index
    %c0_123 = arith.constant 0 : index
    %290 = vector.load %arg2[%c3_121, %c0_122, %c0_123] : memref<9x8x8xbf16, #tpu.memory_space<vmem>>, vector<1x8x8xbf16>
    %291 = vector.shape_cast %290 : vector<1x8x8xbf16> to vector<8x8xbf16>
    %292 = arith.truncf %289 : vector<8x512xf32> to vector<8x512xbf16>
    %cst_124 = arith.constant dense<0.000000e+00> : vector<8x512xf32>
    %293 = tpu.matmul %291, %292, %cst_124 {dimension_numbers = #tpu.dot_dimension_numbers<[1], [0], [0], [1], [0, 0, 1, 1], [], []>} : vector<8x8xbf16>, vector<8x512xbf16>, vector<8x512xf32> -> vector<8x512xf32>
    %294 = arith.addf %286, %293 : vector<8x512xf32>
    %c4_125 = arith.constant 4 : index
    %c0_126 = arith.constant 0 : index
    %c0_127 = arith.constant 0 : index
    %295 = vector.load %arg2[%c4_125, %c0_126, %c0_127] : memref<9x8x8xbf16, #tpu.memory_space<vmem>>, vector<1x8x8xbf16>
    %296 = vector.shape_cast %295 : vector<1x8x8xbf16> to vector<8x8xbf16>
    %297 = arith.truncf %258 : vector<8x512xf32> to vector<8x512xbf16>
    %cst_128 = arith.constant dense<0.000000e+00> : vector<8x512xf32>
    %298 = tpu.matmul %296, %297, %cst_128 {dimension_numbers = #tpu.dot_dimension_numbers<[1], [0], [0], [1], [0, 0, 1, 1], [], []>} : vector<8x8xbf16>, vector<8x512xbf16>, vector<8x512xf32> -> vector<8x512xf32>
    %299 = arith.addf %294, %298 : vector<8x512xf32>
    %c511_i32_129 = arith.constant 511 : i32
    %300 = tpu.dynamic_rotate %258 by %c511_i32_129 dim 1 : vector<8x512xf32>, i32 -> vector<8x512xf32>
    %301 = vector.broadcast %106 : vector<1x512xf32> to vector<8x512xf32>
    %302 = arith.mulf %300, %301 : vector<8x512xf32>
    %c5_130 = arith.constant 5 : index
    %c0_131 = arith.constant 0 : index
    %c0_132 = arith.constant 0 : index
    %303 = vector.load %arg2[%c5_130, %c0_131, %c0_132] : memref<9x8x8xbf16, #tpu.memory_space<vmem>>, vector<1x8x8xbf16>
    %304 = vector.shape_cast %303 : vector<1x8x8xbf16> to vector<8x8xbf16>
    %305 = arith.truncf %302 : vector<8x512xf32> to vector<8x512xbf16>
    %cst_133 = arith.constant dense<0.000000e+00> : vector<8x512xf32>
    %306 = tpu.matmul %304, %305, %cst_133 {dimension_numbers = #tpu.dot_dimension_numbers<[1], [0], [0], [1], [0, 0, 1, 1], [], []>} : vector<8x8xbf16>, vector<8x512xbf16>, vector<8x512xf32> -> vector<8x512xf32>
    %307 = arith.addf %299, %306 : vector<8x512xf32>
    %c497_i32_134 = arith.constant 497 : i32
    %308 = tpu.dynamic_rotate %258 by %c497_i32_134 dim 1 : vector<8x512xf32>, i32 -> vector<8x512xf32>
    %309 = vector.broadcast %127 : vector<1x512xf32> to vector<8x512xf32>
    %310 = arith.mulf %308, %309 : vector<8x512xf32>
    %c6_135 = arith.constant 6 : index
    %c0_136 = arith.constant 0 : index
    %c0_137 = arith.constant 0 : index
    %311 = vector.load %arg2[%c6_135, %c0_136, %c0_137] : memref<9x8x8xbf16, #tpu.memory_space<vmem>>, vector<1x8x8xbf16>
    %312 = vector.shape_cast %311 : vector<1x8x8xbf16> to vector<8x8xbf16>
    %313 = arith.truncf %310 : vector<8x512xf32> to vector<8x512xbf16>
    %cst_138 = arith.constant dense<0.000000e+00> : vector<8x512xf32>
    %314 = tpu.matmul %312, %313, %cst_138 {dimension_numbers = #tpu.dot_dimension_numbers<[1], [0], [0], [1], [0, 0, 1, 1], [], []>} : vector<8x8xbf16>, vector<8x512xbf16>, vector<8x512xf32> -> vector<8x512xf32>
    %315 = arith.addf %307, %314 : vector<8x512xf32>
    %c496_i32_139 = arith.constant 496 : i32
    %316 = tpu.dynamic_rotate %258 by %c496_i32_139 dim 1 : vector<8x512xf32>, i32 -> vector<8x512xf32>
    %317 = vector.broadcast %148 : vector<1x512xf32> to vector<8x512xf32>
    %318 = arith.mulf %316, %317 : vector<8x512xf32>
    %c7_140 = arith.constant 7 : index
    %c0_141 = arith.constant 0 : index
    %c0_142 = arith.constant 0 : index
    %319 = vector.load %arg2[%c7_140, %c0_141, %c0_142] : memref<9x8x8xbf16, #tpu.memory_space<vmem>>, vector<1x8x8xbf16>
    %320 = vector.shape_cast %319 : vector<1x8x8xbf16> to vector<8x8xbf16>
    %321 = arith.truncf %318 : vector<8x512xf32> to vector<8x512xbf16>
    %cst_143 = arith.constant dense<0.000000e+00> : vector<8x512xf32>
    %322 = tpu.matmul %320, %321, %cst_143 {dimension_numbers = #tpu.dot_dimension_numbers<[1], [0], [0], [1], [0, 0, 1, 1], [], []>} : vector<8x8xbf16>, vector<8x512xbf16>, vector<8x512xf32> -> vector<8x512xf32>
    %323 = arith.addf %315, %322 : vector<8x512xf32>
    %c495_i32_144 = arith.constant 495 : i32
    %324 = tpu.dynamic_rotate %258 by %c495_i32_144 dim 1 : vector<8x512xf32>, i32 -> vector<8x512xf32>
    %325 = vector.broadcast %169 : vector<1x512xf32> to vector<8x512xf32>
    %326 = arith.mulf %324, %325 : vector<8x512xf32>
    %c8_145 = arith.constant 8 : index
    %c0_146 = arith.constant 0 : index
    %c0_147 = arith.constant 0 : index
    %327 = vector.load %arg2[%c8_145, %c0_146, %c0_147] : memref<9x8x8xbf16, #tpu.memory_space<vmem>>, vector<1x8x8xbf16>
    %328 = vector.shape_cast %327 : vector<1x8x8xbf16> to vector<8x8xbf16>
    %329 = arith.truncf %326 : vector<8x512xf32> to vector<8x512xbf16>
    %cst_148 = arith.constant dense<0.000000e+00> : vector<8x512xf32>
    %330 = tpu.matmul %328, %329, %cst_148 {dimension_numbers = #tpu.dot_dimension_numbers<[1], [0], [0], [1], [0, 0, 1, 1], [], []>} : vector<8x8xbf16>, vector<8x512xbf16>, vector<8x512xf32> -> vector<8x512xf32>
    %331 = arith.addf %323, %330 : vector<8x512xf32>
    %cst_149 = arith.constant dense<0.000000e+00> : vector<8xf32>
    %332 = vector.multi_reduction <add>, %331, %cst_149 [1] : vector<8x512xf32> to vector<8xf32>
    %333 = vector.shape_cast %332 : vector<8xf32> to vector<8x1xf32>
    %cst_150 = arith.constant 0.001953125 : f32
    %334 = vector.broadcast %cst_150 : f32 to vector<8x1xf32>
    %335 = arith.mulf %333, %334 : vector<8x1xf32>
    %336 = vector.broadcast %335 : vector<8x1xf32> to vector<8x512xf32>
    %337 = arith.subf %331, %336 : vector<8x512xf32>
    %338 = arith.mulf %337, %337 : vector<8x512xf32>
    %cst_151 = arith.constant dense<0.000000e+00> : vector<8xf32>
    %339 = vector.multi_reduction <add>, %338, %cst_151 [1] : vector<8x512xf32> to vector<8xf32>
    %340 = vector.shape_cast %339 : vector<8xf32> to vector<8x1xf32>
    %cst_152 = arith.constant 0.001953125 : f32
    %341 = vector.broadcast %cst_152 : f32 to vector<8x1xf32>
    %342 = arith.mulf %340, %341 : vector<8x1xf32>
    %cst_153 = arith.constant 9.99999974E-6 : f32
    %343 = vector.broadcast %cst_153 : f32 to vector<8x1xf32>
    %344 = arith.addf %342, %343 : vector<8x1xf32>
    %345 = math.rsqrt %344 : vector<8x1xf32>
    %346 = vector.broadcast %345 : vector<8x1xf32> to vector<8x512xf32>
    %347 = arith.mulf %337, %346 : vector<8x512xf32>
    %348 = arith.addf %347, %256 : vector<8x512xf32>
    %cst_154 = arith.constant 0.000000e+00 : f32
    %349 = vector.broadcast %cst_154 : f32 to vector<8x512xf32>
    %350 = arith.maximumf %348, %349 : vector<8x512xf32>
    %c1_155 = arith.constant 1 : index
    %c0_156 = arith.constant 0 : index
    %c0_157 = arith.constant 0 : index
    %351 = vector.load %arg5[%c1_155, %c0_156, %c0_157] : memref<4x8x512xf32, #tpu.memory_space<vmem>>, vector<1x8x512xf32>
    %352 = vector.shape_cast %351 : vector<1x8x512xf32> to vector<8x512xf32>
    %353 = vector.shape_cast %350 : vector<8x512xf32> to vector<1x8x512xf32>
    tpu.vector_store %arg5[%c1_155, %c0_156, %c0_157], %353 {strides = array<i32>} : memref<4x8x512xf32, #tpu.memory_space<vmem>>, vector<1x8x512xf32>,
    %cst_158 = arith.constant 0.000000e+00 : f32
    %354 = vector.broadcast %cst_158 : f32 to vector<8x512xf32>
    %c17_i32_159 = arith.constant 17 : i32
    %355 = tpu.dynamic_rotate %350 by %c17_i32_159 dim 1 : vector<8x512xf32>, i32 -> vector<8x512xf32>
    %356 = vector.broadcast %22 : vector<1x512xf32> to vector<8x512xf32>
    %357 = arith.mulf %355, %356 : vector<8x512xf32>
    %c0_160 = arith.constant 0 : index
    %c0_161 = arith.constant 0 : index
    %c0_162 = arith.constant 0 : index
    %358 = vector.load %arg2[%c0_160, %c0_161, %c0_162] : memref<9x8x8xbf16, #tpu.memory_space<vmem>>, vector<1x8x8xbf16>
    %359 = vector.shape_cast %358 : vector<1x8x8xbf16> to vector<8x8xbf16>
    %360 = arith.truncf %357 : vector<8x512xf32> to vector<8x512xbf16>
    %cst_163 = arith.constant dense<0.000000e+00> : vector<8x512xf32>
    %361 = tpu.matmul %359, %360, %cst_163 {dimension_numbers = #tpu.dot_dimension_numbers<[1], [0], [0], [1], [0, 0, 1, 1], [], []>} : vector<8x8xbf16>, vector<8x512xbf16>, vector<8x512xf32> -> vector<8x512xf32>
    %362 = arith.addf %354, %361 : vector<8x512xf32>
    %c16_i32_164 = arith.constant 16 : i32
    %363 = tpu.dynamic_rotate %350 by %c16_i32_164 dim 1 : vector<8x512xf32>, i32 -> vector<8x512xf32>
    %364 = vector.broadcast %43 : vector<1x512xf32> to vector<8x512xf32>
    %365 = arith.mulf %363, %364 : vector<8x512xf32>
    %c1_165 = arith.constant 1 : index
    %c0_166 = arith.constant 0 : index
    %c0_167 = arith.constant 0 : index
    %366 = vector.load %arg2[%c1_165, %c0_166, %c0_167] : memref<9x8x8xbf16, #tpu.memory_space<vmem>>, vector<1x8x8xbf16>
    %367 = vector.shape_cast %366 : vector<1x8x8xbf16> to vector<8x8xbf16>
    %368 = arith.truncf %365 : vector<8x512xf32> to vector<8x512xbf16>
    %cst_168 = arith.constant dense<0.000000e+00> : vector<8x512xf32>
    %369 = tpu.matmul %367, %368, %cst_168 {dimension_numbers = #tpu.dot_dimension_numbers<[1], [0], [0], [1], [0, 0, 1, 1], [], []>} : vector<8x8xbf16>, vector<8x512xbf16>, vector<8x512xf32> -> vector<8x512xf32>
    %370 = arith.addf %362, %369 : vector<8x512xf32>
    %c15_i32_169 = arith.constant 15 : i32
    %371 = tpu.dynamic_rotate %350 by %c15_i32_169 dim 1 : vector<8x512xf32>, i32 -> vector<8x512xf32>
    %372 = vector.broadcast %64 : vector<1x512xf32> to vector<8x512xf32>
    %373 = arith.mulf %371, %372 : vector<8x512xf32>
    %c2_170 = arith.constant 2 : index
    %c0_171 = arith.constant 0 : index
    %c0_172 = arith.constant 0 : index
    %374 = vector.load %arg2[%c2_170, %c0_171, %c0_172] : memref<9x8x8xbf16, #tpu.memory_space<vmem>>, vector<1x8x8xbf16>
    %375 = vector.shape_cast %374 : vector<1x8x8xbf16> to vector<8x8xbf16>
    %376 = arith.truncf %373 : vector<8x512xf32> to vector<8x512xbf16>
    %cst_173 = arith.constant dense<0.000000e+00> : vector<8x512xf32>
    %377 = tpu.matmul %375, %376, %cst_173 {dimension_numbers = #tpu.dot_dimension_numbers<[1], [0], [0], [1], [0, 0, 1, 1], [], []>} : vector<8x8xbf16>, vector<8x512xbf16>, vector<8x512xf32> -> vector<8x512xf32>
    %378 = arith.addf %370, %377 : vector<8x512xf32>
    %c1_i32_174 = arith.constant 1 : i32
    %379 = tpu.dynamic_rotate %350 by %c1_i32_174 dim 1 : vector<8x512xf32>, i32 -> vector<8x512xf32>
    %380 = vector.broadcast %85 : vector<1x512xf32> to vector<8x512xf32>
    %381 = arith.mulf %379, %380 : vector<8x512xf32>
    %c3_175 = arith.constant 3 : index
    %c0_176 = arith.constant 0 : index
    %c0_177 = arith.constant 0 : index
    %382 = vector.load %arg2[%c3_175, %c0_176, %c0_177] : memref<9x8x8xbf16, #tpu.memory_space<vmem>>, vector<1x8x8xbf16>
    %383 = vector.shape_cast %382 : vector<1x8x8xbf16> to vector<8x8xbf16>
    %384 = arith.truncf %381 : vector<8x512xf32> to vector<8x512xbf16>
    %cst_178 = arith.constant dense<0.000000e+00> : vector<8x512xf32>
    %385 = tpu.matmul %383, %384, %cst_178 {dimension_numbers = #tpu.dot_dimension_numbers<[1], [0], [0], [1], [0, 0, 1, 1], [], []>} : vector<8x8xbf16>, vector<8x512xbf16>, vector<8x512xf32> -> vector<8x512xf32>
    %386 = arith.addf %378, %385 : vector<8x512xf32>
    %c4_179 = arith.constant 4 : index
    %c0_180 = arith.constant 0 : index
    %c0_181 = arith.constant 0 : index
    %387 = vector.load %arg2[%c4_179, %c0_180, %c0_181] : memref<9x8x8xbf16, #tpu.memory_space<vmem>>, vector<1x8x8xbf16>
    %388 = vector.shape_cast %387 : vector<1x8x8xbf16> to vector<8x8xbf16>
    %389 = arith.truncf %350 : vector<8x512xf32> to vector<8x512xbf16>
    %cst_182 = arith.constant dense<0.000000e+00> : vector<8x512xf32>
    %390 = tpu.matmul %388, %389, %cst_182 {dimension_numbers = #tpu.dot_dimension_numbers<[1], [0], [0], [1], [0, 0, 1, 1], [], []>} : vector<8x8xbf16>, vector<8x512xbf16>, vector<8x512xf32> -> vector<8x512xf32>
    %391 = arith.addf %386, %390 : vector<8x512xf32>
    %c511_i32_183 = arith.constant 511 : i32
    %392 = tpu.dynamic_rotate %350 by %c511_i32_183 dim 1 : vector<8x512xf32>, i32 -> vector<8x512xf32>
    %393 = vector.broadcast %106 : vector<1x512xf32> to vector<8x512xf32>
    %394 = arith.mulf %392, %393 : vector<8x512xf32>
    %c5_184 = arith.constant 5 : index
    %c0_185 = arith.constant 0 : index
    %c0_186 = arith.constant 0 : index
    %395 = vector.load %arg2[%c5_184, %c0_185, %c0_186] : memref<9x8x8xbf16, #tpu.memory_space<vmem>>, vector<1x8x8xbf16>
    %396 = vector.shape_cast %395 : vector<1x8x8xbf16> to vector<8x8xbf16>
    %397 = arith.truncf %394 : vector<8x512xf32> to vector<8x512xbf16>
    %cst_187 = arith.constant dense<0.000000e+00> : vector<8x512xf32>
    %398 = tpu.matmul %396, %397, %cst_187 {dimension_numbers = #tpu.dot_dimension_numbers<[1], [0], [0], [1], [0, 0, 1, 1], [], []>} : vector<8x8xbf16>, vector<8x512xbf16>, vector<8x512xf32> -> vector<8x512xf32>
    %399 = arith.addf %391, %398 : vector<8x512xf32>
    %c497_i32_188 = arith.constant 497 : i32
    %400 = tpu.dynamic_rotate %350 by %c497_i32_188 dim 1 : vector<8x512xf32>, i32 -> vector<8x512xf32>
    %401 = vector.broadcast %127 : vector<1x512xf32> to vector<8x512xf32>
    %402 = arith.mulf %400, %401 : vector<8x512xf32>
    %c6_189 = arith.constant 6 : index
    %c0_190 = arith.constant 0 : index
    %c0_191 = arith.constant 0 : index
    %403 = vector.load %arg2[%c6_189, %c0_190, %c0_191] : memref<9x8x8xbf16, #tpu.memory_space<vmem>>, vector<1x8x8xbf16>
    %404 = vector.shape_cast %403 : vector<1x8x8xbf16> to vector<8x8xbf16>
    %405 = arith.truncf %402 : vector<8x512xf32> to vector<8x512xbf16>
    %cst_192 = arith.constant dense<0.000000e+00> : vector<8x512xf32>
    %406 = tpu.matmul %404, %405, %cst_192 {dimension_numbers = #tpu.dot_dimension_numbers<[1], [0], [0], [1], [0, 0, 1, 1], [], []>} : vector<8x8xbf16>, vector<8x512xbf16>, vector<8x512xf32> -> vector<8x512xf32>
    %407 = arith.addf %399, %406 : vector<8x512xf32>
    %c496_i32_193 = arith.constant 496 : i32
    %408 = tpu.dynamic_rotate %350 by %c496_i32_193 dim 1 : vector<8x512xf32>, i32 -> vector<8x512xf32>
    %409 = vector.broadcast %148 : vector<1x512xf32> to vector<8x512xf32>
    %410 = arith.mulf %408, %409 : vector<8x512xf32>
    %c7_194 = arith.constant 7 : index
    %c0_195 = arith.constant 0 : index
    %c0_196 = arith.constant 0 : index
    %411 = vector.load %arg2[%c7_194, %c0_195, %c0_196] : memref<9x8x8xbf16, #tpu.memory_space<vmem>>, vector<1x8x8xbf16>
    %412 = vector.shape_cast %411 : vector<1x8x8xbf16> to vector<8x8xbf16>
    %413 = arith.truncf %410 : vector<8x512xf32> to vector<8x512xbf16>
    %cst_197 = arith.constant dense<0.000000e+00> : vector<8x512xf32>
    %414 = tpu.matmul %412, %413, %cst_197 {dimension_numbers = #tpu.dot_dimension_numbers<[1], [0], [0], [1], [0, 0, 1, 1], [], []>} : vector<8x8xbf16>, vector<8x512xbf16>, vector<8x512xf32> -> vector<8x512xf32>
    %415 = arith.addf %407, %414 : vector<8x512xf32>
    %c495_i32_198 = arith.constant 495 : i32
    %416 = tpu.dynamic_rotate %350 by %c495_i32_198 dim 1 : vector<8x512xf32>, i32 -> vector<8x512xf32>
    %417 = vector.broadcast %169 : vector<1x512xf32> to vector<8x512xf32>
    %418 = arith.mulf %416, %417 : vector<8x512xf32>
    %c8_199 = arith.constant 8 : index
    %c0_200 = arith.constant 0 : index
    %c0_201 = arith.constant 0 : index
    %419 = vector.load %arg2[%c8_199, %c0_200, %c0_201] : memref<9x8x8xbf16, #tpu.memory_space<vmem>>, vector<1x8x8xbf16>
    %420 = vector.shape_cast %419 : vector<1x8x8xbf16> to vector<8x8xbf16>
    %421 = arith.truncf %418 : vector<8x512xf32> to vector<8x512xbf16>
    %cst_202 = arith.constant dense<0.000000e+00> : vector<8x512xf32>
    %422 = tpu.matmul %420, %421, %cst_202 {dimension_numbers = #tpu.dot_dimension_numbers<[1], [0], [0], [1], [0, 0, 1, 1], [], []>} : vector<8x8xbf16>, vector<8x512xbf16>, vector<8x512xf32> -> vector<8x512xf32>
    %423 = arith.addf %415, %422 : vector<8x512xf32>
    %cst_203 = arith.constant dense<0.000000e+00> : vector<8xf32>
    %424 = vector.multi_reduction <add>, %423, %cst_203 [1] : vector<8x512xf32> to vector<8xf32>
    %425 = vector.shape_cast %424 : vector<8xf32> to vector<8x1xf32>
    %cst_204 = arith.constant 0.001953125 : f32
    %426 = vector.broadcast %cst_204 : f32 to vector<8x1xf32>
    %427 = arith.mulf %425, %426 : vector<8x1xf32>
    %428 = vector.broadcast %427 : vector<8x1xf32> to vector<8x512xf32>
    %429 = arith.subf %423, %428 : vector<8x512xf32>
    %430 = arith.mulf %429, %429 : vector<8x512xf32>
    %cst_205 = arith.constant dense<0.000000e+00> : vector<8xf32>
    %431 = vector.multi_reduction <add>, %430, %cst_205 [1] : vector<8x512xf32> to vector<8xf32>
    %432 = vector.shape_cast %431 : vector<8xf32> to vector<8x1xf32>
    %cst_206 = arith.constant 0.001953125 : f32
    %433 = vector.broadcast %cst_206 : f32 to vector<8x1xf32>
    %434 = arith.mulf %432, %433 : vector<8x1xf32>
    %cst_207 = arith.constant 9.99999974E-6 : f32
    %435 = vector.broadcast %cst_207 : f32 to vector<8x1xf32>
    %436 = arith.addf %434, %435 : vector<8x1xf32>
    %437 = math.rsqrt %436 : vector<8x1xf32>
    %438 = vector.broadcast %437 : vector<8x1xf32> to vector<8x512xf32>
    %439 = arith.mulf %429, %438 : vector<8x512xf32>
    %440 = arith.addf %439, %256 : vector<8x512xf32>
    %cst_208 = arith.constant 0.000000e+00 : f32
    %441 = vector.broadcast %cst_208 : f32 to vector<8x512xf32>
    %442 = arith.maximumf %440, %441 : vector<8x512xf32>
    %c2_209 = arith.constant 2 : index
    %c0_210 = arith.constant 0 : index
    %c0_211 = arith.constant 0 : index
    %443 = vector.load %arg5[%c2_209, %c0_210, %c0_211] : memref<4x8x512xf32, #tpu.memory_space<vmem>>, vector<1x8x512xf32>
    %444 = vector.shape_cast %443 : vector<1x8x512xf32> to vector<8x512xf32>
    %445 = vector.shape_cast %442 : vector<8x512xf32> to vector<1x8x512xf32>
    tpu.vector_store %arg5[%c2_209, %c0_210, %c0_211], %445 {strides = array<i32>} : memref<4x8x512xf32, #tpu.memory_space<vmem>>, vector<1x8x512xf32>,
    %cst_212 = arith.constant 0.000000e+00 : f32
    %446 = vector.broadcast %cst_212 : f32 to vector<8x512xf32>
    %c17_i32_213 = arith.constant 17 : i32
    %447 = tpu.dynamic_rotate %442 by %c17_i32_213 dim 1 : vector<8x512xf32>, i32 -> vector<8x512xf32>
    %448 = vector.broadcast %22 : vector<1x512xf32> to vector<8x512xf32>
    %449 = arith.mulf %447, %448 : vector<8x512xf32>
    %c0_214 = arith.constant 0 : index
    %c0_215 = arith.constant 0 : index
    %c0_216 = arith.constant 0 : index
    %450 = vector.load %arg2[%c0_214, %c0_215, %c0_216] : memref<9x8x8xbf16, #tpu.memory_space<vmem>>, vector<1x8x8xbf16>
    %451 = vector.shape_cast %450 : vector<1x8x8xbf16> to vector<8x8xbf16>
    %452 = arith.truncf %449 : vector<8x512xf32> to vector<8x512xbf16>
    %cst_217 = arith.constant dense<0.000000e+00> : vector<8x512xf32>
    %453 = tpu.matmul %451, %452, %cst_217 {dimension_numbers = #tpu.dot_dimension_numbers<[1], [0], [0], [1], [0, 0, 1, 1], [], []>} : vector<8x8xbf16>, vector<8x512xbf16>, vector<8x512xf32> -> vector<8x512xf32>
    %454 = arith.addf %446, %453 : vector<8x512xf32>
    %c16_i32_218 = arith.constant 16 : i32
    %455 = tpu.dynamic_rotate %442 by %c16_i32_218 dim 1 : vector<8x512xf32>, i32 -> vector<8x512xf32>
    %456 = vector.broadcast %43 : vector<1x512xf32> to vector<8x512xf32>
    %457 = arith.mulf %455, %456 : vector<8x512xf32>
    %c1_219 = arith.constant 1 : index
    %c0_220 = arith.constant 0 : index
    %c0_221 = arith.constant 0 : index
    %458 = vector.load %arg2[%c1_219, %c0_220, %c0_221] : memref<9x8x8xbf16, #tpu.memory_space<vmem>>, vector<1x8x8xbf16>
    %459 = vector.shape_cast %458 : vector<1x8x8xbf16> to vector<8x8xbf16>
    %460 = arith.truncf %457 : vector<8x512xf32> to vector<8x512xbf16>
    %cst_222 = arith.constant dense<0.000000e+00> : vector<8x512xf32>
    %461 = tpu.matmul %459, %460, %cst_222 {dimension_numbers = #tpu.dot_dimension_numbers<[1], [0], [0], [1], [0, 0, 1, 1], [], []>} : vector<8x8xbf16>, vector<8x512xbf16>, vector<8x512xf32> -> vector<8x512xf32>
    %462 = arith.addf %454, %461 : vector<8x512xf32>
    %c15_i32_223 = arith.constant 15 : i32
    %463 = tpu.dynamic_rotate %442 by %c15_i32_223 dim 1 : vector<8x512xf32>, i32 -> vector<8x512xf32>
    %464 = vector.broadcast %64 : vector<1x512xf32> to vector<8x512xf32>
    %465 = arith.mulf %463, %464 : vector<8x512xf32>
    %c2_224 = arith.constant 2 : index
    %c0_225 = arith.constant 0 : index
    %c0_226 = arith.constant 0 : index
    %466 = vector.load %arg2[%c2_224, %c0_225, %c0_226] : memref<9x8x8xbf16, #tpu.memory_space<vmem>>, vector<1x8x8xbf16>
    %467 = vector.shape_cast %466 : vector<1x8x8xbf16> to vector<8x8xbf16>
    %468 = arith.truncf %465 : vector<8x512xf32> to vector<8x512xbf16>
    %cst_227 = arith.constant dense<0.000000e+00> : vector<8x512xf32>
    %469 = tpu.matmul %467, %468, %cst_227 {dimension_numbers = #tpu.dot_dimension_numbers<[1], [0], [0], [1], [0, 0, 1, 1], [], []>} : vector<8x8xbf16>, vector<8x512xbf16>, vector<8x512xf32> -> vector<8x512xf32>
    %470 = arith.addf %462, %469 : vector<8x512xf32>
    %c1_i32_228 = arith.constant 1 : i32
    %471 = tpu.dynamic_rotate %442 by %c1_i32_228 dim 1 : vector<8x512xf32>, i32 -> vector<8x512xf32>
    %472 = vector.broadcast %85 : vector<1x512xf32> to vector<8x512xf32>
    %473 = arith.mulf %471, %472 : vector<8x512xf32>
    %c3_229 = arith.constant 3 : index
    %c0_230 = arith.constant 0 : index
    %c0_231 = arith.constant 0 : index
    %474 = vector.load %arg2[%c3_229, %c0_230, %c0_231] : memref<9x8x8xbf16, #tpu.memory_space<vmem>>, vector<1x8x8xbf16>
    %475 = vector.shape_cast %474 : vector<1x8x8xbf16> to vector<8x8xbf16>
    %476 = arith.truncf %473 : vector<8x512xf32> to vector<8x512xbf16>
    %cst_232 = arith.constant dense<0.000000e+00> : vector<8x512xf32>
    %477 = tpu.matmul %475, %476, %cst_232 {dimension_numbers = #tpu.dot_dimension_numbers<[1], [0], [0], [1], [0, 0, 1, 1], [], []>} : vector<8x8xbf16>, vector<8x512xbf16>, vector<8x512xf32> -> vector<8x512xf32>
    %478 = arith.addf %470, %477 : vector<8x512xf32>
    %c4_233 = arith.constant 4 : index
    %c0_234 = arith.constant 0 : index
    %c0_235 = arith.constant 0 : index
    %479 = vector.load %arg2[%c4_233, %c0_234, %c0_235] : memref<9x8x8xbf16, #tpu.memory_space<vmem>>, vector<1x8x8xbf16>
    %480 = vector.shape_cast %479 : vector<1x8x8xbf16> to vector<8x8xbf16>
    %481 = arith.truncf %442 : vector<8x512xf32> to vector<8x512xbf16>
    %cst_236 = arith.constant dense<0.000000e+00> : vector<8x512xf32>
    %482 = tpu.matmul %480, %481, %cst_236 {dimension_numbers = #tpu.dot_dimension_numbers<[1], [0], [0], [1], [0, 0, 1, 1], [], []>} : vector<8x8xbf16>, vector<8x512xbf16>, vector<8x512xf32> -> vector<8x512xf32>
    %483 = arith.addf %478, %482 : vector<8x512xf32>
    %c511_i32_237 = arith.constant 511 : i32
    %484 = tpu.dynamic_rotate %442 by %c511_i32_237 dim 1 : vector<8x512xf32>, i32 -> vector<8x512xf32>
    %485 = vector.broadcast %106 : vector<1x512xf32> to vector<8x512xf32>
    %486 = arith.mulf %484, %485 : vector<8x512xf32>
    %c5_238 = arith.constant 5 : index
    %c0_239 = arith.constant 0 : index
    %c0_240 = arith.constant 0 : index
    %487 = vector.load %arg2[%c5_238, %c0_239, %c0_240] : memref<9x8x8xbf16, #tpu.memory_space<vmem>>, vector<1x8x8xbf16>
    %488 = vector.shape_cast %487 : vector<1x8x8xbf16> to vector<8x8xbf16>
    %489 = arith.truncf %486 : vector<8x512xf32> to vector<8x512xbf16>
    %cst_241 = arith.constant dense<0.000000e+00> : vector<8x512xf32>
    %490 = tpu.matmul %488, %489, %cst_241 {dimension_numbers = #tpu.dot_dimension_numbers<[1], [0], [0], [1], [0, 0, 1, 1], [], []>} : vector<8x8xbf16>, vector<8x512xbf16>, vector<8x512xf32> -> vector<8x512xf32>
    %491 = arith.addf %483, %490 : vector<8x512xf32>
    %c497_i32_242 = arith.constant 497 : i32
    %492 = tpu.dynamic_rotate %442 by %c497_i32_242 dim 1 : vector<8x512xf32>, i32 -> vector<8x512xf32>
    %493 = vector.broadcast %127 : vector<1x512xf32> to vector<8x512xf32>
    %494 = arith.mulf %492, %493 : vector<8x512xf32>
    %c6_243 = arith.constant 6 : index
    %c0_244 = arith.constant 0 : index
    %c0_245 = arith.constant 0 : index
    %495 = vector.load %arg2[%c6_243, %c0_244, %c0_245] : memref<9x8x8xbf16, #tpu.memory_space<vmem>>, vector<1x8x8xbf16>
    %496 = vector.shape_cast %495 : vector<1x8x8xbf16> to vector<8x8xbf16>
    %497 = arith.truncf %494 : vector<8x512xf32> to vector<8x512xbf16>
    %cst_246 = arith.constant dense<0.000000e+00> : vector<8x512xf32>
    %498 = tpu.matmul %496, %497, %cst_246 {dimension_numbers = #tpu.dot_dimension_numbers<[1], [0], [0], [1], [0, 0, 1, 1], [], []>} : vector<8x8xbf16>, vector<8x512xbf16>, vector<8x512xf32> -> vector<8x512xf32>
    %499 = arith.addf %491, %498 : vector<8x512xf32>
    %c496_i32_247 = arith.constant 496 : i32
    %500 = tpu.dynamic_rotate %442 by %c496_i32_247 dim 1 : vector<8x512xf32>, i32 -> vector<8x512xf32>
    %501 = vector.broadcast %148 : vector<1x512xf32> to vector<8x512xf32>
    %502 = arith.mulf %500, %501 : vector<8x512xf32>
    %c7_248 = arith.constant 7 : index
    %c0_249 = arith.constant 0 : index
    %c0_250 = arith.constant 0 : index
    %503 = vector.load %arg2[%c7_248, %c0_249, %c0_250] : memref<9x8x8xbf16, #tpu.memory_space<vmem>>, vector<1x8x8xbf16>
    %504 = vector.shape_cast %503 : vector<1x8x8xbf16> to vector<8x8xbf16>
    %505 = arith.truncf %502 : vector<8x512xf32> to vector<8x512xbf16>
    %cst_251 = arith.constant dense<0.000000e+00> : vector<8x512xf32>
    %506 = tpu.matmul %504, %505, %cst_251 {dimension_numbers = #tpu.dot_dimension_numbers<[1], [0], [0], [1], [0, 0, 1, 1], [], []>} : vector<8x8xbf16>, vector<8x512xbf16>, vector<8x512xf32> -> vector<8x512xf32>
    %507 = arith.addf %499, %506 : vector<8x512xf32>
    %c495_i32_252 = arith.constant 495 : i32
    %508 = tpu.dynamic_rotate %442 by %c495_i32_252 dim 1 : vector<8x512xf32>, i32 -> vector<8x512xf32>
    %509 = vector.broadcast %169 : vector<1x512xf32> to vector<8x512xf32>
    %510 = arith.mulf %508, %509 : vector<8x512xf32>
    %c8_253 = arith.constant 8 : index
    %c0_254 = arith.constant 0 : index
    %c0_255 = arith.constant 0 : index
    %511 = vector.load %arg2[%c8_253, %c0_254, %c0_255] : memref<9x8x8xbf16, #tpu.memory_space<vmem>>, vector<1x8x8xbf16>
    %512 = vector.shape_cast %511 : vector<1x8x8xbf16> to vector<8x8xbf16>
    %513 = arith.truncf %510 : vector<8x512xf32> to vector<8x512xbf16>
    %cst_256 = arith.constant dense<0.000000e+00> : vector<8x512xf32>
    %514 = tpu.matmul %512, %513, %cst_256 {dimension_numbers = #tpu.dot_dimension_numbers<[1], [0], [0], [1], [0, 0, 1, 1], [], []>} : vector<8x8xbf16>, vector<8x512xbf16>, vector<8x512xf32> -> vector<8x512xf32>
    %515 = arith.addf %507, %514 : vector<8x512xf32>
    %cst_257 = arith.constant dense<0.000000e+00> : vector<8xf32>
    %516 = vector.multi_reduction <add>, %515, %cst_257 [1] : vector<8x512xf32> to vector<8xf32>
    %517 = vector.shape_cast %516 : vector<8xf32> to vector<8x1xf32>
    %cst_258 = arith.constant 0.001953125 : f32
    %518 = vector.broadcast %cst_258 : f32 to vector<8x1xf32>
    %519 = arith.mulf %517, %518 : vector<8x1xf32>
    %520 = vector.broadcast %519 : vector<8x1xf32> to vector<8x512xf32>
    %521 = arith.subf %515, %520 : vector<8x512xf32>
    %522 = arith.mulf %521, %521 : vector<8x512xf32>
    %cst_259 = arith.constant dense<0.000000e+00> : vector<8xf32>
    %523 = vector.multi_reduction <add>, %522, %cst_259 [1] : vector<8x512xf32> to vector<8xf32>
    %524 = vector.shape_cast %523 : vector<8xf32> to vector<8x1xf32>
    %cst_260 = arith.constant 0.001953125 : f32
    %525 = vector.broadcast %cst_260 : f32 to vector<8x1xf32>
    %526 = arith.mulf %524, %525 : vector<8x1xf32>
    %cst_261 = arith.constant 9.99999974E-6 : f32
    %527 = vector.broadcast %cst_261 : f32 to vector<8x1xf32>
    %528 = arith.addf %526, %527 : vector<8x1xf32>
    %529 = math.rsqrt %528 : vector<8x1xf32>
    %530 = vector.broadcast %529 : vector<8x1xf32> to vector<8x512xf32>
    %531 = arith.mulf %521, %530 : vector<8x512xf32>
    %532 = arith.addf %531, %256 : vector<8x512xf32>
    %cst_262 = arith.constant 0.000000e+00 : f32
    %533 = vector.broadcast %cst_262 : f32 to vector<8x512xf32>
    %534 = arith.maximumf %532, %533 : vector<8x512xf32>
    %c3_263 = arith.constant 3 : index
    %c0_264 = arith.constant 0 : index
    %c0_265 = arith.constant 0 : index
    %535 = vector.load %arg5[%c3_263, %c0_264, %c0_265] : memref<4x8x512xf32, #tpu.memory_space<vmem>>, vector<1x8x512xf32>
    %536 = vector.shape_cast %535 : vector<1x8x512xf32> to vector<8x512xf32>
    %537 = vector.shape_cast %534 : vector<8x512xf32> to vector<1x8x512xf32>
    tpu.vector_store %arg5[%c3_263, %c0_264, %c0_265], %537 {strides = array<i32>} : memref<4x8x512xf32, #tpu.memory_space<vmem>>, vector<1x8x512xf32>,
    return
  }
  func.func @transform_0(%arg0: i32) -> (i32, i32) {
    %c0_i32 = arith.constant 0 : i32
    %c0_i32_0 = arith.constant 0 : i32
    %c0_i32_1 = arith.constant 0 : i32
    return %c0_i32, %c0_i32_0 : i32, i32
  }
  func.func @transform_1(%arg0: i32) -> (i32, i32, i32) {
    %c0_i32 = arith.constant 0 : i32
    %c0_i32_0 = arith.constant 0 : i32
    %c0_i32_1 = arith.constant 0 : i32
    %c0_i32_2 = arith.constant 0 : i32
    return %c0_i32, %c0_i32_0, %c0_i32_1 : i32, i32, i32
  }
  func.func @transform_2(%arg0: i32) -> (i32, i32, i32) {
    %c0_i32 = arith.constant 0 : i32
    %c0_i32_0 = arith.constant 0 : i32
    %c0_i32_1 = arith.constant 0 : i32
    %c0_i32_2 = arith.constant 0 : i32
    return %c0_i32, %c0_i32_0, %c0_i32_1 : i32, i32, i32
  }
  func.func @transform_3(%arg0: i32) -> (i32, i32) {
    %c0_i32 = arith.constant 0 : i32
    %c0_i32_0 = arith.constant 0 : i32
    %c0_i32_1 = arith.constant 0 : i32
    return %c0_i32, %c0_i32_0 : i32, i32
  }
  func.func @transform_4(%arg0: i32) -> (i32, i32, i32) {
    %c0_i32 = arith.constant 0 : i32
    %c0_i32_0 = arith.constant 0 : i32
    %c0_i32_1 = arith.constant 0 : i32
    %c0_i32_2 = arith.constant 0 : i32
    return %c0_i32, %c0_i32_0, %c0_i32_1 : i32, i32, i32
  }
}

</mosaic_0001>

<llo_original>
// kernel: spiking_rcl_bn6_forward.1
$region0: #{spiking_rcl_bn6_forward.1}
  #allocation0 [shape = 'u32[]', space=smem, size = 0x4, offset = 0x4, fixed_abs, tag = 'smem constant byte address 0x4 - core index']
  #allocation1 [shape = 'u32[72,128]{1,0:T(1,128)}', space=vmem, size = 0x9000, scoped, tag = 'internal scratch']
  %s0 = inlined_call_operand.vmem [shape: f32[8,512], index: 0, kind: input, shape index: {}]
  %s1 = inlined_call_operand.vmem [shape: bf16[9,8,8], index: 1, kind: input, shape index: {}]
  %s2 = inlined_call_operand.vmem [shape: bf16[9,8,8], index: 2, kind: input, shape index: {}]
  %s3 = inlined_call_operand.vmem [shape: s32[2,512], index: 3, kind: input, shape index: {}]
  %s4 = inlined_call_operand.vmem [shape: f32[4,8,512], index: 4, kind: output, shape index: {}]
  %s5 = sld [smem:[#allocation0]]
  $region26: #{spiking_rcl_bn6_forward.1} parent=0
    _
  %s7 = ssub.s32 1, %s5
  %s8 = scalar_select 0, %s7, %s5
  // Predicated region
  $region2: #{spiking_rcl_bn6_forward.1} parent=0 // pred_check
    _
  $region3: #{spiking_rcl_bn6_forward.1} parent=0 // pred_check_branch
    %10 = sbr.rel (0) target = $region5
  $region4: #{spiking_rcl_bn6_forward.1} parent=0 // pred_region
    _
  $region5: #{spiking_rcl_bn6_forward.1} parent=0 // pred_fallthru
    _
  // Predicated region
  $region6: #{spiking_rcl_bn6_forward.1} parent=0 // pred_check
    _
  $region7: #{spiking_rcl_bn6_forward.1} parent=0 // pred_check_branch
    %12 = sbr.rel (0) target = $region9
  $region8: #{spiking_rcl_bn6_forward.1} parent=0 // pred_region
    _
  $region9: #{spiking_rcl_bn6_forward.1} parent=0 // pred_fallthru
    _
  // Predicated region
  $region10: #{spiking_rcl_bn6_forward.1} parent=0 // pred_check
    _
  $region11: #{spiking_rcl_bn6_forward.1} parent=0 // pred_check_branch
    %14 = sbr.rel (0) target = $region13
  $region12: #{spiking_rcl_bn6_forward.1} parent=0 // pred_region
    _
  $region13: #{spiking_rcl_bn6_forward.1} parent=0 // pred_fallthru
    _
  // Predicated region
  $region14: #{spiking_rcl_bn6_forward.1} parent=0 // pred_check
    _
  $region15: #{spiking_rcl_bn6_forward.1} parent=0 // pred_check_branch
    %16 = sbr.rel (0) target = $region17
  $region16: #{spiking_rcl_bn6_forward.1} parent=0 // pred_region
    _
  $region17: #{spiking_rcl_bn6_forward.1} parent=0 // pred_fallthru
    _
  %v18 = vld [vmem:[%s3] ss:$2 sm:$0xf]
  %s19 = scalar_lea.vmem %s3, 1
  %v20 = vld [vmem:[%s19] ss:$2 sm:$0xf]
  %v21 = vadd.s32 %v18, 4294967295
  %vm22 = vcmp.ge.s32.totalorder %v21, 0
  %vm23 = vcmp.lt.s32.totalorder %v21, 16
  %vm24 = vmand %vm22, %vm23
  %v25 = vadd.s32 %v20, 4294967295
  %vm26 = vcmp.ge.s32.totalorder %v25, 0
  %vm27 = vmand %vm24, %vm26
  %vm28 = vcmp.lt.s32.totalorder %v25, 16
  %vm29 = vmand %vm27, %vm28
  %v30 = vsel %vm29, 1, 0
  %v31 = vcvt.s32.f32 %v30
  %vm32 = vcmp.ge.s32.totalorder %v20, 0
  %vm33 = vmand %vm24, %vm32
  %vm34 = vcmp.lt.s32.totalorder %v20, 16
  %vm35 = vmand %vm33, %vm34
  %v36 = vsel %vm35, 1, 0
  %v37 = vcvt.s32.f32 %v36
  %v38 = vadd.s32 %v20, 1
  %vm39 = vcmp.ge.s32.totalorder %v38, 0
  %vm40 = vmand %vm24, %vm39
  %vm41 = vcmp.lt.s32.totalorder %v38, 16
  %vm42 = vmand %vm40, %vm41
  %v43 = vsel %vm42, 1, 0
  %v44 = vcvt.s32.f32 %v43
  %vm45 = vcmp.ge.s32.totalorder %v18, 0
  %vm46 = vcmp.lt.s32.totalorder %v18, 16
  %vm47 = vmand %vm45, %vm46
  %vm48 = vmand %vm47, %vm26
  %vm49 = vmand %vm48, %vm28
  %v50 = vsel %vm49, 1, 0
  %v51 = vcvt.s32.f32 %v50
  %vm52 = vmand %vm47, %vm39
  %vm53 = vmand %vm52, %vm41
  %v54 = vsel %vm53, 1, 0
  %v55 = vcvt.s32.f32 %v54
  %v56 = vadd.s32 %v18, 1
  %vm57 = vcmp.ge.s32.totalorder %v56, 0
  %vm58 = vcmp.lt.s32.totalorder %v56, 16
  %vm59 = vmand %vm57, %vm58
  %vm60 = vmand %vm59, %vm26
  %vm61 = vmand %vm60, %vm28
  %v62 = vsel %vm61, 1, 0
  %v63 = vcvt.s32.f32 %v62
  %vm64 = vmand %vm59, %vm32
  %vm65 = vmand %vm64, %vm34
  %v66 = vsel %vm65, 1, 0
  %v67 = vcvt.s32.f32 %v66
  %vm68 = vmand %vm59, %vm39
  %vm69 = vmand %vm68, %vm41
  %v70 = vsel %vm69, 1, 0
  %v71 = vcvt.s32.f32 %v70
  %v72 = vld [vmem:[%s0] sm:$0xff]
  %v73 = vld [vmem:[%s0 + $0x8] sm:$0xff]
  %v74 = vld [vmem:[%s0 + $0x10] sm:$0xff]
  %v75 = vld [vmem:[%s0 + $0x18] sm:$0xff]
  %76 = vrot.lane.b32.xlu0 %v72, 17
  %v77 = vpop.permute.xlu0 %76
  %78 = vrot.lane.b32.xlu0 %v73, 17
  %v79 = vpop.permute.xlu0 %78
  %80 = vrot.lane.b32.xlu0 %v74, 17
  %v81 = vpop.permute.xlu0 %80
  %82 = vrot.lane.b32.xlu0 %v75, 17
  %v83 = vpop.permute.xlu0 %82
  %v84 = vlaneseq
  %v85 = vand.u32 %v84, 127
  %vm86 = vcmp.lt.s32.totalorder %v85, 17
  %v87 = vsel %vm86, %v81, %v83
  %v88 = vsel %vm86, %v79, %v81
  %v89 = vsel %vm86, %v77, %v79
  %v90 = vsel %vm86, %v83, %v77
  %v92 = vperm.slane %v31, 0
  %v93 = vperm.slane %v31, 1
  %v94 = vperm.slane %v31, 2
  %v95 = vperm.slane %v31, 3
  %v100 = vmul.f32 %v90, %v92
  %v101 = vmul.f32 %v89, %v93
  %v102 = vmul.f32 %v88, %v94
  %v103 = vmul.f32 %v87, %v95
  %v104 = vld [vmem:[%s2] sm:$0xf]
  %v105 = vpack.c.bf16 %v100, %v100
  %v106 = vpack.c.bf16 %v101, %v101
  %v107 = vpack.c.bf16 %v102, %v102
  %v108 = vpack.c.bf16 %v103, %v103
  %109 = vrot.lane.b32.xlu0 %v72, 16
  %v110 = vpop.permute.xlu0 %109
  %111 = vrot.lane.b32.xlu0 %v73, 16
  %v112 = vpop.permute.xlu0 %111
  %113 = vrot.lane.b32.xlu0 %v74, 16
  %v114 = vpop.permute.xlu0 %113
  %115 = vrot.lane.b32.xlu0 %v75, 16
  %v116 = vpop.permute.xlu0 %115
  %vm117 = vcmp.lt.s32.totalorder %v85, 16
  %v118 = vsel %vm117, %v114, %v116
  %v119 = vsel %vm117, %v112, %v114
  %v120 = vsel %vm117, %v110, %v112
  %v121 = vsel %vm117, %v116, %v110
  %v123 = vperm.slane %v37, 0
  %v124 = vperm.slane %v37, 1
  %v125 = vperm.slane %v37, 2
  %v126 = vperm.slane %v37, 3
  %v131 = vmul.f32 %v121, %v123
  %v132 = vmul.f32 %v120, %v124
  %v133 = vmul.f32 %v119, %v125
  %v134 = vmul.f32 %v118, %v126
  %s135 = scalar_lea.vmem %s2, 4
  %v136 = vld [vmem:[%s135] sm:$0xf]
  %v137 = vpack.c.bf16 %v131, %v131
  %v138 = vpack.c.bf16 %v132, %v132
  %v139 = vpack.c.bf16 %v133, %v133
  %v140 = vpack.c.bf16 %v134, %v134
  %vm141 = vcmask 64512
  %v143 = vsel %vm141, %v136, 0
  %vm145 = vcmask 1043456
  %v147 = vsel %vm145, %v137, 0
  %v150 = vsel %vm145, %v138, 0
  %v153 = vsel %vm145, %v139, 0
  %v156 = vsel %vm145, %v140, 0
  %158 = vmatpush.bf16.msra.mxu0 0
  %159 = vmatpush.bf16.msra.mxu0 0
  %160 = vmatpush.bf16.msra.mxu0 0
  %161 = vmatpush.bf16.msra.mxu0 0
  %162 = vmatpush.bf16.msra.mxu0 0
  %163 = vmatpush.bf16.msra.mxu0 0
  %164 = vmatpush.bf16.msra.mxu0 0
  %165 = vmatpush.bf16.msra.mxu0 %v147
  %166 = vmatmul.bf16.gmra.mxu0 %v143
  %v167 = vpop.f32.mrf.mxu0
  %v168 = vadd.f32 0.0, %v167
  %v169 = vpop.f32.mrf.mxu0
  %170 = vdwg.mxu0
  %171 = vmatpush.bf16.msra.mxu0 0
  %172 = vmatpush.bf16.msra.mxu0 0
  %173 = vmatpush.bf16.msra.mxu0 0
  %174 = vmatpush.bf16.msra.mxu0 0
  %175 = vmatpush.bf16.msra.mxu0 0
  %176 = vmatpush.bf16.msra.mxu0 0
  %177 = vmatpush.bf16.msra.mxu0 0
  %178 = vmatpush.bf16.msra.mxu0 %v150
  %179 = vmatmul.bf16.gmra.mxu0 %v143
  %v180 = vpop.f32.mrf.mxu0
  %v181 = vadd.f32 0.0, %v180
  %v182 = vpop.f32.mrf.mxu0
  %183 = vdwg.mxu0
  %184 = vmatpush.bf16.msra.mxu0 0
  %185 = vmatpush.bf16.msra.mxu0 0
  %186 = vmatpush.bf16.msra.mxu0 0
  %187 = vmatpush.bf16.msra.mxu0 0
  %188 = vmatpush.bf16.msra.mxu0 0
  %189 = vmatpush.bf16.msra.mxu0 0
  %190 = vmatpush.bf16.msra.mxu0 0
  %191 = vmatpush.bf16.msra.mxu0 %v153
  %192 = vmatmul.bf16.gmra.mxu0 %v143
  %v193 = vpop.f32.mrf.mxu0
  %v194 = vadd.f32 0.0, %v193
  %v195 = vpop.f32.mrf.mxu0
  %196 = vdwg.mxu0
  %197 = vmatpush.bf16.msra.mxu0 0
  %198 = vmatpush.bf16.msra.mxu0 0
  %199 = vmatpush.bf16.msra.mxu0 0
  %200 = vmatpush.bf16.msra.mxu0 0
  %201 = vmatpush.bf16.msra.mxu0 0
  %202 = vmatpush.bf16.msra.mxu0 0
  %203 = vmatpush.bf16.msra.mxu0 0
  %204 = vmatpush.bf16.msra.mxu0 %v156
  %205 = vmatmul.bf16.gmra.mxu0 %v143
  %v206 = vpop.f32.mrf.mxu0
  %v207 = vadd.f32 0.0, %v206
  %v208 = vpop.f32.mrf.mxu0
  %209 = vdwg.mxu0
  %v211 = vsel %vm141, %v104, 0
  %v214 = vsel %vm145, %v105, 0
  %v217 = vsel %vm145, %v106, 0
  %v220 = vsel %vm145, %v107, 0
  %v223 = vsel %vm145, %v108, 0
  %225 = vmatpush.bf16.msra.mxu0 0
  %226 = vmatpush.bf16.msra.mxu0 0
  %227 = vmatpush.bf16.msra.mxu0 0
  %228 = vmatpush.bf16.msra.mxu0 0
  %229 = vmatpush.bf16.msra.mxu0 0
  %230 = vmatpush.bf16.msra.mxu0 0
  %231 = vmatpush.bf16.msra.mxu0 0
  %232 = vmatpush.bf16.msra.mxu0 %v214
  %233 = vmatmul.bf16.gmra.mxu0 %v211
  %v234 = vpop.f32.mrf.mxu0
  %v235 = vadd.f32 %v168, %v234
  %v236 = vpop.f32.mrf.mxu0
  %237 = vdwg.mxu0
  %238 = vmatpush.bf16.msra.mxu0 0
  %239 = vmatpush.bf16.msra.mxu0 0
  %240 = vmatpush.bf16.msra.mxu0 0
  %241 = vmatpush.bf16.msra.mxu0 0
  %242 = vmatpush.bf16.msra.mxu0 0
  %243 = vmatpush.bf16.msra.mxu0 0
  %244 = vmatpush.bf16.msra.mxu0 0
  %245 = vmatpush.bf16.msra.mxu0 %v217
  %246 = vmatmul.bf16.gmra.mxu0 %v211
  %v247 = vpop.f32.mrf.mxu0
  %v248 = vadd.f32 %v181, %v247
  %v249 = vpop.f32.mrf.mxu0
  %250 = vdwg.mxu0
  %251 = vmatpush.bf16.msra.mxu0 0
  %252 = vmatpush.bf16.msra.mxu0 0
  %253 = vmatpush.bf16.msra.mxu0 0
  %254 = vmatpush.bf16.msra.mxu0 0
  %255 = vmatpush.bf16.msra.mxu0 0
  %256 = vmatpush.bf16.msra.mxu0 0
  %257 = vmatpush.bf16.msra.mxu0 0
  %258 = vmatpush.bf16.msra.mxu0 %v220
  %259 = vmatmul.bf16.gmra.mxu0 %v211
  %v260 = vpop.f32.mrf.mxu0
  %v261 = vadd.f32 %v194, %v260
  %v262 = vpop.f32.mrf.mxu0
  %263 = vdwg.mxu0
  %264 = vmatpush.bf16.msra.mxu0 0
  %265 = vmatpush.bf16.msra.mxu0 0
  %266 = vmatpush.bf16.msra.mxu0 0
  %267 = vmatpush.bf16.msra.mxu0 0
  %268 = vmatpush.bf16.msra.mxu0 0
  %269 = vmatpush.bf16.msra.mxu0 0
  %270 = vmatpush.bf16.msra.mxu0 0
  %271 = vmatpush.bf16.msra.mxu0 %v223
  %272 = vmatmul.bf16.gmra.mxu0 %v211
  %v273 = vpop.f32.mrf.mxu0
  %v274 = vadd.f32 %v207, %v273
  %v275 = vpop.f32.mrf.mxu0
  %276 = vdwg.mxu0
  %277 = vrot.lane.b32.xlu0 %v72, 15
  %v278 = vpop.permute.xlu0 %277
  %279 = vrot.lane.b32.xlu0 %v73, 15
  %v280 = vpop.permute.xlu0 %279
  %281 = vrot.lane.b32.xlu0 %v74, 15
  %v282 = vpop.permute.xlu0 %281
  %283 = vrot.lane.b32.xlu0 %v75, 15
  %v284 = vpop.permute.xlu0 %283
  %vm285 = vcmp.lt.s32.totalorder %v85, 15
  %v286 = vsel %vm285, %v282, %v284
  %v287 = vsel %vm285, %v280, %v282
  %v288 = vsel %vm285, %v278, %v280
  %v289 = vsel %vm285, %v284, %v278
  %v291 = vperm.slane %v44, 0
  %v292 = vperm.slane %v44, 1
  %v293 = vperm.slane %v44, 2
  %v294 = vperm.slane %v44, 3
  %v299 = vmul.f32 %v289, %v291
  %v300 = vmul.f32 %v288, %v292
  %v301 = vmul.f32 %v287, %v293
  %v302 = vmul.f32 %v286, %v294
  %s303 = scalar_lea.vmem %s2, 8
  %v304 = vld [vmem:[%s303] sm:$0xf]
  %v305 = vpack.c.bf16 %v299, %v299
  %v306 = vpack.c.bf16 %v300, %v300
  %v307 = vpack.c.bf16 %v301, %v301
  %v308 = vpack.c.bf16 %v302, %v302
  %v310 = vsel %vm141, %v304, 0
  %v313 = vsel %vm145, %v305, 0
  %v316 = vsel %vm145, %v306, 0
  %v319 = vsel %vm145, %v307, 0
  %v322 = vsel %vm145, %v308, 0
  %324 = vmatpush.bf16.msra.mxu0 0
  %325 = vmatpush.bf16.msra.mxu0 0
  %326 = vmatpush.bf16.msra.mxu0 0
  %327 = vmatpush.bf16.msra.mxu0 0
  %328 = vmatpush.bf16.msra.mxu0 0
  %329 = vmatpush.bf16.msra.mxu0 0
  %330 = vmatpush.bf16.msra.mxu0 0
  %331 = vmatpush.bf16.msra.mxu0 %v313
  %332 = vmatmul.bf16.gmra.mxu0 %v310
  %v333 = vpop.f32.mrf.mxu0
  %v334 = vadd.f32 0.0, %v333
  %v335 = vpop.f32.mrf.mxu0
  %336 = vdwg.mxu0
  %337 = vmatpush.bf16.msra.mxu0 0
  %338 = vmatpush.bf16.msra.mxu0 0
  %339 = vmatpush.bf16.msra.mxu0 0
  %340 = vmatpush.bf16.msra.mxu0 0
  %341 = vmatpush.bf16.msra.mxu0 0
  %342 = vmatpush.bf16.msra.mxu0 0
  %343 = vmatpush.bf16.msra.mxu0 0
  %344 = vmatpush.bf16.msra.mxu0 %v316
  %345 = vmatmul.bf16.gmra.mxu0 %v310
  %v346 = vpop.f32.mrf.mxu0
  %v347 = vadd.f32 0.0, %v346
  %v348 = vpop.f32.mrf.mxu0
  %349 = vdwg.mxu0
  %350 = vmatpush.bf16.msra.mxu0 0
  %351 = vmatpush.bf16.msra.mxu0 0
  %352 = vmatpush.bf16.msra.mxu0 0
  %353 = vmatpush.bf16.msra.mxu0 0
  %354 = vmatpush.bf16.msra.mxu0 0
  %355 = vmatpush.bf16.msra.mxu0 0
  %356 = vmatpush.bf16.msra.mxu0 0
  %357 = vmatpush.bf16.msra.mxu0 %v319
  %358 = vmatmul.bf16.gmra.mxu0 %v310
  %v359 = vpop.f32.mrf.mxu0
  %v360 = vadd.f32 0.0, %v359
  %v361 = vpop.f32.mrf.mxu0
  %362 = vdwg.mxu0
  %363 = vmatpush.bf16.msra.mxu0 0
  %364 = vmatpush.bf16.msra.mxu0 0
  %365 = vmatpush.bf16.msra.mxu0 0
  %366 = vmatpush.bf16.msra.mxu0 0
  %367 = vmatpush.bf16.msra.mxu0 0
  %368 = vmatpush.bf16.msra.mxu0 0
  %369 = vmatpush.bf16.msra.mxu0 0
  %370 = vmatpush.bf16.msra.mxu0 %v322
  %371 = vmatmul.bf16.gmra.mxu0 %v310
  %v372 = vpop.f32.mrf.mxu0
  %v373 = vadd.f32 0.0, %v372
  %v374 = vpop.f32.mrf.mxu0
  %375 = vdwg.mxu0
  %v376 = vadd.f32 %v235, %v334
  %v377 = vadd.f32 %v248, %v347
  %v378 = vadd.f32 %v261, %v360
  %v379 = vadd.f32 %v274, %v373
  %380 = vrot.lane.b32.xlu0 %v72, 1
  %v381 = vpop.permute.xlu0 %380
  %382 = vrot.lane.b32.xlu0 %v73, 1
  %v383 = vpop.permute.xlu0 %382
  %384 = vrot.lane.b32.xlu0 %v74, 1
  %v385 = vpop.permute.xlu0 %384
  %386 = vrot.lane.b32.xlu0 %v75, 1
  %v387 = vpop.permute.xlu0 %386
  %vm388 = vcmp.lt.s32.totalorder %v85, 1
  %v389 = vsel %vm388, %v385, %v387
  %v390 = vsel %vm388, %v383, %v385
  %v391 = vsel %vm388, %v381, %v383
  %v392 = vsel %vm388, %v387, %v381
  %v394 = vperm.slane %v51, 0
  %v395 = vperm.slane %v51, 1
  %v396 = vperm.slane %v51, 2
  %v397 = vperm.slane %v51, 3
  %v402 = vmul.f32 %v392, %v394
  %v403 = vmul.f32 %v391, %v395
  %v404 = vmul.f32 %v390, %v396
  %v405 = vmul.f32 %v389, %v397
  %s406 = scalar_lea.vmem %s2, 12
  %v407 = vld [vmem:[%s406] sm:$0xf]
  %v408 = vpack.c.bf16 %v402, %v402
  %v409 = vpack.c.bf16 %v403, %v403
  %v410 = vpack.c.bf16 %v404, %v404
  %v411 = vpack.c.bf16 %v405, %v405
  %v413 = vsel %vm141, %v407, 0
  %v416 = vsel %vm145, %v408, 0
  %v419 = vsel %vm145, %v409, 0
  %v422 = vsel %vm145, %v410, 0
  %v425 = vsel %vm145, %v411, 0
  %427 = vmatpush.bf16.msra.mxu0 0
  %428 = vmatpush.bf16.msra.mxu0 0
  %429 = vmatpush.bf16.msra.mxu0 0
  %430 = vmatpush.bf16.msra.mxu0 0
  %431 = vmatpush.bf16.msra.mxu0 0
  %432 = vmatpush.bf16.msra.mxu0 0
  %433 = vmatpush.bf16.msra.mxu0 0
  %434 = vmatpush.bf16.msra.mxu0 %v416
  %435 = vmatmul.bf16.gmra.mxu0 %v413
  %v436 = vpop.f32.mrf.mxu0
  %v437 = vadd.f32 0.0, %v436
  %v438 = vpop.f32.mrf.mxu0
  %439 = vdwg.mxu0
  %440 = vmatpush.bf16.msra.mxu0 0
  %441 = vmatpush.bf16.msra.mxu0 0
  %442 = vmatpush.bf16.msra.mxu0 0
  %443 = vmatpush.bf16.msra.mxu0 0
  %444 = vmatpush.bf16.msra.mxu0 0
  %445 = vmatpush.bf16.msra.mxu0 0
  %446 = vmatpush.bf16.msra.mxu0 0
  %447 = vmatpush.bf16.msra.mxu0 %v419
  %448 = vmatmul.bf16.gmra.mxu0 %v413
  %v449 = vpop.f32.mrf.mxu0
  %v450 = vadd.f32 0.0, %v449
  %v451 = vpop.f32.mrf.mxu0
  %452 = vdwg.mxu0
  %453 = vmatpush.bf16.msra.mxu0 0
  %454 = vmatpush.bf16.msra.mxu0 0
  %455 = vmatpush.bf16.msra.mxu0 0
  %456 = vmatpush.bf16.msra.mxu0 0
  %457 = vmatpush.bf16.msra.mxu0 0
  %458 = vmatpush.bf16.msra.mxu0 0
  %459 = vmatpush.bf16.msra.mxu0 0
  %460 = vmatpush.bf16.msra.mxu0 %v422
  %461 = vmatmul.bf16.gmra.mxu0 %v413
  %v462 = vpop.f32.mrf.mxu0
  %v463 = vadd.f32 0.0, %v462
  %v464 = vpop.f32.mrf.mxu0
  %465 = vdwg.mxu0
  %466 = vmatpush.bf16.msra.mxu0 0
  %467 = vmatpush.bf16.msra.mxu0 0
  %468 = vmatpush.bf16.msra.mxu0 0
  %469 = vmatpush.bf16.msra.mxu0 0
  %470 = vmatpush.bf16.msra.mxu0 0
  %471 = vmatpush.bf16.msra.mxu0 0
  %472 = vmatpush.bf16.msra.mxu0 0
  %473 = vmatpush.bf16.msra.mxu0 %v425
  %474 = vmatmul.bf16.gmra.mxu0 %v413
  %v475 = vpop.f32.mrf.mxu0
  %v476 = vadd.f32 0.0, %v475
  %v477 = vpop.f32.mrf.mxu0
  %478 = vdwg.mxu0
  %v479 = vadd.f32 %v376, %v437
  %v480 = vadd.f32 %v377, %v450
  %v481 = vadd.f32 %v378, %v463
  %v482 = vadd.f32 %v379, %v476
  %s483 = scalar_lea.vmem %s2, 16
  %v484 = vld [vmem:[%s483] sm:$0xf]
  %v485 = vpack.c.bf16 %v72, %v72
  %v486 = vpack.c.bf16 %v73, %v73
  %v487 = vpack.c.bf16 %v74, %v74
  %v488 = vpack.c.bf16 %v75, %v75
  %v490 = vsel %vm141, %v484, 0
  %v493 = vsel %vm145, %v485, 0
  %v496 = vsel %vm145, %v486, 0
  %v499 = vsel %vm145, %v487, 0
  %v502 = vsel %vm145, %v488, 0
  %504 = vmatpush.bf16.msra.mxu0 0
  %505 = vmatpush.bf16.msra.mxu0 0
  %506 = vmatpush.bf16.msra.mxu0 0
  %507 = vmatpush.bf16.msra.mxu0 0
  %508 = vmatpush.bf16.msra.mxu0 0
  %509 = vmatpush.bf16.msra.mxu0 0
  %510 = vmatpush.bf16.msra.mxu0 0
  %511 = vmatpush.bf16.msra.mxu0 %v493
  %512 = vmatmul.bf16.gmra.mxu0 %v490
  %v513 = vpop.f32.mrf.mxu0
  %v514 = vadd.f32 0.0, %v513
  %v515 = vpop.f32.mrf.mxu0
  %516 = vdwg.mxu0
  %517 = vmatpush.bf16.msra.mxu0 0
  %518 = vmatpush.bf16.msra.mxu0 0
  %519 = vmatpush.bf16.msra.mxu0 0
  %520 = vmatpush.bf16.msra.mxu0 0
  %521 = vmatpush.bf16.msra.mxu0 0
  %522 = vmatpush.bf16.msra.mxu0 0
  %523 = vmatpush.bf16.msra.mxu0 0
  %524 = vmatpush.bf16.msra.mxu0 %v496
  %525 = vmatmul.bf16.gmra.mxu0 %v490
  %v526 = vpop.f32.mrf.mxu0
  %v527 = vadd.f32 0.0, %v526
  %v528 = vpop.f32.mrf.mxu0
  %529 = vdwg.mxu0
  %530 = vmatpush.bf16.msra.mxu0 0
  %531 = vmatpush.bf16.msra.mxu0 0
  %532 = vmatpush.bf16.msra.mxu0 0
  %533 = vmatpush.bf16.msra.mxu0 0
  %534 = vmatpush.bf16.msra.mxu0 0
  %535 = vmatpush.bf16.msra.mxu0 0
  %536 = vmatpush.bf16.msra.mxu0 0
  %537 = vmatpush.bf16.msra.mxu0 %v499
  %538 = vmatmul.bf16.gmra.mxu0 %v490
  %v539 = vpop.f32.mrf.mxu0
  %v540 = vadd.f32 0.0, %v539
  %v541 = vpop.f32.mrf.mxu0
  %542 = vdwg.mxu0
  %543 = vmatpush.bf16.msra.mxu0 0
  %544 = vmatpush.bf16.msra.mxu0 0
  %545 = vmatpush.bf16.msra.mxu0 0
  %546 = vmatpush.bf16.msra.mxu0 0
  %547 = vmatpush.bf16.msra.mxu0 0
  %548 = vmatpush.bf16.msra.mxu0 0
  %549 = vmatpush.bf16.msra.mxu0 0
  %550 = vmatpush.bf16.msra.mxu0 %v502
  %551 = vmatmul.bf16.gmra.mxu0 %v490
  %v552 = vpop.f32.mrf.mxu0
  %v553 = vadd.f32 0.0, %v552
  %v554 = vpop.f32.mrf.mxu0
  %555 = vdwg.mxu0
  %v556 = vadd.f32 %v479, %v514
  %v557 = vadd.f32 %v480, %v527
  %v558 = vadd.f32 %v481, %v540
  %v559 = vadd.f32 %v482, %v553
  %560 = vrot.lane.b32.xlu0 %v72, 127
  %v561 = vpop.permute.xlu0 %560
  %562 = vrot.lane.b32.xlu0 %v73, 127
  %v563 = vpop.permute.xlu0 %562
  %564 = vrot.lane.b32.xlu0 %v74, 127
  %v565 = vpop.permute.xlu0 %564
  %566 = vrot.lane.b32.xlu0 %v75, 127
  %v567 = vpop.permute.xlu0 %566
  %vm568 = vcmp.lt.s32.totalorder %v85, 127
  %v569 = vsel %vm568, %v565, %v567
  %v570 = vsel %vm568, %v563, %v565
  %v571 = vsel %vm568, %v561, %v563
  %v572 = vsel %vm568, %v567, %v561
  %v574 = vperm.slane %v55, 0
  %v575 = vperm.slane %v55, 1
  %v576 = vperm.slane %v55, 2
  %v577 = vperm.slane %v55, 3
  %v582 = vmul.f32 %v571, %v574
  %v583 = vmul.f32 %v570, %v575
  %v584 = vmul.f32 %v569, %v576
  %v585 = vmul.f32 %v572, %v577
  %s586 = scalar_lea.vmem %s2, 20
  %v587 = vld [vmem:[%s586] sm:$0xf]
  %v588 = vpack.c.bf16 %v582, %v582
  %v589 = vpack.c.bf16 %v583, %v583
  %v590 = vpack.c.bf16 %v584, %v584
  %v591 = vpack.c.bf16 %v585, %v585
  %v593 = vsel %vm141, %v587, 0
  %v596 = vsel %vm145, %v588, 0
  %v599 = vsel %vm145, %v589, 0
  %v602 = vsel %vm145, %v590, 0
  %v605 = vsel %vm145, %v591, 0
  %607 = vmatpush.bf16.msra.mxu0 0
  %608 = vmatpush.bf16.msra.mxu0 0
  %609 = vmatpush.bf16.msra.mxu0 0
  %610 = vmatpush.bf16.msra.mxu0 0
  %611 = vmatpush.bf16.msra.mxu0 0
  %612 = vmatpush.bf16.msra.mxu0 0
  %613 = vmatpush.bf16.msra.mxu0 0
  %614 = vmatpush.bf16.msra.mxu0 %v596
  %615 = vmatmul.bf16.gmra.mxu0 %v593
  %v616 = vpop.f32.mrf.mxu0
  %v617 = vadd.f32 0.0, %v616
  %v618 = vpop.f32.mrf.mxu0
  %619 = vdwg.mxu0
  %620 = vmatpush.bf16.msra.mxu0 0
  %621 = vmatpush.bf16.msra.mxu0 0
  %622 = vmatpush.bf16.msra.mxu0 0
  %623 = vmatpush.bf16.msra.mxu0 0
  %624 = vmatpush.bf16.msra.mxu0 0
  %625 = vmatpush.bf16.msra.mxu0 0
  %626 = vmatpush.bf16.msra.mxu0 0
  %627 = vmatpush.bf16.msra.mxu0 %v599
  %628 = vmatmul.bf16.gmra.mxu0 %v593
  %v629 = vpop.f32.mrf.mxu0
  %v630 = vadd.f32 0.0, %v629
  %v631 = vpop.f32.mrf.mxu0
  %632 = vdwg.mxu0
  %633 = vmatpush.bf16.msra.mxu0 0
  %634 = vmatpush.bf16.msra.mxu0 0
  %635 = vmatpush.bf16.msra.mxu0 0
  %636 = vmatpush.bf16.msra.mxu0 0
  %637 = vmatpush.bf16.msra.mxu0 0
  %638 = vmatpush.bf16.msra.mxu0 0
  %639 = vmatpush.bf16.msra.mxu0 0
  %640 = vmatpush.bf16.msra.mxu0 %v602
  %641 = vmatmul.bf16.gmra.mxu0 %v593
  %v642 = vpop.f32.mrf.mxu0
  %v643 = vadd.f32 0.0, %v642
  %v644 = vpop.f32.mrf.mxu0
  %645 = vdwg.mxu0
  %646 = vmatpush.bf16.msra.mxu0 0
  %647 = vmatpush.bf16.msra.mxu0 0
  %648 = vmatpush.bf16.msra.mxu0 0
  %649 = vmatpush.bf16.msra.mxu0 0
  %650 = vmatpush.bf16.msra.mxu0 0
  %651 = vmatpush.bf16.msra.mxu0 0
  %652 = vmatpush.bf16.msra.mxu0 0
  %653 = vmatpush.bf16.msra.mxu0 %v605
  %654 = vmatmul.bf16.gmra.mxu0 %v593
  %v655 = vpop.f32.mrf.mxu0
  %v656 = vadd.f32 0.0, %v655
  %v657 = vpop.f32.mrf.mxu0
  %658 = vdwg.mxu0
  %v659 = vadd.f32 %v556, %v617
  %v660 = vadd.f32 %v557, %v630
  %v661 = vadd.f32 %v558, %v643
  %v662 = vadd.f32 %v559, %v656
  %663 = vrot.lane.b32.xlu0 %v72, 113
  %v664 = vpop.permute.xlu0 %663
  %665 = vrot.lane.b32.xlu0 %v73, 113
  %v666 = vpop.permute.xlu0 %665
  %667 = vrot.lane.b32.xlu0 %v74, 113
  %v668 = vpop.permute.xlu0 %667
  %669 = vrot.lane.b32.xlu0 %v75, 113
  %v670 = vpop.permute.xlu0 %669
  %vm671 = vcmp.lt.s32.totalorder %v85, 113
  %v672 = vsel %vm671, %v668, %v670
  %v673 = vsel %vm671, %v666, %v668
  %v674 = vsel %vm671, %v664, %v666
  %v675 = vsel %vm671, %v670, %v664
  %v677 = vperm.slane %v63, 0
  %v678 = vperm.slane %v63, 1
  %v679 = vperm.slane %v63, 2
  %v680 = vperm.slane %v63, 3
  %v685 = vmul.f32 %v674, %v677
  %v686 = vmul.f32 %v673, %v678
  %v687 = vmul.f32 %v672, %v679
  %v688 = vmul.f32 %v675, %v680
  %s689 = scalar_lea.vmem %s2, 24
  %v690 = vld [vmem:[%s689] sm:$0xf]
  %v691 = vpack.c.bf16 %v685, %v685
  %v692 = vpack.c.bf16 %v686, %v686
  %v693 = vpack.c.bf16 %v687, %v687
  %v694 = vpack.c.bf16 %v688, %v688
  %v696 = vsel %vm141, %v690, 0
  %v699 = vsel %vm145, %v691, 0
  %v702 = vsel %vm145, %v692, 0
  %v705 = vsel %vm145, %v693, 0
  %v708 = vsel %vm145, %v694, 0
  %710 = vmatpush.bf16.msra.mxu0 0
  %711 = vmatpush.bf16.msra.mxu0 0
  %712 = vmatpush.bf16.msra.mxu0 0
  %713 = vmatpush.bf16.msra.mxu0 0
  %714 = vmatpush.bf16.msra.mxu0 0
  %715 = vmatpush.bf16.msra.mxu0 0
  %716 = vmatpush.bf16.msra.mxu0 0
  %717 = vmatpush.bf16.msra.mxu0 %v699
  %718 = vmatmul.bf16.gmra.mxu0 %v696
  %v719 = vpop.f32.mrf.mxu0
  %v720 = vadd.f32 0.0, %v719
  %v721 = vpop.f32.mrf.mxu0
  %722 = vdwg.mxu0
  %723 = vmatpush.bf16.msra.mxu0 0
  %724 = vmatpush.bf16.msra.mxu0 0
  %725 = vmatpush.bf16.msra.mxu0 0
  %726 = vmatpush.bf16.msra.mxu0 0
  %727 = vmatpush.bf16.msra.mxu0 0
  %728 = vmatpush.bf16.msra.mxu0 0
  %729 = vmatpush.bf16.msra.mxu0 0
  %730 = vmatpush.bf16.msra.mxu0 %v702
  %731 = vmatmul.bf16.gmra.mxu0 %v696
  %v732 = vpop.f32.mrf.mxu0
  %v733 = vadd.f32 0.0, %v732
  %v734 = vpop.f32.mrf.mxu0
  %735 = vdwg.mxu0
  %736 = vmatpush.bf16.msra.mxu0 0
  %737 = vmatpush.bf16.msra.mxu0 0
  %738 = vmatpush.bf16.msra.mxu0 0
  %739 = vmatpush.bf16.msra.mxu0 0
  %740 = vmatpush.bf16.msra.mxu0 0
  %741 = vmatpush.bf16.msra.mxu0 0
  %742 = vmatpush.bf16.msra.mxu0 0
  %743 = vmatpush.bf16.msra.mxu0 %v705
  %744 = vmatmul.bf16.gmra.mxu0 %v696
  %v745 = vpop.f32.mrf.mxu0
  %v746 = vadd.f32 0.0, %v745
  %v747 = vpop.f32.mrf.mxu0
  %748 = vdwg.mxu0
  %749 = vmatpush.bf16.msra.mxu0 0
  %750 = vmatpush.bf16.msra.mxu0 0
  %751 = vmatpush.bf16.msra.mxu0 0
  %752 = vmatpush.bf16.msra.mxu0 0
  %753 = vmatpush.bf16.msra.mxu0 0
  %754 = vmatpush.bf16.msra.mxu0 0
  %755 = vmatpush.bf16.msra.mxu0 0
  %756 = vmatpush.bf16.msra.mxu0 %v708
  %757 = vmatmul.bf16.gmra.mxu0 %v696
  %v758 = vpop.f32.mrf.mxu0
  %v759 = vadd.f32 0.0, %v758
  %v760 = vpop.f32.mrf.mxu0
  %761 = vdwg.mxu0
  %v762 = vadd.f32 %v659, %v720
  %v763 = vadd.f32 %v660, %v733
  %v764 = vadd.f32 %v661, %v746
  %v765 = vadd.f32 %v662, %v759
  %766 = vrot.lane.b32.xlu0 %v72, 112
  %v767 = vpop.permute.xlu0 %766
  %768 = vrot.lane.b32.xlu0 %v73, 112
  %v769 = vpop.permute.xlu0 %768
  %770 = vrot.lane.b32.xlu0 %v74, 112
  %v771 = vpop.permute.xlu0 %770
  %772 = vrot.lane.b32.xlu0 %v75, 112
  %v773 = vpop.permute.xlu0 %772
  %vm774 = vcmp.lt.s32.totalorder %v85, 112
  %v775 = vsel %vm774, %v771, %v773
  %v776 = vsel %vm774, %v769, %v771
  %v777 = vsel %vm774, %v767, %v769
  %v778 = vsel %vm774, %v773, %v767
  %v780 = vperm.slane %v67, 0
  %v781 = vperm.slane %v67, 1
  %v782 = vperm.slane %v67, 2
  %v783 = vperm.slane %v67, 3
  %v788 = vmul.f32 %v777, %v780
  %v789 = vmul.f32 %v776, %v781
  %v790 = vmul.f32 %v775, %v782
  %v791 = vmul.f32 %v778, %v783
  %s792 = scalar_lea.vmem %s2, 28
  %v793 = vld [vmem:[%s792] sm:$0xf]
  %v794 = vpack.c.bf16 %v788, %v788
  %v795 = vpack.c.bf16 %v789, %v789
  %v796 = vpack.c.bf16 %v790, %v790
  %v797 = vpack.c.bf16 %v791, %v791
  %v799 = vsel %vm141, %v793, 0
  %v802 = vsel %vm145, %v794, 0
  %v805 = vsel %vm145, %v795, 0
  %v808 = vsel %vm145, %v796, 0
  %v811 = vsel %vm145, %v797, 0
  %813 = vmatpush.bf16.msra.mxu0 0
  %814 = vmatpush.bf16.msra.mxu0 0
  %815 = vmatpush.bf16.msra.mxu0 0
  %816 = vmatpush.bf16.msra.mxu0 0
  %817 = vmatpush.bf16.msra.mxu0 0
  %818 = vmatpush.bf16.msra.mxu0 0
  %819 = vmatpush.bf16.msra.mxu0 0
  %820 = vmatpush.bf16.msra.mxu0 %v802
  %821 = vmatmul.bf16.gmra.mxu0 %v799
  %v822 = vpop.f32.mrf.mxu0
  %v823 = vadd.f32 0.0, %v822
  %v824 = vpop.f32.mrf.mxu0
  %825 = vdwg.mxu0
  %826 = vmatpush.bf16.msra.mxu0 0
  %827 = vmatpush.bf16.msra.mxu0 0
  %828 = vmatpush.bf16.msra.mxu0 0
  %829 = vmatpush.bf16.msra.mxu0 0
  %830 = vmatpush.bf16.msra.mxu0 0
  %831 = vmatpush.bf16.msra.mxu0 0
  %832 = vmatpush.bf16.msra.mxu0 0
  %833 = vmatpush.bf16.msra.mxu0 %v805
  %834 = vmatmul.bf16.gmra.mxu0 %v799
  %v835 = vpop.f32.mrf.mxu0
  %v836 = vadd.f32 0.0, %v835
  %v837 = vpop.f32.mrf.mxu0
  %838 = vdwg.mxu0
  %839 = vmatpush.bf16.msra.mxu0 0
  %840 = vmatpush.bf16.msra.mxu0 0
  %841 = vmatpush.bf16.msra.mxu0 0
  %842 = vmatpush.bf16.msra.mxu0 0
  %843 = vmatpush.bf16.msra.mxu0 0
  %844 = vmatpush.bf16.msra.mxu0 0
  %845 = vmatpush.bf16.msra.mxu0 0
  %846 = vmatpush.bf16.msra.mxu0 %v808
  %847 = vmatmul.bf16.gmra.mxu0 %v799
  %v848 = vpop.f32.mrf.mxu0
  %v849 = vadd.f32 0.0, %v848
  %v850 = vpop.f32.mrf.mxu0
  %851 = vdwg.mxu0
  %852 = vmatpush.bf16.msra.mxu0 0
  %853 = vmatpush.bf16.msra.mxu0 0
  %854 = vmatpush.bf16.msra.mxu0 0
  %855 = vmatpush.bf16.msra.mxu0 0
  %856 = vmatpush.bf16.msra.mxu0 0
  %857 = vmatpush.bf16.msra.mxu0 0
  %858 = vmatpush.bf16.msra.mxu0 0
  %859 = vmatpush.bf16.msra.mxu0 %v811
  %860 = vmatmul.bf16.gmra.mxu0 %v799
  %v861 = vpop.f32.mrf.mxu0
  %v862 = vadd.f32 0.0, %v861
  %v863 = vpop.f32.mrf.mxu0
  %864 = vdwg.mxu0
  %v865 = vadd.f32 %v762, %v823
  %v866 = vadd.f32 %v763, %v836
  %v867 = vadd.f32 %v764, %v849
  %v868 = vadd.f32 %v765, %v862
  %869 = vrot.lane.b32.xlu0 %v72, 111
  %v870 = vpop.permute.xlu0 %869
  %871 = vrot.lane.b32.xlu0 %v73, 111
  %v872 = vpop.permute.xlu0 %871
  %873 = vrot.lane.b32.xlu0 %v74, 111
  %v874 = vpop.permute.xlu0 %873
  %875 = vrot.lane.b32.xlu0 %v75, 111
  %v876 = vpop.permute.xlu0 %875
  %vm877 = vcmp.lt.s32.totalorder %v85, 111
  %v878 = vsel %vm877, %v874, %v876
  %v879 = vsel %vm877, %v872, %v874
  %v880 = vsel %vm877, %v870, %v872
  %v881 = vsel %vm877, %v876, %v870
  %v883 = vperm.slane %v71, 0
  %v884 = vperm.slane %v71, 1
  %v885 = vperm.slane %v71, 2
  %v886 = vperm.slane %v71, 3
  %v891 = vmul.f32 %v880, %v883
  %v892 = vmul.f32 %v879, %v884
  %v893 = vmul.f32 %v878, %v885
  %v894 = vmul.f32 %v881, %v886
  %s895 = scalar_lea.vmem %s2, 32
  %v896 = vld [vmem:[%s895] sm:$0xf]
  %v897 = vpack.c.bf16 %v891, %v891
  %v898 = vpack.c.bf16 %v892, %v892
  %v899 = vpack.c.bf16 %v893, %v893
  %v900 = vpack.c.bf16 %v894, %v894
  %v902 = vsel %vm141, %v896, 0
  %v905 = vsel %vm145, %v897, 0
  %v908 = vsel %vm145, %v898, 0
  %v911 = vsel %vm145, %v899, 0
  %v914 = vsel %vm145, %v900, 0
  %916 = vmatpush.bf16.msra.mxu0 0
  %917 = vmatpush.bf16.msra.mxu0 0
  %918 = vmatpush.bf16.msra.mxu0 0
  %919 = vmatpush.bf16.msra.mxu0 0
  %920 = vmatpush.bf16.msra.mxu0 0
  %921 = vmatpush.bf16.msra.mxu0 0
  %922 = vmatpush.bf16.msra.mxu0 0
  %923 = vmatpush.bf16.msra.mxu0 %v905
  %924 = vmatmul.bf16.gmra.mxu0 %v902
  %v925 = vpop.f32.mrf.mxu0
  %v926 = vadd.f32 0.0, %v925
  %v927 = vpop.f32.mrf.mxu0
  %928 = vdwg.mxu0
  %929 = vmatpush.bf16.msra.mxu0 0
  %930 = vmatpush.bf16.msra.mxu0 0
  %931 = vmatpush.bf16.msra.mxu0 0
  %932 = vmatpush.bf16.msra.mxu0 0
  %933 = vmatpush.bf16.msra.mxu0 0
  %934 = vmatpush.bf16.msra.mxu0 0
  %935 = vmatpush.bf16.msra.mxu0 0
  %936 = vmatpush.bf16.msra.mxu0 %v908
  %937 = vmatmul.bf16.gmra.mxu0 %v902
  %v938 = vpop.f32.mrf.mxu0
  %v939 = vadd.f32 0.0, %v938
  %v940 = vpop.f32.mrf.mxu0
  %941 = vdwg.mxu0
  %942 = vmatpush.bf16.msra.mxu0 0
  %943 = vmatpush.bf16.msra.mxu0 0
  %944 = vmatpush.bf16.msra.mxu0 0
  %945 = vmatpush.bf16.msra.mxu0 0
  %946 = vmatpush.bf16.msra.mxu0 0
  %947 = vmatpush.bf16.msra.mxu0 0
  %948 = vmatpush.bf16.msra.mxu0 0
  %949 = vmatpush.bf16.msra.mxu0 %v911
  %950 = vmatmul.bf16.gmra.mxu0 %v902
  %v951 = vpop.f32.mrf.mxu0
  %v952 = vadd.f32 0.0, %v951
  %v953 = vpop.f32.mrf.mxu0
  %954 = vdwg.mxu0
  %955 = vmatpush.bf16.msra.mxu0 0
  %956 = vmatpush.bf16.msra.mxu0 0
  %957 = vmatpush.bf16.msra.mxu0 0
  %958 = vmatpush.bf16.msra.mxu0 0
  %959 = vmatpush.bf16.msra.mxu0 0
  %960 = vmatpush.bf16.msra.mxu0 0
  %961 = vmatpush.bf16.msra.mxu0 0
  %962 = vmatpush.bf16.msra.mxu0 %v914
  %963 = vmatmul.bf16.gmra.mxu0 %v902
  %v964 = vpop.f32.mrf.mxu0
  %v965 = vadd.f32 0.0, %v964
  %v966 = vpop.f32.mrf.mxu0
  %967 = vdwg.mxu0
  %v968 = vadd.f32 %v865, %v926
  %v969 = vadd.f32 %v866, %v939
  %v970 = vadd.f32 %v867, %v952
  %v971 = vadd.f32 %v868, %v965
  %v972 = vadd.f32 %v968, %v969
  %v973 = vadd.f32 %v972, %v970
  %v974 = vadd.f32 %v973, %v971
  %975 = vadd.xlane.f32.xlu0 %v974
  %v976 = vpop.xlane.xlu0 %975
  %v977 = vmul.f32 %v976, 0.001953125
  %v978 = vsub.f32 %v968, %v977
  %v979 = vsub.f32 %v969, %v977
  %v980 = vsub.f32 %v970, %v977
  %v981 = vsub.f32 %v971, %v977
  %v982 = vmul.f32 %v978, %v978
  %v983 = vmul.f32 %v979, %v979
  %v984 = vmul.f32 %v980, %v980
  %v985 = vmul.f32 %v981, %v981
  %v986 = vadd.f32 %v982, %v983
  %v987 = vadd.f32 %v986, %v984
  %v988 = vadd.f32 %v987, %v985
  %989 = vadd.xlane.f32.xlu0 %v988
  %v990 = vpop.xlane.xlu0 %989
  %v991 = vmul.f32 %v990, 0.001953125
  %v992 = vadd.f32 %v991, 1e-05
  %v993 = vrsqrt.pop %v992
  %v994 = vmul.f32 %v993, %v992
  %v995 = vmul.f32 %v994, %v993
  %v996 = vmul.f32 0.5, %v995
  %v997 = vsub.f32 1.5, %v996
  %v998 = vmul.f32 %v993, %v997
  %vm999 = vweird.f32 %v992
  %vm1000 = vweird.f32 %v993
  %vm1001 = vmor %vm999, %vm1000
  %v1002 = vsel %vm1001, %v993, %v998
  %v1003 = vmul.f32 %v978, %v1002
  %v1004 = vmul.f32 %v979, %v1002
  %v1005 = vmul.f32 %v980, %v1002
  %v1006 = vmul.f32 %v981, %v1002
  %v1007 = vmax.f32 %v1003, 0.0
  %v1008 = vmax.f32 %v1004, 0.0
  %v1009 = vmax.f32 %v1005, 0.0
  %v1010 = vmax.f32 %v1006, 0.0
  %1011 = vst [vmem:[%s4] sm:$0xff] %v1007
  %1012 = vst [vmem:[%s4 + $0x8] sm:$0xff] %v1008
  %1013 = vst [vmem:[%s4 + $0x10] sm:$0xff] %v1009
  %1014 = vst [vmem:[%s4 + $0x18] sm:$0xff] %v1010
  %1015 = vrot.lane.b32.xlu0 %v1007, 17
  %v1016 = vpop.permute.xlu0 %1015
  %1017 = vrot.lane.b32.xlu0 %v1008, 17
  %v1018 = vpop.permute.xlu0 %1017
  %1019 = vrot.lane.b32.xlu0 %v1009, 17
  %v1020 = vpop.permute.xlu0 %1019
  %1021 = vrot.lane.b32.xlu0 %v1010, 17
  %v1022 = vpop.permute.xlu0 %1021
  %v1023 = vsel %vm86, %v1020, %v1022
  %v1024 = vsel %vm86, %v1018, %v1020
  %v1025 = vsel %vm86, %v1016, %v1018
  %v1026 = vsel %vm86, %v1022, %v1016
  %v1027 = vmul.f32 %v1026, %v92
  %v1028 = vmul.f32 %v1025, %v93
  %v1029 = vmul.f32 %v1024, %v94
  %v1030 = vmul.f32 %v1023, %v95
  %v1031 = vld [vmem:[%s1] sm:$0xf]
  %v1032 = vpack.c.bf16 %v1027, %v1027
  %v1033 = vpack.c.bf16 %v1028, %v1028
  %v1034 = vpack.c.bf16 %v1029, %v1029
  %v1035 = vpack.c.bf16 %v1030, %v1030
  %1036 = vrot.lane.b32.xlu0 %v1007, 16
  %v1037 = vpop.permute.xlu0 %1036
  %1038 = vrot.lane.b32.xlu0 %v1008, 16
  %v1039 = vpop.permute.xlu0 %1038
  %1040 = vrot.lane.b32.xlu0 %v1009, 16
  %v1041 = vpop.permute.xlu0 %1040
  %1042 = vrot.lane.b32.xlu0 %v1010, 16
  %v1043 = vpop.permute.xlu0 %1042
  %v1044 = vsel %vm117, %v1041, %v1043
  %v1045 = vsel %vm117, %v1039, %v1041
  %v1046 = vsel %vm117, %v1037, %v1039
  %v1047 = vsel %vm117, %v1043, %v1037
  %v1048 = vmul.f32 %v1047, %v123
  %v1049 = vmul.f32 %v1046, %v124
  %v1050 = vmul.f32 %v1045, %v125
  %v1051 = vmul.f32 %v1044, %v126
  %s1052 = scalar_lea.vmem %s1, 4
  %v1053 = vld [vmem:[%s1052] sm:$0xf]
  %v1054 = vpack.c.bf16 %v1048, %v1048
  %v1055 = vpack.c.bf16 %v1049, %v1049
  %v1056 = vpack.c.bf16 %v1050, %v1050
  %v1057 = vpack.c.bf16 %v1051, %v1051
  %v1059 = vsel %vm141, %v1053, 0
  %v1062 = vsel %vm145, %v1054, 0
  %v1065 = vsel %vm145, %v1055, 0
  %v1068 = vsel %vm145, %v1056, 0
  %v1071 = vsel %vm145, %v1057, 0
  %1073 = vmatpush.bf16.msra.mxu0 0
  %1074 = vmatpush.bf16.msra.mxu0 0
  %1075 = vmatpush.bf16.msra.mxu0 0
  %1076 = vmatpush.bf16.msra.mxu0 0
  %1077 = vmatpush.bf16.msra.mxu0 0
  %1078 = vmatpush.bf16.msra.mxu0 0
  %1079 = vmatpush.bf16.msra.mxu0 0
  %1080 = vmatpush.bf16.msra.mxu0 %v1062
  %1081 = vmatmul.bf16.gmra.mxu0 %v1059
  %v1082 = vpop.f32.mrf.mxu0
  %v1083 = vadd.f32 0.0, %v1082
  %v1084 = vpop.f32.mrf.mxu0
  %1085 = vdwg.mxu0
  %1086 = vmatpush.bf16.msra.mxu0 0
  %1087 = vmatpush.bf16.msra.mxu0 0
  %1088 = vmatpush.bf16.msra.mxu0 0
  %1089 = vmatpush.bf16.msra.mxu0 0
  %1090 = vmatpush.bf16.msra.mxu0 0
  %1091 = vmatpush.bf16.msra.mxu0 0
  %1092 = vmatpush.bf16.msra.mxu0 0
  %1093 = vmatpush.bf16.msra.mxu0 %v1065
  %1094 = vmatmul.bf16.gmra.mxu0 %v1059
  %v1095 = vpop.f32.mrf.mxu0
  %v1096 = vadd.f32 0.0, %v1095
  %v1097 = vpop.f32.mrf.mxu0
  %1098 = vdwg.mxu0
  %1099 = vmatpush.bf16.msra.mxu0 0
  %1100 = vmatpush.bf16.msra.mxu0 0
  %1101 = vmatpush.bf16.msra.mxu0 0
  %1102 = vmatpush.bf16.msra.mxu0 0
  %1103 = vmatpush.bf16.msra.mxu0 0
  %1104 = vmatpush.bf16.msra.mxu0 0
  %1105 = vmatpush.bf16.msra.mxu0 0
  %1106 = vmatpush.bf16.msra.mxu0 %v1068
  %1107 = vmatmul.bf16.gmra.mxu0 %v1059
  %v1108 = vpop.f32.mrf.mxu0
  %v1109 = vadd.f32 0.0, %v1108
  %v1110 = vpop.f32.mrf.mxu0
  %1111 = vdwg.mxu0
  %1112 = vmatpush.bf16.msra.mxu0 0
  %1113 = vmatpush.bf16.msra.mxu0 0
  %1114 = vmatpush.bf16.msra.mxu0 0
  %1115 = vmatpush.bf16.msra.mxu0 0
  %1116 = vmatpush.bf16.msra.mxu0 0
  %1117 = vmatpush.bf16.msra.mxu0 0
  %1118 = vmatpush.bf16.msra.mxu0 0
  %1119 = vmatpush.bf16.msra.mxu0 %v1071
  %1120 = vmatmul.bf16.gmra.mxu0 %v1059
  %v1121 = vpop.f32.mrf.mxu0
  %v1122 = vadd.f32 0.0, %v1121
  %v1123 = vpop.f32.mrf.mxu0
  %1124 = vdwg.mxu0
  %v1126 = vsel %vm141, %v1031, 0
  %v1129 = vsel %vm145, %v1032, 0
  %v1132 = vsel %vm145, %v1033, 0
  %v1135 = vsel %vm145, %v1034, 0
  %v1138 = vsel %vm145, %v1035, 0
  %1140 = vmatpush.bf16.msra.mxu0 0
  %1141 = vmatpush.bf16.msra.mxu0 0
  %1142 = vmatpush.bf16.msra.mxu0 0
  %1143 = vmatpush.bf16.msra.mxu0 0
  %1144 = vmatpush.bf16.msra.mxu0 0
  %1145 = vmatpush.bf16.msra.mxu0 0
  %1146 = vmatpush.bf16.msra.mxu0 0
  %1147 = vmatpush.bf16.msra.mxu0 %v1129
  %1148 = vmatmul.bf16.gmra.mxu0 %v1126
  %v1149 = vpop.f32.mrf.mxu0
  %v1150 = vadd.f32 %v1083, %v1149
  %v1151 = vpop.f32.mrf.mxu0
  %1152 = vdwg.mxu0
  %1153 = vmatpush.bf16.msra.mxu0 0
  %1154 = vmatpush.bf16.msra.mxu0 0
  %1155 = vmatpush.bf16.msra.mxu0 0
  %1156 = vmatpush.bf16.msra.mxu0 0
  %1157 = vmatpush.bf16.msra.mxu0 0
  %1158 = vmatpush.bf16.msra.mxu0 0
  %1159 = vmatpush.bf16.msra.mxu0 0
  %1160 = vmatpush.bf16.msra.mxu0 %v1132
  %1161 = vmatmul.bf16.gmra.mxu0 %v1126
  %v1162 = vpop.f32.mrf.mxu0
  %v1163 = vadd.f32 %v1096, %v1162
  %v1164 = vpop.f32.mrf.mxu0
  %1165 = vdwg.mxu0
  %1166 = vmatpush.bf16.msra.mxu0 0
  %1167 = vmatpush.bf16.msra.mxu0 0
  %1168 = vmatpush.bf16.msra.mxu0 0
  %1169 = vmatpush.bf16.msra.mxu0 0
  %1170 = vmatpush.bf16.msra.mxu0 0
  %1171 = vmatpush.bf16.msra.mxu0 0
  %1172 = vmatpush.bf16.msra.mxu0 0
  %1173 = vmatpush.bf16.msra.mxu0 %v1135
  %1174 = vmatmul.bf16.gmra.mxu0 %v1126
  %v1175 = vpop.f32.mrf.mxu0
  %v1176 = vadd.f32 %v1109, %v1175
  %v1177 = vpop.f32.mrf.mxu0
  %1178 = vdwg.mxu0
  %1179 = vmatpush.bf16.msra.mxu0 0
  %1180 = vmatpush.bf16.msra.mxu0 0
  %1181 = vmatpush.bf16.msra.mxu0 0
  %1182 = vmatpush.bf16.msra.mxu0 0
  %1183 = vmatpush.bf16.msra.mxu0 0
  %1184 = vmatpush.bf16.msra.mxu0 0
  %1185 = vmatpush.bf16.msra.mxu0 0
  %1186 = vmatpush.bf16.msra.mxu0 %v1138
  %1187 = vmatmul.bf16.gmra.mxu0 %v1126
  %v1188 = vpop.f32.mrf.mxu0
  %v1189 = vadd.f32 %v1122, %v1188
  %v1190 = vpop.f32.mrf.mxu0
  %1191 = vdwg.mxu0
  %1192 = vrot.lane.b32.xlu0 %v1007, 15
  %v1193 = vpop.permute.xlu0 %1192
  %1194 = vrot.lane.b32.xlu0 %v1008, 15
  %v1195 = vpop.permute.xlu0 %1194
  %1196 = vrot.lane.b32.xlu0 %v1009, 15
  %v1197 = vpop.permute.xlu0 %1196
  %1198 = vrot.lane.b32.xlu0 %v1010, 15
  %v1199 = vpop.permute.xlu0 %1198
  %v1200 = vsel %vm285, %v1197, %v1199
  %v1201 = vsel %vm285, %v1195, %v1197
  %v1202 = vsel %vm285, %v1193, %v1195
  %v1203 = vsel %vm285, %v1199, %v1193
  %v1204 = vmul.f32 %v1203, %v291
  %v1205 = vmul.f32 %v1202, %v292
  %v1206 = vmul.f32 %v1201, %v293
  %v1207 = vmul.f32 %v1200, %v294
  %s1208 = scalar_lea.vmem %s1, 8
  %v1209 = vld [vmem:[%s1208] sm:$0xf]
  %v1210 = vpack.c.bf16 %v1204, %v1204
  %v1211 = vpack.c.bf16 %v1205, %v1205
  %v1212 = vpack.c.bf16 %v1206, %v1206
  %v1213 = vpack.c.bf16 %v1207, %v1207
  %v1215 = vsel %vm141, %v1209, 0
  %v1218 = vsel %vm145, %v1210, 0
  %v1221 = vsel %vm145, %v1211, 0
  %v1224 = vsel %vm145, %v1212, 0
  %v1227 = vsel %vm145, %v1213, 0
  %1229 = vmatpush.bf16.msra.mxu0 0
  %1230 = vmatpush.bf16.msra.mxu0 0
  %1231 = vmatpush.bf16.msra.mxu0 0
  %1232 = vmatpush.bf16.msra.mxu0 0
  %1233 = vmatpush.bf16.msra.mxu0 0
  %1234 = vmatpush.bf16.msra.mxu0 0
  %1235 = vmatpush.bf16.msra.mxu0 0
  %1236 = vmatpush.bf16.msra.mxu0 %v1218
  %1237 = vmatmul.bf16.gmra.mxu0 %v1215
  %v1238 = vpop.f32.mrf.mxu0
  %v1239 = vadd.f32 0.0, %v1238
  %v1240 = vpop.f32.mrf.mxu0
  %1241 = vdwg.mxu0
  %1242 = vmatpush.bf16.msra.mxu0 0
  %1243 = vmatpush.bf16.msra.mxu0 0
  %1244 = vmatpush.bf16.msra.mxu0 0
  %1245 = vmatpush.bf16.msra.mxu0 0
  %1246 = vmatpush.bf16.msra.mxu0 0
  %1247 = vmatpush.bf16.msra.mxu0 0
  %1248 = vmatpush.bf16.msra.mxu0 0
  %1249 = vmatpush.bf16.msra.mxu0 %v1221
  %1250 = vmatmul.bf16.gmra.mxu0 %v1215
  %v1251 = vpop.f32.mrf.mxu0
  %v1252 = vadd.f32 0.0, %v1251
  %v1253 = vpop.f32.mrf.mxu0
  %1254 = vdwg.mxu0
  %1255 = vmatpush.bf16.msra.mxu0 0
  %1256 = vmatpush.bf16.msra.mxu0 0
  %1257 = vmatpush.bf16.msra.mxu0 0
  %1258 = vmatpush.bf16.msra.mxu0 0
  %1259 = vmatpush.bf16.msra.mxu0 0
  %1260 = vmatpush.bf16.msra.mxu0 0
  %1261 = vmatpush.bf16.msra.mxu0 0
  %1262 = vmatpush.bf16.msra.mxu0 %v1224
  %1263 = vmatmul.bf16.gmra.mxu0 %v1215
  %v1264 = vpop.f32.mrf.mxu0
  %v1265 = vadd.f32 0.0, %v1264
  %v1266 = vpop.f32.mrf.mxu0
  %1267 = vdwg.mxu0
  %1268 = vmatpush.bf16.msra.mxu0 0
  %1269 = vmatpush.bf16.msra.mxu0 0
  %1270 = vmatpush.bf16.msra.mxu0 0
  %1271 = vmatpush.bf16.msra.mxu0 0
  %1272 = vmatpush.bf16.msra.mxu0 0
  %1273 = vmatpush.bf16.msra.mxu0 0
  %1274 = vmatpush.bf16.msra.mxu0 0
  %1275 = vmatpush.bf16.msra.mxu0 %v1227
  %1276 = vmatmul.bf16.gmra.mxu0 %v1215
  %v1277 = vpop.f32.mrf.mxu0
  %v1278 = vadd.f32 0.0, %v1277
  %v1279 = vpop.f32.mrf.mxu0
  %1280 = vdwg.mxu0
  %v1281 = vadd.f32 %v1150, %v1239
  %v1282 = vadd.f32 %v1163, %v1252
  %v1283 = vadd.f32 %v1176, %v1265
  %v1284 = vadd.f32 %v1189, %v1278
  %1285 = vrot.lane.b32.xlu0 %v1007, 1
  %v1286 = vpop.permute.xlu0 %1285
  %1287 = vrot.lane.b32.xlu0 %v1008, 1
  %v1288 = vpop.permute.xlu0 %1287
  %1289 = vrot.lane.b32.xlu0 %v1009, 1
  %v1290 = vpop.permute.xlu0 %1289
  %1291 = vrot.lane.b32.xlu0 %v1010, 1
  %v1292 = vpop.permute.xlu0 %1291
  %v1293 = vsel %vm388, %v1290, %v1292
  %v1294 = vsel %vm388, %v1288, %v1290
  %v1295 = vsel %vm388, %v1286, %v1288
  %v1296 = vsel %vm388, %v1292, %v1286
  %v1297 = vmul.f32 %v1296, %v394
  %v1298 = vmul.f32 %v1295, %v395
  %v1299 = vmul.f32 %v1294, %v396
  %v1300 = vmul.f32 %v1293, %v397
  %s1301 = scalar_lea.vmem %s1, 12
  %v1302 = vld [vmem:[%s1301] sm:$0xf]
  %v1303 = vpack.c.bf16 %v1297, %v1297
  %v1304 = vpack.c.bf16 %v1298, %v1298
  %v1305 = vpack.c.bf16 %v1299, %v1299
  %v1306 = vpack.c.bf16 %v1300, %v1300
  %v1308 = vsel %vm141, %v1302, 0
  %v1311 = vsel %vm145, %v1303, 0
  %v1314 = vsel %vm145, %v1304, 0
  %v1317 = vsel %vm145, %v1305, 0
  %v1320 = vsel %vm145, %v1306, 0
  %1322 = vmatpush.bf16.msra.mxu0 0
  %1323 = vmatpush.bf16.msra.mxu0 0
  %1324 = vmatpush.bf16.msra.mxu0 0
  %1325 = vmatpush.bf16.msra.mxu0 0
  %1326 = vmatpush.bf16.msra.mxu0 0
  %1327 = vmatpush.bf16.msra.mxu0 0
  %1328 = vmatpush.bf16.msra.mxu0 0
  %1329 = vmatpush.bf16.msra.mxu0 %v1311
  %1330 = vmatmul.bf16.gmra.mxu0 %v1308
  %v1331 = vpop.f32.mrf.mxu0
  %v1332 = vadd.f32 0.0, %v1331
  %v1333 = vpop.f32.mrf.mxu0
  %1334 = vdwg.mxu0
  %1335 = vmatpush.bf16.msra.mxu0 0
  %1336 = vmatpush.bf16.msra.mxu0 0
  %1337 = vmatpush.bf16.msra.mxu0 0
  %1338 = vmatpush.bf16.msra.mxu0 0
  %1339 = vmatpush.bf16.msra.mxu0 0
  %1340 = vmatpush.bf16.msra.mxu0 0
  %1341 = vmatpush.bf16.msra.mxu0 0
  %1342 = vmatpush.bf16.msra.mxu0 %v1314
  %1343 = vmatmul.bf16.gmra.mxu0 %v1308
  %v1344 = vpop.f32.mrf.mxu0
  %v1345 = vadd.f32 0.0, %v1344
  %v1346 = vpop.f32.mrf.mxu0
  %1347 = vdwg.mxu0
  %1348 = vmatpush.bf16.msra.mxu0 0
  %1349 = vmatpush.bf16.msra.mxu0 0
  %1350 = vmatpush.bf16.msra.mxu0 0
  %1351 = vmatpush.bf16.msra.mxu0 0
  %1352 = vmatpush.bf16.msra.mxu0 0
  %1353 = vmatpush.bf16.msra.mxu0 0
  %1354 = vmatpush.bf16.msra.mxu0 0
  %1355 = vmatpush.bf16.msra.mxu0 %v1317
  %1356 = vmatmul.bf16.gmra.mxu0 %v1308
  %v1357 = vpop.f32.mrf.mxu0
  %v1358 = vadd.f32 0.0, %v1357
  %v1359 = vpop.f32.mrf.mxu0
  %1360 = vdwg.mxu0
  %1361 = vmatpush.bf16.msra.mxu0 0
  %1362 = vmatpush.bf16.msra.mxu0 0
  %1363 = vmatpush.bf16.msra.mxu0 0
  %1364 = vmatpush.bf16.msra.mxu0 0
  %1365 = vmatpush.bf16.msra.mxu0 0
  %1366 = vmatpush.bf16.msra.mxu0 0
  %1367 = vmatpush.bf16.msra.mxu0 0
  %1368 = vmatpush.bf16.msra.mxu0 %v1320
  %1369 = vmatmul.bf16.gmra.mxu0 %v1308
  %v1370 = vpop.f32.mrf.mxu0
  %v1371 = vadd.f32 0.0, %v1370
  %v1372 = vpop.f32.mrf.mxu0
  %1373 = vdwg.mxu0
  %v1374 = vadd.f32 %v1281, %v1332
  %v1375 = vadd.f32 %v1282, %v1345
  %v1376 = vadd.f32 %v1283, %v1358
  %v1377 = vadd.f32 %v1284, %v1371
  %s1378 = scalar_lea.vmem %s1, 16
  %v1379 = vld [vmem:[%s1378] sm:$0xf]
  %v1380 = vpack.c.bf16 %v1007, %v1007
  %v1381 = vpack.c.bf16 %v1008, %v1008
  %v1382 = vpack.c.bf16 %v1009, %v1009
  %v1383 = vpack.c.bf16 %v1010, %v1010
  %v1385 = vsel %vm141, %v1379, 0
  %v1388 = vsel %vm145, %v1380, 0
  %v1391 = vsel %vm145, %v1381, 0
  %v1394 = vsel %vm145, %v1382, 0
  %v1397 = vsel %vm145, %v1383, 0
  %1399 = vmatpush.bf16.msra.mxu0 0
  %1400 = vmatpush.bf16.msra.mxu0 0
  %1401 = vmatpush.bf16.msra.mxu0 0
  %1402 = vmatpush.bf16.msra.mxu0 0
  %1403 = vmatpush.bf16.msra.mxu0 0
  %1404 = vmatpush.bf16.msra.mxu0 0
  %1405 = vmatpush.bf16.msra.mxu0 0
  %1406 = vmatpush.bf16.msra.mxu0 %v1388
  %1407 = vmatmul.bf16.gmra.mxu0 %v1385
  %v1408 = vpop.f32.mrf.mxu0
  %v1409 = vadd.f32 0.0, %v1408
  %v1410 = vpop.f32.mrf.mxu0
  %1411 = vdwg.mxu0
  %1412 = vmatpush.bf16.msra.mxu0 0
  %1413 = vmatpush.bf16.msra.mxu0 0
  %1414 = vmatpush.bf16.msra.mxu0 0
  %1415 = vmatpush.bf16.msra.mxu0 0
  %1416 = vmatpush.bf16.msra.mxu0 0
  %1417 = vmatpush.bf16.msra.mxu0 0
  %1418 = vmatpush.bf16.msra.mxu0 0
  %1419 = vmatpush.bf16.msra.mxu0 %v1391
  %1420 = vmatmul.bf16.gmra.mxu0 %v1385
  %v1421 = vpop.f32.mrf.mxu0
  %v1422 = vadd.f32 0.0, %v1421
  %v1423 = vpop.f32.mrf.mxu0
  %1424 = vdwg.mxu0
  %1425 = vmatpush.bf16.msra.mxu0 0
  %1426 = vmatpush.bf16.msra.mxu0 0
  %1427 = vmatpush.bf16.msra.mxu0 0
  %1428 = vmatpush.bf16.msra.mxu0 0
  %1429 = vmatpush.bf16.msra.mxu0 0
  %1430 = vmatpush.bf16.msra.mxu0 0
  %1431 = vmatpush.bf16.msra.mxu0 0
  %1432 = vmatpush.bf16.msra.mxu0 %v1394
  %1433 = vmatmul.bf16.gmra.mxu0 %v1385
  %v1434 = vpop.f32.mrf.mxu0
  %v1435 = vadd.f32 0.0, %v1434
  %v1436 = vpop.f32.mrf.mxu0
  %1437 = vdwg.mxu0
  %1438 = vmatpush.bf16.msra.mxu0 0
  %1439 = vmatpush.bf16.msra.mxu0 0
  %1440 = vmatpush.bf16.msra.mxu0 0
  %1441 = vmatpush.bf16.msra.mxu0 0
  %1442 = vmatpush.bf16.msra.mxu0 0
  %1443 = vmatpush.bf16.msra.mxu0 0
  %1444 = vmatpush.bf16.msra.mxu0 0
  %1445 = vmatpush.bf16.msra.mxu0 %v1397
  %1446 = vmatmul.bf16.gmra.mxu0 %v1385
  %v1447 = vpop.f32.mrf.mxu0
  %v1448 = vadd.f32 0.0, %v1447
  %v1449 = vpop.f32.mrf.mxu0
  %1450 = vdwg.mxu0
  %v1451 = vadd.f32 %v1374, %v1409
  %v1452 = vadd.f32 %v1375, %v1422
  %v1453 = vadd.f32 %v1376, %v1435
  %v1454 = vadd.f32 %v1377, %v1448
  %1455 = vrot.lane.b32.xlu0 %v1007, 127
  %v1456 = vpop.permute.xlu0 %1455
  %1457 = vrot.lane.b32.xlu0 %v1008, 127
  %v1458 = vpop.permute.xlu0 %1457
  %1459 = vrot.lane.b32.xlu0 %v1009, 127
  %v1460 = vpop.permute.xlu0 %1459
  %1461 = vrot.lane.b32.xlu0 %v1010, 127
  %v1462 = vpop.permute.xlu0 %1461
  %v1463 = vsel %vm568, %v1460, %v1462
  %v1464 = vsel %vm568, %v1458, %v1460
  %v1465 = vsel %vm568, %v1456, %v1458
  %v1466 = vsel %vm568, %v1462, %v1456
  %v1467 = vmul.f32 %v1465, %v574
  %v1468 = vmul.f32 %v1464, %v575
  %v1469 = vmul.f32 %v1463, %v576
  %v1470 = vmul.f32 %v1466, %v577
  %s1471 = scalar_lea.vmem %s1, 20
  %v1472 = vld [vmem:[%s1471] sm:$0xf]
  %v1473 = vpack.c.bf16 %v1467, %v1467
  %v1474 = vpack.c.bf16 %v1468, %v1468
  %v1475 = vpack.c.bf16 %v1469, %v1469
  %v1476 = vpack.c.bf16 %v1470, %v1470
  %v1478 = vsel %vm141, %v1472, 0
  %v1481 = vsel %vm145, %v1473, 0
  %v1484 = vsel %vm145, %v1474, 0
  %v1487 = vsel %vm145, %v1475, 0
  %v1490 = vsel %vm145, %v1476, 0
  %1492 = vmatpush.bf16.msra.mxu0 0
  %1493 = vmatpush.bf16.msra.mxu0 0
  %1494 = vmatpush.bf16.msra.mxu0 0
  %1495 = vmatpush.bf16.msra.mxu0 0
  %1496 = vmatpush.bf16.msra.mxu0 0
  %1497 = vmatpush.bf16.msra.mxu0 0
  %1498 = vmatpush.bf16.msra.mxu0 0
  %1499 = vmatpush.bf16.msra.mxu0 %v1481
  %1500 = vmatmul.bf16.gmra.mxu0 %v1478
  %v1501 = vpop.f32.mrf.mxu0
  %v1502 = vadd.f32 0.0, %v1501
  %v1503 = vpop.f32.mrf.mxu0
  %1504 = vdwg.mxu0
  %1505 = vmatpush.bf16.msra.mxu0 0
  %1506 = vmatpush.bf16.msra.mxu0 0
  %1507 = vmatpush.bf16.msra.mxu0 0
  %1508 = vmatpush.bf16.msra.mxu0 0
  %1509 = vmatpush.bf16.msra.mxu0 0
  %1510 = vmatpush.bf16.msra.mxu0 0
  %1511 = vmatpush.bf16.msra.mxu0 0
  %1512 = vmatpush.bf16.msra.mxu0 %v1484
  %1513 = vmatmul.bf16.gmra.mxu0 %v1478
  %v1514 = vpop.f32.mrf.mxu0
  %v1515 = vadd.f32 0.0, %v1514
  %v1516 = vpop.f32.mrf.mxu0
  %1517 = vdwg.mxu0
  %1518 = vmatpush.bf16.msra.mxu0 0
  %1519 = vmatpush.bf16.msra.mxu0 0
  %1520 = vmatpush.bf16.msra.mxu0 0
  %1521 = vmatpush.bf16.msra.mxu0 0
  %1522 = vmatpush.bf16.msra.mxu0 0
  %1523 = vmatpush.bf16.msra.mxu0 0
  %1524 = vmatpush.bf16.msra.mxu0 0
  %1525 = vmatpush.bf16.msra.mxu0 %v1487
  %1526 = vmatmul.bf16.gmra.mxu0 %v1478
  %v1527 = vpop.f32.mrf.mxu0
  %v1528 = vadd.f32 0.0, %v1527
  %v1529 = vpop.f32.mrf.mxu0
  %1530 = vdwg.mxu0
  %1531 = vmatpush.bf16.msra.mxu0 0
  %1532 = vmatpush.bf16.msra.mxu0 0
  %1533 = vmatpush.bf16.msra.mxu0 0
  %1534 = vmatpush.bf16.msra.mxu0 0
  %1535 = vmatpush.bf16.msra.mxu0 0
  %1536 = vmatpush.bf16.msra.mxu0 0
  %1537 = vmatpush.bf16.msra.mxu0 0
  %1538 = vmatpush.bf16.msra.mxu0 %v1490
  %1539 = vmatmul.bf16.gmra.mxu0 %v1478
  %v1540 = vpop.f32.mrf.mxu0
  %v1541 = vadd.f32 0.0, %v1540
  %v1542 = vpop.f32.mrf.mxu0
  %1543 = vdwg.mxu0
  %v1544 = vadd.f32 %v1451, %v1502
  %v1545 = vadd.f32 %v1452, %v1515
  %v1546 = vadd.f32 %v1453, %v1528
  %v1547 = vadd.f32 %v1454, %v1541
  %1548 = vrot.lane.b32.xlu0 %v1007, 113
  %v1549 = vpop.permute.xlu0 %1548
  %1550 = vrot.lane.b32.xlu0 %v1008, 113
  %v1551 = vpop.permute.xlu0 %1550
  %1552 = vrot.lane.b32.xlu0 %v1009, 113
  %v1553 = vpop.permute.xlu0 %1552
  %1554 = vrot.lane.b32.xlu0 %v1010, 113
  %v1555 = vpop.permute.xlu0 %1554
  %v1556 = vsel %vm671, %v1553, %v1555
  %v1557 = vsel %vm671, %v1551, %v1553
  %v1558 = vsel %vm671, %v1549, %v1551
  %v1559 = vsel %vm671, %v1555, %v1549
  %v1560 = vmul.f32 %v1558, %v677
  %v1561 = vmul.f32 %v1557, %v678
  %v1562 = vmul.f32 %v1556, %v679
  %v1563 = vmul.f32 %v1559, %v680
  %s1564 = scalar_lea.vmem %s1, 24
  %v1565 = vld [vmem:[%s1564] sm:$0xf]
  %v1566 = vpack.c.bf16 %v1560, %v1560
  %v1567 = vpack.c.bf16 %v1561, %v1561
  %v1568 = vpack.c.bf16 %v1562, %v1562
  %v1569 = vpack.c.bf16 %v1563, %v1563
  %v1571 = vsel %vm141, %v1565, 0
  %v1574 = vsel %vm145, %v1566, 0
  %v1577 = vsel %vm145, %v1567, 0
  %v1580 = vsel %vm145, %v1568, 0
  %v1583 = vsel %vm145, %v1569, 0
  %1585 = vmatpush.bf16.msra.mxu0 0
  %1586 = vmatpush.bf16.msra.mxu0 0
  %1587 = vmatpush.bf16.msra.mxu0 0
  %1588 = vmatpush.bf16.msra.mxu0 0
  %1589 = vmatpush.bf16.msra.mxu0 0
  %1590 = vmatpush.bf16.msra.mxu0 0
  %1591 = vmatpush.bf16.msra.mxu0 0
  %1592 = vmatpush.bf16.msra.mxu0 %v1574
  %1593 = vmatmul.bf16.gmra.mxu0 %v1571
  %v1594 = vpop.f32.mrf.mxu0
  %v1595 = vadd.f32 0.0, %v1594
  %v1596 = vpop.f32.mrf.mxu0
  %1597 = vdwg.mxu0
  %1598 = vmatpush.bf16.msra.mxu0 0
  %1599 = vmatpush.bf16.msra.mxu0 0
  %1600 = vmatpush.bf16.msra.mxu0 0
  %1601 = vmatpush.bf16.msra.mxu0 0
  %1602 = vmatpush.bf16.msra.mxu0 0
  %1603 = vmatpush.bf16.msra.mxu0 0
  %1604 = vmatpush.bf16.msra.mxu0 0
  %1605 = vmatpush.bf16.msra.mxu0 %v1577
  %1606 = vmatmul.bf16.gmra.mxu0 %v1571
  %v1607 = vpop.f32.mrf.mxu0
  %v1608 = vadd.f32 0.0, %v1607
  %v1609 = vpop.f32.mrf.mxu0
  %1610 = vdwg.mxu0
  %1611 = vmatpush.bf16.msra.mxu0 0
  %1612 = vmatpush.bf16.msra.mxu0 0
  %1613 = vmatpush.bf16.msra.mxu0 0
  %1614 = vmatpush.bf16.msra.mxu0 0
  %1615 = vmatpush.bf16.msra.mxu0 0
  %1616 = vmatpush.bf16.msra.mxu0 0
  %1617 = vmatpush.bf16.msra.mxu0 0
  %1618 = vmatpush.bf16.msra.mxu0 %v1580
  %1619 = vmatmul.bf16.gmra.mxu0 %v1571
  %v1620 = vpop.f32.mrf.mxu0
  %v1621 = vadd.f32 0.0, %v1620
  %v1622 = vpop.f32.mrf.mxu0
  %1623 = vdwg.mxu0
  %1624 = vmatpush.bf16.msra.mxu0 0
  %1625 = vmatpush.bf16.msra.mxu0 0
  %1626 = vmatpush.bf16.msra.mxu0 0
  %1627 = vmatpush.bf16.msra.mxu0 0
  %1628 = vmatpush.bf16.msra.mxu0 0
  %1629 = vmatpush.bf16.msra.mxu0 0
  %1630 = vmatpush.bf16.msra.mxu0 0
  %1631 = vmatpush.bf16.msra.mxu0 %v1583
  %1632 = vmatmul.bf16.gmra.mxu0 %v1571
  %v1633 = vpop.f32.mrf.mxu0
  %v1634 = vadd.f32 0.0, %v1633
  %v1635 = vpop.f32.mrf.mxu0
  %1636 = vdwg.mxu0
  %v1637 = vadd.f32 %v1544, %v1595
  %v1638 = vadd.f32 %v1545, %v1608
  %v1639 = vadd.f32 %v1546, %v1621
  %v1640 = vadd.f32 %v1547, %v1634
  %1641 = vrot.lane.b32.xlu0 %v1007, 112
  %v1642 = vpop.permute.xlu0 %1641
  %1643 = vrot.lane.b32.xlu0 %v1008, 112
  %v1644 = vpop.permute.xlu0 %1643
  %1645 = vrot.lane.b32.xlu0 %v1009, 112
  %v1646 = vpop.permute.xlu0 %1645
  %1647 = vrot.lane.b32.xlu0 %v1010, 112
  %v1648 = vpop.permute.xlu0 %1647
  %v1649 = vsel %vm774, %v1646, %v1648
  %v1650 = vsel %vm774, %v1644, %v1646
  %v1651 = vsel %vm774, %v1642, %v1644
  %v1652 = vsel %vm774, %v1648, %v1642
  %v1653 = vmul.f32 %v1651, %v780
  %v1654 = vmul.f32 %v1650, %v781
  %v1655 = vmul.f32 %v1649, %v782
  %v1656 = vmul.f32 %v1652, %v783
  %s1657 = scalar_lea.vmem %s1, 28
  %v1658 = vld [vmem:[%s1657] sm:$0xf]
  %v1659 = vpack.c.bf16 %v1653, %v1653
  %v1660 = vpack.c.bf16 %v1654, %v1654
  %v1661 = vpack.c.bf16 %v1655, %v1655
  %v1662 = vpack.c.bf16 %v1656, %v1656
  %v1664 = vsel %vm141, %v1658, 0
  %v1667 = vsel %vm145, %v1659, 0
  %v1670 = vsel %vm145, %v1660, 0
  %v1673 = vsel %vm145, %v1661, 0
  %v1676 = vsel %vm145, %v1662, 0
  %1678 = vmatpush.bf16.msra.mxu0 0
  %1679 = vmatpush.bf16.msra.mxu0 0
  %1680 = vmatpush.bf16.msra.mxu0 0
  %1681 = vmatpush.bf16.msra.mxu0 0
  %1682 = vmatpush.bf16.msra.mxu0 0
  %1683 = vmatpush.bf16.msra.mxu0 0
  %1684 = vmatpush.bf16.msra.mxu0 0
  %1685 = vmatpush.bf16.msra.mxu0 %v1667
  %1686 = vmatmul.bf16.gmra.mxu0 %v1664
  %v1687 = vpop.f32.mrf.mxu0
  %v1688 = vadd.f32 0.0, %v1687
  %v1689 = vpop.f32.mrf.mxu0
  %1690 = vdwg.mxu0
  %1691 = vmatpush.bf16.msra.mxu0 0
  %1692 = vmatpush.bf16.msra.mxu0 0
  %1693 = vmatpush.bf16.msra.mxu0 0
  %1694 = vmatpush.bf16.msra.mxu0 0
  %1695 = vmatpush.bf16.msra.mxu0 0
  %1696 = vmatpush.bf16.msra.mxu0 0
  %1697 = vmatpush.bf16.msra.mxu0 0
  %1698 = vmatpush.bf16.msra.mxu0 %v1670
  %1699 = vmatmul.bf16.gmra.mxu0 %v1664
  %v1700 = vpop.f32.mrf.mxu0
  %v1701 = vadd.f32 0.0, %v1700
  %v1702 = vpop.f32.mrf.mxu0
  %1703 = vdwg.mxu0
  %1704 = vmatpush.bf16.msra.mxu0 0
  %1705 = vmatpush.bf16.msra.mxu0 0
  %1706 = vmatpush.bf16.msra.mxu0 0
  %1707 = vmatpush.bf16.msra.mxu0 0
  %1708 = vmatpush.bf16.msra.mxu0 0
  %1709 = vmatpush.bf16.msra.mxu0 0
  %1710 = vmatpush.bf16.msra.mxu0 0
  %1711 = vmatpush.bf16.msra.mxu0 %v1673
  %1712 = vmatmul.bf16.gmra.mxu0 %v1664
  %v1713 = vpop.f32.mrf.mxu0
  %v1714 = vadd.f32 0.0, %v1713
  %v1715 = vpop.f32.mrf.mxu0
  %1716 = vdwg.mxu0
  %1717 = vmatpush.bf16.msra.mxu0 0
  %1718 = vmatpush.bf16.msra.mxu0 0
  %1719 = vmatpush.bf16.msra.mxu0 0
  %1720 = vmatpush.bf16.msra.mxu0 0
  %1721 = vmatpush.bf16.msra.mxu0 0
  %1722 = vmatpush.bf16.msra.mxu0 0
  %1723 = vmatpush.bf16.msra.mxu0 0
  %1724 = vmatpush.bf16.msra.mxu0 %v1676
  %1725 = vmatmul.bf16.gmra.mxu0 %v1664
  %v1726 = vpop.f32.mrf.mxu0
  %v1727 = vadd.f32 0.0, %v1726
  %v1728 = vpop.f32.mrf.mxu0
  %1729 = vdwg.mxu0
  %v1730 = vadd.f32 %v1637, %v1688
  %v1731 = vadd.f32 %v1638, %v1701
  %v1732 = vadd.f32 %v1639, %v1714
  %v1733 = vadd.f32 %v1640, %v1727
  %1734 = vrot.lane.b32.xlu0 %v1007, 111
  %v1735 = vpop.permute.xlu0 %1734
  %1736 = vrot.lane.b32.xlu0 %v1008, 111
  %v1737 = vpop.permute.xlu0 %1736
  %1738 = vrot.lane.b32.xlu0 %v1009, 111
  %v1739 = vpop.permute.xlu0 %1738
  %1740 = vrot.lane.b32.xlu0 %v1010, 111
  %v1741 = vpop.permute.xlu0 %1740
  %v1742 = vsel %vm877, %v1739, %v1741
  %v1743 = vsel %vm877, %v1737, %v1739
  %v1744 = vsel %vm877, %v1735, %v1737
  %v1745 = vsel %vm877, %v1741, %v1735
  %v1746 = vmul.f32 %v1744, %v883
  %v1747 = vmul.f32 %v1743, %v884
  %v1748 = vmul.f32 %v1742, %v885
  %v1749 = vmul.f32 %v1745, %v886
  %s1750 = scalar_lea.vmem %s1, 32
  %v1751 = vld [vmem:[%s1750] sm:$0xf]
  %v1752 = vpack.c.bf16 %v1746, %v1746
  %v1753 = vpack.c.bf16 %v1747, %v1747
  %v1754 = vpack.c.bf16 %v1748, %v1748
  %v1755 = vpack.c.bf16 %v1749, %v1749
  %v1757 = vsel %vm141, %v1751, 0
  %v1760 = vsel %vm145, %v1752, 0
  %v1763 = vsel %vm145, %v1753, 0
  %v1766 = vsel %vm145, %v1754, 0
  %v1769 = vsel %vm145, %v1755, 0
  %1771 = vmatpush.bf16.msra.mxu0 0
  %1772 = vmatpush.bf16.msra.mxu0 0
  %1773 = vmatpush.bf16.msra.mxu0 0
  %1774 = vmatpush.bf16.msra.mxu0 0
  %1775 = vmatpush.bf16.msra.mxu0 0
  %1776 = vmatpush.bf16.msra.mxu0 0
  %1777 = vmatpush.bf16.msra.mxu0 0
  %1778 = vmatpush.bf16.msra.mxu0 %v1760
  %1779 = vmatmul.bf16.gmra.mxu0 %v1757
  %v1780 = vpop.f32.mrf.mxu0
  %v1781 = vadd.f32 0.0, %v1780
  %v1782 = vpop.f32.mrf.mxu0
  %1783 = vdwg.mxu0
  %1784 = vmatpush.bf16.msra.mxu0 0
  %1785 = vmatpush.bf16.msra.mxu0 0
  %1786 = vmatpush.bf16.msra.mxu0 0
  %1787 = vmatpush.bf16.msra.mxu0 0
  %1788 = vmatpush.bf16.msra.mxu0 0
  %1789 = vmatpush.bf16.msra.mxu0 0
  %1790 = vmatpush.bf16.msra.mxu0 0
  %1791 = vmatpush.bf16.msra.mxu0 %v1763
  %1792 = vmatmul.bf16.gmra.mxu0 %v1757
  %v1793 = vpop.f32.mrf.mxu0
  %v1794 = vadd.f32 0.0, %v1793
  %v1795 = vpop.f32.mrf.mxu0
  %1796 = vdwg.mxu0
  %1797 = vmatpush.bf16.msra.mxu0 0
  %1798 = vmatpush.bf16.msra.mxu0 0
  %1799 = vmatpush.bf16.msra.mxu0 0
  %1800 = vmatpush.bf16.msra.mxu0 0
  %1801 = vmatpush.bf16.msra.mxu0 0
  %1802 = vmatpush.bf16.msra.mxu0 0
  %1803 = vmatpush.bf16.msra.mxu0 0
  %1804 = vmatpush.bf16.msra.mxu0 %v1766
  %1805 = vmatmul.bf16.gmra.mxu0 %v1757
  %v1806 = vpop.f32.mrf.mxu0
  %v1807 = vadd.f32 0.0, %v1806
  %v1808 = vpop.f32.mrf.mxu0
  %1809 = vdwg.mxu0
  %1810 = vmatpush.bf16.msra.mxu0 0
  %1811 = vmatpush.bf16.msra.mxu0 0
  %1812 = vmatpush.bf16.msra.mxu0 0
  %1813 = vmatpush.bf16.msra.mxu0 0
  %1814 = vmatpush.bf16.msra.mxu0 0
  %1815 = vmatpush.bf16.msra.mxu0 0
  %1816 = vmatpush.bf16.msra.mxu0 0
  %1817 = vmatpush.bf16.msra.mxu0 %v1769
  %1818 = vmatmul.bf16.gmra.mxu0 %v1757
  %v1819 = vpop.f32.mrf.mxu0
  %v1820 = vadd.f32 0.0, %v1819
  %v1821 = vpop.f32.mrf.mxu0
  %1822 = vdwg.mxu0
  %v1823 = vadd.f32 %v1730, %v1781
  %v1824 = vadd.f32 %v1731, %v1794
  %v1825 = vadd.f32 %v1732, %v1807
  %v1826 = vadd.f32 %v1733, %v1820
  %v1827 = vadd.f32 %v1823, %v1824
  %v1828 = vadd.f32 %v1827, %v1825
  %v1829 = vadd.f32 %v1828, %v1826
  %1830 = vadd.xlane.f32.xlu0 %v1829
  %v1831 = vpop.xlane.xlu0 %1830
  %v1832 = vmul.f32 %v1831, 0.001953125
  %v1833 = vsub.f32 %v1823, %v1832
  %v1834 = vsub.f32 %v1824, %v1832
  %v1835 = vsub.f32 %v1825, %v1832
  %v1836 = vsub.f32 %v1826, %v1832
  %v1837 = vmul.f32 %v1833, %v1833
  %v1838 = vmul.f32 %v1834, %v1834
  %v1839 = vmul.f32 %v1835, %v1835
  %v1840 = vmul.f32 %v1836, %v1836
  %v1841 = vadd.f32 %v1837, %v1838
  %v1842 = vadd.f32 %v1841, %v1839
  %v1843 = vadd.f32 %v1842, %v1840
  %1844 = vadd.xlane.f32.xlu0 %v1843
  %v1845 = vpop.xlane.xlu0 %1844
  %v1846 = vmul.f32 %v1845, 0.001953125
  %v1847 = vadd.f32 %v1846, 1e-05
  %v1848 = vrsqrt.pop %v1847
  %v1849 = vmul.f32 %v1848, %v1847
  %v1850 = vmul.f32 %v1849, %v1848
  %v1851 = vmul.f32 0.5, %v1850
  %v1852 = vsub.f32 1.5, %v1851
  %v1853 = vmul.f32 %v1848, %v1852
  %vm1854 = vweird.f32 %v1847
  %vm1855 = vweird.f32 %v1848
  %vm1856 = vmor %vm1854, %vm1855
  %v1857 = vsel %vm1856, %v1848, %v1853
  %v1858 = vmul.f32 %v1833, %v1857
  %v1859 = vmul.f32 %v1834, %v1857
  %v1860 = vmul.f32 %v1835, %v1857
  %v1861 = vmul.f32 %v1836, %v1857
  %v1862 = vadd.f32 %v1858, %v1003
  %v1863 = vadd.f32 %v1859, %v1004
  %v1864 = vadd.f32 %v1860, %v1005
  %v1865 = vadd.f32 %v1861, %v1006
  %v1866 = vmax.f32 %v1862, 0.0
  %v1867 = vmax.f32 %v1863, 0.0
  %v1868 = vmax.f32 %v1864, 0.0
  %v1869 = vmax.f32 %v1865, 0.0
  %s1870 = scalar_lea.vmem %s4, 32
  %1871 = vst [vmem:[%s1870] sm:$0xff] %v1866
  %1872 = vst [vmem:[%s1870 + $0x8] sm:$0xff] %v1867
  %1873 = vst [vmem:[%s1870 + $0x10] sm:$0xff] %v1868
  %1874 = vst [vmem:[%s1870 + $0x18] sm:$0xff] %v1869
  %1875 = vrot.lane.b32.xlu0 %v1866, 17
  %v1876 = vpop.permute.xlu0 %1875
  %1877 = vrot.lane.b32.xlu0 %v1867, 17
  %v1878 = vpop.permute.xlu0 %1877
  %1879 = vrot.lane.b32.xlu0 %v1868, 17
  %v1880 = vpop.permute.xlu0 %1879
  %1881 = vrot.lane.b32.xlu0 %v1869, 17
  %v1882 = vpop.permute.xlu0 %1881
  %v1883 = vsel %vm86, %v1880, %v1882
  %v1884 = vsel %vm86, %v1878, %v1880
  %v1885 = vsel %vm86, %v1876, %v1878
  %v1886 = vsel %vm86, %v1882, %v1876
  %v1887 = vmul.f32 %v1886, %v92
  %v1888 = vmul.f32 %v1885, %v93
  %v1889 = vmul.f32 %v1884, %v94
  %v1890 = vmul.f32 %v1883, %v95
  %v1891 = vld [vmem:[%s1] sm:$0xf]
  %v1892 = vpack.c.bf16 %v1887, %v1887
  %v1893 = vpack.c.bf16 %v1888, %v1888
  %v1894 = vpack.c.bf16 %v1889, %v1889
  %v1895 = vpack.c.bf16 %v1890, %v1890
  %1896 = vrot.lane.b32.xlu0 %v1866, 16
  %v1897 = vpop.permute.xlu0 %1896
  %1898 = vrot.lane.b32.xlu0 %v1867, 16
  %v1899 = vpop.permute.xlu0 %1898
  %1900 = vrot.lane.b32.xlu0 %v1868, 16
  %v1901 = vpop.permute.xlu0 %1900
  %1902 = vrot.lane.b32.xlu0 %v1869, 16
  %v1903 = vpop.permute.xlu0 %1902
  %v1904 = vsel %vm117, %v1901, %v1903
  %v1905 = vsel %vm117, %v1899, %v1901
  %v1906 = vsel %vm117, %v1897, %v1899
  %v1907 = vsel %vm117, %v1903, %v1897
  %v1908 = vmul.f32 %v1907, %v123
  %v1909 = vmul.f32 %v1906, %v124
  %v1910 = vmul.f32 %v1905, %v125
  %v1911 = vmul.f32 %v1904, %v126
  %v1912 = vld [vmem:[%s1052] sm:$0xf]
  %v1913 = vpack.c.bf16 %v1908, %v1908
  %v1914 = vpack.c.bf16 %v1909, %v1909
  %v1915 = vpack.c.bf16 %v1910, %v1910
  %v1916 = vpack.c.bf16 %v1911, %v1911
  %v1918 = vsel %vm141, %v1912, 0
  %v1921 = vsel %vm145, %v1913, 0
  %v1924 = vsel %vm145, %v1914, 0
  %v1927 = vsel %vm145, %v1915, 0
  %v1930 = vsel %vm145, %v1916, 0
  %1932 = vmatpush.bf16.msra.mxu0 0
  %1933 = vmatpush.bf16.msra.mxu0 0
  %1934 = vmatpush.bf16.msra.mxu0 0
  %1935 = vmatpush.bf16.msra.mxu0 0
  %1936 = vmatpush.bf16.msra.mxu0 0
  %1937 = vmatpush.bf16.msra.mxu0 0
  %1938 = vmatpush.bf16.msra.mxu0 0
  %1939 = vmatpush.bf16.msra.mxu0 %v1921
  %1940 = vmatmul.bf16.gmra.mxu0 %v1918
  %v1941 = vpop.f32.mrf.mxu0
  %v1942 = vadd.f32 0.0, %v1941
  %v1943 = vpop.f32.mrf.mxu0
  %1944 = vdwg.mxu0
  %1945 = vmatpush.bf16.msra.mxu0 0
  %1946 = vmatpush.bf16.msra.mxu0 0
  %1947 = vmatpush.bf16.msra.mxu0 0
  %1948 = vmatpush.bf16.msra.mxu0 0
  %1949 = vmatpush.bf16.msra.mxu0 0
  %1950 = vmatpush.bf16.msra.mxu0 0
  %1951 = vmatpush.bf16.msra.mxu0 0
  %1952 = vmatpush.bf16.msra.mxu0 %v1924
  %1953 = vmatmul.bf16.gmra.mxu0 %v1918
  %v1954 = vpop.f32.mrf.mxu0
  %v1955 = vadd.f32 0.0, %v1954
  %v1956 = vpop.f32.mrf.mxu0
  %1957 = vdwg.mxu0
  %1958 = vmatpush.bf16.msra.mxu0 0
  %1959 = vmatpush.bf16.msra.mxu0 0
  %1960 = vmatpush.bf16.msra.mxu0 0
  %1961 = vmatpush.bf16.msra.mxu0 0
  %1962 = vmatpush.bf16.msra.mxu0 0
  %1963 = vmatpush.bf16.msra.mxu0 0
  %1964 = vmatpush.bf16.msra.mxu0 0
  %1965 = vmatpush.bf16.msra.mxu0 %v1927
  %1966 = vmatmul.bf16.gmra.mxu0 %v1918
  %v1967 = vpop.f32.mrf.mxu0
  %v1968 = vadd.f32 0.0, %v1967
  %v1969 = vpop.f32.mrf.mxu0
  %1970 = vdwg.mxu0
  %1971 = vmatpush.bf16.msra.mxu0 0
  %1972 = vmatpush.bf16.msra.mxu0 0
  %1973 = vmatpush.bf16.msra.mxu0 0
  %1974 = vmatpush.bf16.msra.mxu0 0
  %1975 = vmatpush.bf16.msra.mxu0 0
  %1976 = vmatpush.bf16.msra.mxu0 0
  %1977 = vmatpush.bf16.msra.mxu0 0
  %1978 = vmatpush.bf16.msra.mxu0 %v1930
  %1979 = vmatmul.bf16.gmra.mxu0 %v1918
  %v1980 = vpop.f32.mrf.mxu0
  %v1981 = vadd.f32 0.0, %v1980
  %v1982 = vpop.f32.mrf.mxu0
  %1983 = vdwg.mxu0
  %v1985 = vsel %vm141, %v1891, 0
  %v1988 = vsel %vm145, %v1892, 0
  %v1991 = vsel %vm145, %v1893, 0
  %v1994 = vsel %vm145, %v1894, 0
  %v1997 = vsel %vm145, %v1895, 0
  %1999 = vmatpush.bf16.msra.mxu0 0
  %2000 = vmatpush.bf16.msra.mxu0 0
  %2001 = vmatpush.bf16.msra.mxu0 0
  %2002 = vmatpush.bf16.msra.mxu0 0
  %2003 = vmatpush.bf16.msra.mxu0 0
  %2004 = vmatpush.bf16.msra.mxu0 0
  %2005 = vmatpush.bf16.msra.mxu0 0
  %2006 = vmatpush.bf16.msra.mxu0 %v1988
  %2007 = vmatmul.bf16.gmra.mxu0 %v1985
  %v2008 = vpop.f32.mrf.mxu0
  %v2009 = vadd.f32 %v1942, %v2008
  %v2010 = vpop.f32.mrf.mxu0
  %2011 = vdwg.mxu0
  %2012 = vmatpush.bf16.msra.mxu0 0
  %2013 = vmatpush.bf16.msra.mxu0 0
  %2014 = vmatpush.bf16.msra.mxu0 0
  %2015 = vmatpush.bf16.msra.mxu0 0
  %2016 = vmatpush.bf16.msra.mxu0 0
  %2017 = vmatpush.bf16.msra.mxu0 0
  %2018 = vmatpush.bf16.msra.mxu0 0
  %2019 = vmatpush.bf16.msra.mxu0 %v1991
  %2020 = vmatmul.bf16.gmra.mxu0 %v1985
  %v2021 = vpop.f32.mrf.mxu0
  %v2022 = vadd.f32 %v1955, %v2021
  %v2023 = vpop.f32.mrf.mxu0
  %2024 = vdwg.mxu0
  %2025 = vmatpush.bf16.msra.mxu0 0
  %2026 = vmatpush.bf16.msra.mxu0 0
  %2027 = vmatpush.bf16.msra.mxu0 0
  %2028 = vmatpush.bf16.msra.mxu0 0
  %2029 = vmatpush.bf16.msra.mxu0 0
  %2030 = vmatpush.bf16.msra.mxu0 0
  %2031 = vmatpush.bf16.msra.mxu0 0
  %2032 = vmatpush.bf16.msra.mxu0 %v1994
  %2033 = vmatmul.bf16.gmra.mxu0 %v1985
  %v2034 = vpop.f32.mrf.mxu0
  %v2035 = vadd.f32 %v1968, %v2034
  %v2036 = vpop.f32.mrf.mxu0
  %2037 = vdwg.mxu0
  %2038 = vmatpush.bf16.msra.mxu0 0
  %2039 = vmatpush.bf16.msra.mxu0 0
  %2040 = vmatpush.bf16.msra.mxu0 0
  %2041 = vmatpush.bf16.msra.mxu0 0
  %2042 = vmatpush.bf16.msra.mxu0 0
  %2043 = vmatpush.bf16.msra.mxu0 0
  %2044 = vmatpush.bf16.msra.mxu0 0
  %2045 = vmatpush.bf16.msra.mxu0 %v1997
  %2046 = vmatmul.bf16.gmra.mxu0 %v1985
  %v2047 = vpop.f32.mrf.mxu0
  %v2048 = vadd.f32 %v1981, %v2047
  %v2049 = vpop.f32.mrf.mxu0
  %2050 = vdwg.mxu0
  %2051 = vrot.lane.b32.xlu0 %v1866, 15
  %v2052 = vpop.permute.xlu0 %2051
  %2053 = vrot.lane.b32.xlu0 %v1867, 15
  %v2054 = vpop.permute.xlu0 %2053
  %2055 = vrot.lane.b32.xlu0 %v1868, 15
  %v2056 = vpop.permute.xlu0 %2055
  %2057 = vrot.lane.b32.xlu0 %v1869, 15
  %v2058 = vpop.permute.xlu0 %2057
  %v2059 = vsel %vm285, %v2056, %v2058
  %v2060 = vsel %vm285, %v2054, %v2056
  %v2061 = vsel %vm285, %v2052, %v2054
  %v2062 = vsel %vm285, %v2058, %v2052
  %v2063 = vmul.f32 %v2062, %v291
  %v2064 = vmul.f32 %v2061, %v292
  %v2065 = vmul.f32 %v2060, %v293
  %v2066 = vmul.f32 %v2059, %v294
  %v2067 = vld [vmem:[%s1208] sm:$0xf]
  %v2068 = vpack.c.bf16 %v2063, %v2063
  %v2069 = vpack.c.bf16 %v2064, %v2064
  %v2070 = vpack.c.bf16 %v2065, %v2065
  %v2071 = vpack.c.bf16 %v2066, %v2066
  %v2073 = vsel %vm141, %v2067, 0
  %v2076 = vsel %vm145, %v2068, 0
  %v2079 = vsel %vm145, %v2069, 0
  %v2082 = vsel %vm145, %v2070, 0
  %v2085 = vsel %vm145, %v2071, 0
  %2087 = vmatpush.bf16.msra.mxu0 0
  %2088 = vmatpush.bf16.msra.mxu0 0
  %2089 = vmatpush.bf16.msra.mxu0 0
  %2090 = vmatpush.bf16.msra.mxu0 0
  %2091 = vmatpush.bf16.msra.mxu0 0
  %2092 = vmatpush.bf16.msra.mxu0 0
  %2093 = vmatpush.bf16.msra.mxu0 0
  %2094 = vmatpush.bf16.msra.mxu0 %v2076
  %2095 = vmatmul.bf16.gmra.mxu0 %v2073
  %v2096 = vpop.f32.mrf.mxu0
  %v2097 = vadd.f32 0.0, %v2096
  %v2098 = vpop.f32.mrf.mxu0
  %2099 = vdwg.mxu0
  %2100 = vmatpush.bf16.msra.mxu0 0
  %2101 = vmatpush.bf16.msra.mxu0 0
  %2102 = vmatpush.bf16.msra.mxu0 0
  %2103 = vmatpush.bf16.msra.mxu0 0
  %2104 = vmatpush.bf16.msra.mxu0 0
  %2105 = vmatpush.bf16.msra.mxu0 0
  %2106 = vmatpush.bf16.msra.mxu0 0
  %2107 = vmatpush.bf16.msra.mxu0 %v2079
  %2108 = vmatmul.bf16.gmra.mxu0 %v2073
  %v2109 = vpop.f32.mrf.mxu0
  %v2110 = vadd.f32 0.0, %v2109
  %v2111 = vpop.f32.mrf.mxu0
  %2112 = vdwg.mxu0
  %2113 = vmatpush.bf16.msra.mxu0 0
  %2114 = vmatpush.bf16.msra.mxu0 0
  %2115 = vmatpush.bf16.msra.mxu0 0
  %2116 = vmatpush.bf16.msra.mxu0 0
  %2117 = vmatpush.bf16.msra.mxu0 0
  %2118 = vmatpush.bf16.msra.mxu0 0
  %2119 = vmatpush.bf16.msra.mxu0 0
  %2120 = vmatpush.bf16.msra.mxu0 %v2082
  %2121 = vmatmul.bf16.gmra.mxu0 %v2073
  %v2122 = vpop.f32.mrf.mxu0
  %v2123 = vadd.f32 0.0, %v2122
  %v2124 = vpop.f32.mrf.mxu0
  %2125 = vdwg.mxu0
  %2126 = vmatpush.bf16.msra.mxu0 0
  %2127 = vmatpush.bf16.msra.mxu0 0
  %2128 = vmatpush.bf16.msra.mxu0 0
  %2129 = vmatpush.bf16.msra.mxu0 0
  %2130 = vmatpush.bf16.msra.mxu0 0
  %2131 = vmatpush.bf16.msra.mxu0 0
  %2132 = vmatpush.bf16.msra.mxu0 0
  %2133 = vmatpush.bf16.msra.mxu0 %v2085
  %2134 = vmatmul.bf16.gmra.mxu0 %v2073
  %v2135 = vpop.f32.mrf.mxu0
  %v2136 = vadd.f32 0.0, %v2135
  %v2137 = vpop.f32.mrf.mxu0
  %2138 = vdwg.mxu0
  %v2139 = vadd.f32 %v2009, %v2097
  %v2140 = vadd.f32 %v2022, %v2110
  %v2141 = vadd.f32 %v2035, %v2123
  %v2142 = vadd.f32 %v2048, %v2136
  %2143 = vrot.lane.b32.xlu0 %v1866, 1
  %v2144 = vpop.permute.xlu0 %2143
  %2145 = vrot.lane.b32.xlu0 %v1867, 1
  %v2146 = vpop.permute.xlu0 %2145
  %2147 = vrot.lane.b32.xlu0 %v1868, 1
  %v2148 = vpop.permute.xlu0 %2147
  %2149 = vrot.lane.b32.xlu0 %v1869, 1
  %v2150 = vpop.permute.xlu0 %2149
  %v2151 = vsel %vm388, %v2148, %v2150
  %v2152 = vsel %vm388, %v2146, %v2148
  %v2153 = vsel %vm388, %v2144, %v2146
  %v2154 = vsel %vm388, %v2150, %v2144
  %v2155 = vmul.f32 %v2154, %v394
  %v2156 = vmul.f32 %v2153, %v395
  %v2157 = vmul.f32 %v2152, %v396
  %v2158 = vmul.f32 %v2151, %v397
  %v2159 = vld [vmem:[%s1301] sm:$0xf]
  %v2160 = vpack.c.bf16 %v2155, %v2155
  %v2161 = vpack.c.bf16 %v2156, %v2156
  %v2162 = vpack.c.bf16 %v2157, %v2157
  %v2163 = vpack.c.bf16 %v2158, %v2158
  %v2165 = vsel %vm141, %v2159, 0
  %v2168 = vsel %vm145, %v2160, 0
  %v2171 = vsel %vm145, %v2161, 0
  %v2174 = vsel %vm145, %v2162, 0
  %v2177 = vsel %vm145, %v2163, 0
  %2179 = vmatpush.bf16.msra.mxu0 0
  %2180 = vmatpush.bf16.msra.mxu0 0
  %2181 = vmatpush.bf16.msra.mxu0 0
  %2182 = vmatpush.bf16.msra.mxu0 0
  %2183 = vmatpush.bf16.msra.mxu0 0
  %2184 = vmatpush.bf16.msra.mxu0 0
  %2185 = vmatpush.bf16.msra.mxu0 0
  %2186 = vmatpush.bf16.msra.mxu0 %v2168
  %2187 = vmatmul.bf16.gmra.mxu0 %v2165
  %v2188 = vpop.f32.mrf.mxu0
  %v2189 = vadd.f32 0.0, %v2188
  %v2190 = vpop.f32.mrf.mxu0
  %2191 = vdwg.mxu0
  %2192 = vmatpush.bf16.msra.mxu0 0
  %2193 = vmatpush.bf16.msra.mxu0 0
  %2194 = vmatpush.bf16.msra.mxu0 0
  %2195 = vmatpush.bf16.msra.mxu0 0
  %2196 = vmatpush.bf16.msra.mxu0 0
  %2197 = vmatpush.bf16.msra.mxu0 0
  %2198 = vmatpush.bf16.msra.mxu0 0
  %2199 = vmatpush.bf16.msra.mxu0 %v2171
  %2200 = vmatmul.bf16.gmra.mxu0 %v2165
  %v2201 = vpop.f32.mrf.mxu0
  %v2202 = vadd.f32 0.0, %v2201
  %v2203 = vpop.f32.mrf.mxu0
  %2204 = vdwg.mxu0
  %2205 = vmatpush.bf16.msra.mxu0 0
  %2206 = vmatpush.bf16.msra.mxu0 0
  %2207 = vmatpush.bf16.msra.mxu0 0
  %2208 = vmatpush.bf16.msra.mxu0 0
  %2209 = vmatpush.bf16.msra.mxu0 0
  %2210 = vmatpush.bf16.msra.mxu0 0
  %2211 = vmatpush.bf16.msra.mxu0 0
  %2212 = vmatpush.bf16.msra.mxu0 %v2174
  %2213 = vmatmul.bf16.gmra.mxu0 %v2165
  %v2214 = vpop.f32.mrf.mxu0
  %v2215 = vadd.f32 0.0, %v2214
  %v2216 = vpop.f32.mrf.mxu0
  %2217 = vdwg.mxu0
  %2218 = vmatpush.bf16.msra.mxu0 0
  %2219 = vmatpush.bf16.msra.mxu0 0
  %2220 = vmatpush.bf16.msra.mxu0 0
  %2221 = vmatpush.bf16.msra.mxu0 0
  %2222 = vmatpush.bf16.msra.mxu0 0
  %2223 = vmatpush.bf16.msra.mxu0 0
  %2224 = vmatpush.bf16.msra.mxu0 0
  %2225 = vmatpush.bf16.msra.mxu0 %v2177
  %2226 = vmatmul.bf16.gmra.mxu0 %v2165
  %v2227 = vpop.f32.mrf.mxu0
  %v2228 = vadd.f32 0.0, %v2227
  %v2229 = vpop.f32.mrf.mxu0
  %2230 = vdwg.mxu0
  %v2231 = vadd.f32 %v2139, %v2189
  %v2232 = vadd.f32 %v2140, %v2202
  %v2233 = vadd.f32 %v2141, %v2215
  %v2234 = vadd.f32 %v2142, %v2228
  %v2235 = vld [vmem:[%s1378] sm:$0xf]
  %v2236 = vpack.c.bf16 %v1866, %v1866
  %v2237 = vpack.c.bf16 %v1867, %v1867
  %v2238 = vpack.c.bf16 %v1868, %v1868
  %v2239 = vpack.c.bf16 %v1869, %v1869
  %v2241 = vsel %vm141, %v2235, 0
  %v2244 = vsel %vm145, %v2236, 0
  %v2247 = vsel %vm145, %v2237, 0
  %v2250 = vsel %vm145, %v2238, 0
  %v2253 = vsel %vm145, %v2239, 0
  %2255 = vmatpush.bf16.msra.mxu0 0
  %2256 = vmatpush.bf16.msra.mxu0 0
  %2257 = vmatpush.bf16.msra.mxu0 0
  %2258 = vmatpush.bf16.msra.mxu0 0
  %2259 = vmatpush.bf16.msra.mxu0 0
  %2260 = vmatpush.bf16.msra.mxu0 0
  %2261 = vmatpush.bf16.msra.mxu0 0
  %2262 = vmatpush.bf16.msra.mxu0 %v2244
  %2263 = vmatmul.bf16.gmra.mxu0 %v2241
  %v2264 = vpop.f32.mrf.mxu0
  %v2265 = vadd.f32 0.0, %v2264
  %v2266 = vpop.f32.mrf.mxu0
  %2267 = vdwg.mxu0
  %2268 = vmatpush.bf16.msra.mxu0 0
  %2269 = vmatpush.bf16.msra.mxu0 0
  %2270 = vmatpush.bf16.msra.mxu0 0
  %2271 = vmatpush.bf16.msra.mxu0 0
  %2272 = vmatpush.bf16.msra.mxu0 0
  %2273 = vmatpush.bf16.msra.mxu0 0
  %2274 = vmatpush.bf16.msra.mxu0 0
  %2275 = vmatpush.bf16.msra.mxu0 %v2247
  %2276 = vmatmul.bf16.gmra.mxu0 %v2241
  %v2277 = vpop.f32.mrf.mxu0
  %v2278 = vadd.f32 0.0, %v2277
  %v2279 = vpop.f32.mrf.mxu0
  %2280 = vdwg.mxu0
  %2281 = vmatpush.bf16.msra.mxu0 0
  %2282 = vmatpush.bf16.msra.mxu0 0
  %2283 = vmatpush.bf16.msra.mxu0 0
  %2284 = vmatpush.bf16.msra.mxu0 0
  %2285 = vmatpush.bf16.msra.mxu0 0
  %2286 = vmatpush.bf16.msra.mxu0 0
  %2287 = vmatpush.bf16.msra.mxu0 0
  %2288 = vmatpush.bf16.msra.mxu0 %v2250
  %2289 = vmatmul.bf16.gmra.mxu0 %v2241
  %v2290 = vpop.f32.mrf.mxu0
  %v2291 = vadd.f32 0.0, %v2290
  %v2292 = vpop.f32.mrf.mxu0
  %2293 = vdwg.mxu0
  %2294 = vmatpush.bf16.msra.mxu0 0
  %2295 = vmatpush.bf16.msra.mxu0 0
  %2296 = vmatpush.bf16.msra.mxu0 0
  %2297 = vmatpush.bf16.msra.mxu0 0
  %2298 = vmatpush.bf16.msra.mxu0 0
  %2299 = vmatpush.bf16.msra.mxu0 0
  %2300 = vmatpush.bf16.msra.mxu0 0
  %2301 = vmatpush.bf16.msra.mxu0 %v2253
  %2302 = vmatmul.bf16.gmra.mxu0 %v2241
  %v2303 = vpop.f32.mrf.mxu0
  %v2304 = vadd.f32 0.0, %v2303
  %v2305 = vpop.f32.mrf.mxu0
  %2306 = vdwg.mxu0
  %v2307 = vadd.f32 %v2231, %v2265
  %v2308 = vadd.f32 %v2232, %v2278
  %v2309 = vadd.f32 %v2233, %v2291
  %v2310 = vadd.f32 %v2234, %v2304
  %2311 = vrot.lane.b32.xlu0 %v1866, 127
  %v2312 = vpop.permute.xlu0 %2311
  %2313 = vrot.lane.b32.xlu0 %v1867, 127
  %v2314 = vpop.permute.xlu0 %2313
  %2315 = vrot.lane.b32.xlu0 %v1868, 127
  %v2316 = vpop.permute.xlu0 %2315
  %2317 = vrot.lane.b32.xlu0 %v1869, 127
  %v2318 = vpop.permute.xlu0 %2317
  %v2319 = vsel %vm568, %v2316, %v2318
  %v2320 = vsel %vm568, %v2314, %v2316
  %v2321 = vsel %vm568, %v2312, %v2314
  %v2322 = vsel %vm568, %v2318, %v2312
  %v2323 = vmul.f32 %v2321, %v574
  %v2324 = vmul.f32 %v2320, %v575
  %v2325 = vmul.f32 %v2319, %v576
  %v2326 = vmul.f32 %v2322, %v577
  %v2327 = vld [vmem:[%s1471] sm:$0xf]
  %v2328 = vpack.c.bf16 %v2323, %v2323
  %v2329 = vpack.c.bf16 %v2324, %v2324
  %v2330 = vpack.c.bf16 %v2325, %v2325
  %v2331 = vpack.c.bf16 %v2326, %v2326
  %v2333 = vsel %vm141, %v2327, 0
  %v2336 = vsel %vm145, %v2328, 0
  %v2339 = vsel %vm145, %v2329, 0
  %v2342 = vsel %vm145, %v2330, 0
  %v2345 = vsel %vm145, %v2331, 0
  %2347 = vmatpush.bf16.msra.mxu0 0
  %2348 = vmatpush.bf16.msra.mxu0 0
  %2349 = vmatpush.bf16.msra.mxu0 0
  %2350 = vmatpush.bf16.msra.mxu0 0
  %2351 = vmatpush.bf16.msra.mxu0 0
  %2352 = vmatpush.bf16.msra.mxu0 0
  %2353 = vmatpush.bf16.msra.mxu0 0
  %2354 = vmatpush.bf16.msra.mxu0 %v2336
  %2355 = vmatmul.bf16.gmra.mxu0 %v2333
  %v2356 = vpop.f32.mrf.mxu0
  %v2357 = vadd.f32 0.0, %v2356
  %v2358 = vpop.f32.mrf.mxu0
  %2359 = vdwg.mxu0
  %2360 = vmatpush.bf16.msra.mxu0 0
  %2361 = vmatpush.bf16.msra.mxu0 0
  %2362 = vmatpush.bf16.msra.mxu0 0
  %2363 = vmatpush.bf16.msra.mxu0 0
  %2364 = vmatpush.bf16.msra.mxu0 0
  %2365 = vmatpush.bf16.msra.mxu0 0
  %2366 = vmatpush.bf16.msra.mxu0 0
  %2367 = vmatpush.bf16.msra.mxu0 %v2339
  %2368 = vmatmul.bf16.gmra.mxu0 %v2333
  %v2369 = vpop.f32.mrf.mxu0
  %v2370 = vadd.f32 0.0, %v2369
  %v2371 = vpop.f32.mrf.mxu0
  %2372 = vdwg.mxu0
  %2373 = vmatpush.bf16.msra.mxu0 0
  %2374 = vmatpush.bf16.msra.mxu0 0
  %2375 = vmatpush.bf16.msra.mxu0 0
  %2376 = vmatpush.bf16.msra.mxu0 0
  %2377 = vmatpush.bf16.msra.mxu0 0
  %2378 = vmatpush.bf16.msra.mxu0 0
  %2379 = vmatpush.bf16.msra.mxu0 0
  %2380 = vmatpush.bf16.msra.mxu0 %v2342
  %2381 = vmatmul.bf16.gmra.mxu0 %v2333
  %v2382 = vpop.f32.mrf.mxu0
  %v2383 = vadd.f32 0.0, %v2382
  %v2384 = vpop.f32.mrf.mxu0
  %2385 = vdwg.mxu0
  %2386 = vmatpush.bf16.msra.mxu0 0
  %2387 = vmatpush.bf16.msra.mxu0 0
  %2388 = vmatpush.bf16.msra.mxu0 0
  %2389 = vmatpush.bf16.msra.mxu0 0
  %2390 = vmatpush.bf16.msra.mxu0 0
  %2391 = vmatpush.bf16.msra.mxu0 0
  %2392 = vmatpush.bf16.msra.mxu0 0
  %2393 = vmatpush.bf16.msra.mxu0 %v2345
  %2394 = vmatmul.bf16.gmra.mxu0 %v2333
  %v2395 = vpop.f32.mrf.mxu0
  %v2396 = vadd.f32 0.0, %v2395
  %v2397 = vpop.f32.mrf.mxu0
  %2398 = vdwg.mxu0
  %v2399 = vadd.f32 %v2307, %v2357
  %v2400 = vadd.f32 %v2308, %v2370
  %v2401 = vadd.f32 %v2309, %v2383
  %v2402 = vadd.f32 %v2310, %v2396
  %2403 = vrot.lane.b32.xlu0 %v1866, 113
  %v2404 = vpop.permute.xlu0 %2403
  %2405 = vrot.lane.b32.xlu0 %v1867, 113
  %v2406 = vpop.permute.xlu0 %2405
  %2407 = vrot.lane.b32.xlu0 %v1868, 113
  %v2408 = vpop.permute.xlu0 %2407
  %2409 = vrot.lane.b32.xlu0 %v1869, 113
  %v2410 = vpop.permute.xlu0 %2409
  %v2411 = vsel %vm671, %v2408, %v2410
  %v2412 = vsel %vm671, %v2406, %v2408
  %v2413 = vsel %vm671, %v2404, %v2406
  %v2414 = vsel %vm671, %v2410, %v2404
  %v2415 = vmul.f32 %v2413, %v677
  %v2416 = vmul.f32 %v2412, %v678
  %v2417 = vmul.f32 %v2411, %v679
  %v2418 = vmul.f32 %v2414, %v680
  %v2419 = vld [vmem:[%s1564] sm:$0xf]
  %v2420 = vpack.c.bf16 %v2415, %v2415
  %v2421 = vpack.c.bf16 %v2416, %v2416
  %v2422 = vpack.c.bf16 %v2417, %v2417
  %v2423 = vpack.c.bf16 %v2418, %v2418
  %v2425 = vsel %vm141, %v2419, 0
  %v2428 = vsel %vm145, %v2420, 0
  %v2431 = vsel %vm145, %v2421, 0
  %v2434 = vsel %vm145, %v2422, 0
  %v2437 = vsel %vm145, %v2423, 0
  %2439 = vmatpush.bf16.msra.mxu0 0
  %2440 = vmatpush.bf16.msra.mxu0 0
  %2441 = vmatpush.bf16.msra.mxu0 0
  %2442 = vmatpush.bf16.msra.mxu0 0
  %2443 = vmatpush.bf16.msra.mxu0 0
  %2444 = vmatpush.bf16.msra.mxu0 0
  %2445 = vmatpush.bf16.msra.mxu0 0
  %2446 = vmatpush.bf16.msra.mxu0 %v2428
  %2447 = vmatmul.bf16.gmra.mxu0 %v2425
  %v2448 = vpop.f32.mrf.mxu0
  %v2449 = vadd.f32 0.0, %v2448
  %v2450 = vpop.f32.mrf.mxu0
  %2451 = vdwg.mxu0
  %2452 = vmatpush.bf16.msra.mxu0 0
  %2453 = vmatpush.bf16.msra.mxu0 0
  %2454 = vmatpush.bf16.msra.mxu0 0
  %2455 = vmatpush.bf16.msra.mxu0 0
  %2456 = vmatpush.bf16.msra.mxu0 0
  %2457 = vmatpush.bf16.msra.mxu0 0
  %2458 = vmatpush.bf16.msra.mxu0 0
  %2459 = vmatpush.bf16.msra.mxu0 %v2431
  %2460 = vmatmul.bf16.gmra.mxu0 %v2425
  %v2461 = vpop.f32.mrf.mxu0
  %v2462 = vadd.f32 0.0, %v2461
  %v2463 = vpop.f32.mrf.mxu0
  %2464 = vdwg.mxu0
  %2465 = vmatpush.bf16.msra.mxu0 0
  %2466 = vmatpush.bf16.msra.mxu0 0
  %2467 = vmatpush.bf16.msra.mxu0 0
  %2468 = vmatpush.bf16.msra.mxu0 0
  %2469 = vmatpush.bf16.msra.mxu0 0
  %2470 = vmatpush.bf16.msra.mxu0 0
  %2471 = vmatpush.bf16.msra.mxu0 0
  %2472 = vmatpush.bf16.msra.mxu0 %v2434
  %2473 = vmatmul.bf16.gmra.mxu0 %v2425
  %v2474 = vpop.f32.mrf.mxu0
  %v2475 = vadd.f32 0.0, %v2474
  %v2476 = vpop.f32.mrf.mxu0
  %2477 = vdwg.mxu0
  %2478 = vmatpush.bf16.msra.mxu0 0
  %2479 = vmatpush.bf16.msra.mxu0 0
  %2480 = vmatpush.bf16.msra.mxu0 0
  %2481 = vmatpush.bf16.msra.mxu0 0
  %2482 = vmatpush.bf16.msra.mxu0 0
  %2483 = vmatpush.bf16.msra.mxu0 0
  %2484 = vmatpush.bf16.msra.mxu0 0
  %2485 = vmatpush.bf16.msra.mxu0 %v2437
  %2486 = vmatmul.bf16.gmra.mxu0 %v2425
  %v2487 = vpop.f32.mrf.mxu0
  %v2488 = vadd.f32 0.0, %v2487
  %v2489 = vpop.f32.mrf.mxu0
  %2490 = vdwg.mxu0
  %v2491 = vadd.f32 %v2399, %v2449
  %v2492 = vadd.f32 %v2400, %v2462
  %v2493 = vadd.f32 %v2401, %v2475
  %v2494 = vadd.f32 %v2402, %v2488
  %2495 = vrot.lane.b32.xlu0 %v1866, 112
  %v2496 = vpop.permute.xlu0 %2495
  %2497 = vrot.lane.b32.xlu0 %v1867, 112
  %v2498 = vpop.permute.xlu0 %2497
  %2499 = vrot.lane.b32.xlu0 %v1868, 112
  %v2500 = vpop.permute.xlu0 %2499
  %2501 = vrot.lane.b32.xlu0 %v1869, 112
  %v2502 = vpop.permute.xlu0 %2501
  %v2503 = vsel %vm774, %v2500, %v2502
  %v2504 = vsel %vm774, %v2498, %v2500
  %v2505 = vsel %vm774, %v2496, %v2498
  %v2506 = vsel %vm774, %v2502, %v2496
  %v2507 = vmul.f32 %v2505, %v780
  %v2508 = vmul.f32 %v2504, %v781
  %v2509 = vmul.f32 %v2503, %v782
  %v2510 = vmul.f32 %v2506, %v783
  %v2511 = vld [vmem:[%s1657] sm:$0xf]
  %v2512 = vpack.c.bf16 %v2507, %v2507
  %v2513 = vpack.c.bf16 %v2508, %v2508
  %v2514 = vpack.c.bf16 %v2509, %v2509
  %v2515 = vpack.c.bf16 %v2510, %v2510
  %v2517 = vsel %vm141, %v2511, 0
  %v2520 = vsel %vm145, %v2512, 0
  %v2523 = vsel %vm145, %v2513, 0
  %v2526 = vsel %vm145, %v2514, 0
  %v2529 = vsel %vm145, %v2515, 0
  %2531 = vmatpush.bf16.msra.mxu0 0
  %2532 = vmatpush.bf16.msra.mxu0 0
  %2533 = vmatpush.bf16.msra.mxu0 0
  %2534 = vmatpush.bf16.msra.mxu0 0
  %2535 = vmatpush.bf16.msra.mxu0 0
  %2536 = vmatpush.bf16.msra.mxu0 0
  %2537 = vmatpush.bf16.msra.mxu0 0
  %2538 = vmatpush.bf16.msra.mxu0 %v2520
  %2539 = vmatmul.bf16.gmra.mxu0 %v2517
  %v2540 = vpop.f32.mrf.mxu0
  %v2541 = vadd.f32 0.0, %v2540
  %v2542 = vpop.f32.mrf.mxu0
  %2543 = vdwg.mxu0
  %2544 = vmatpush.bf16.msra.mxu0 0
  %2545 = vmatpush.bf16.msra.mxu0 0
  %2546 = vmatpush.bf16.msra.mxu0 0
  %2547 = vmatpush.bf16.msra.mxu0 0
  %2548 = vmatpush.bf16.msra.mxu0 0
  %2549 = vmatpush.bf16.msra.mxu0 0
  %2550 = vmatpush.bf16.msra.mxu0 0
  %2551 = vmatpush.bf16.msra.mxu0 %v2523
  %2552 = vmatmul.bf16.gmra.mxu0 %v2517
  %v2553 = vpop.f32.mrf.mxu0
  %v2554 = vadd.f32 0.0, %v2553
  %v2555 = vpop.f32.mrf.mxu0
  %2556 = vdwg.mxu0
  %2557 = vmatpush.bf16.msra.mxu0 0
  %2558 = vmatpush.bf16.msra.mxu0 0
  %2559 = vmatpush.bf16.msra.mxu0 0
  %2560 = vmatpush.bf16.msra.mxu0 0
  %2561 = vmatpush.bf16.msra.mxu0 0
  %2562 = vmatpush.bf16.msra.mxu0 0
  %2563 = vmatpush.bf16.msra.mxu0 0
  %2564 = vmatpush.bf16.msra.mxu0 %v2526
  %2565 = vmatmul.bf16.gmra.mxu0 %v2517
  %v2566 = vpop.f32.mrf.mxu0
  %v2567 = vadd.f32 0.0, %v2566
  %v2568 = vpop.f32.mrf.mxu0
  %2569 = vdwg.mxu0
  %2570 = vmatpush.bf16.msra.mxu0 0
  %2571 = vmatpush.bf16.msra.mxu0 0
  %2572 = vmatpush.bf16.msra.mxu0 0
  %2573 = vmatpush.bf16.msra.mxu0 0
  %2574 = vmatpush.bf16.msra.mxu0 0
  %2575 = vmatpush.bf16.msra.mxu0 0
  %2576 = vmatpush.bf16.msra.mxu0 0
  %2577 = vmatpush.bf16.msra.mxu0 %v2529
  %2578 = vmatmul.bf16.gmra.mxu0 %v2517
  %v2579 = vpop.f32.mrf.mxu0
  %v2580 = vadd.f32 0.0, %v2579
  %v2581 = vpop.f32.mrf.mxu0
  %2582 = vdwg.mxu0
  %v2583 = vadd.f32 %v2491, %v2541
  %v2584 = vadd.f32 %v2492, %v2554
  %v2585 = vadd.f32 %v2493, %v2567
  %v2586 = vadd.f32 %v2494, %v2580
  %2587 = vrot.lane.b32.xlu0 %v1866, 111
  %v2588 = vpop.permute.xlu0 %2587
  %2589 = vrot.lane.b32.xlu0 %v1867, 111
  %v2590 = vpop.permute.xlu0 %2589
  %2591 = vrot.lane.b32.xlu0 %v1868, 111
  %v2592 = vpop.permute.xlu0 %2591
  %2593 = vrot.lane.b32.xlu0 %v1869, 111
  %v2594 = vpop.permute.xlu0 %2593
  %v2595 = vsel %vm877, %v2592, %v2594
  %v2596 = vsel %vm877, %v2590, %v2592
  %v2597 = vsel %vm877, %v2588, %v2590
  %v2598 = vsel %vm877, %v2594, %v2588
  %v2599 = vmul.f32 %v2597, %v883
  %v2600 = vmul.f32 %v2596, %v884
  %v2601 = vmul.f32 %v2595, %v885
  %v2602 = vmul.f32 %v2598, %v886
  %v2603 = vld [vmem:[%s1750] sm:$0xf]
  %v2604 = vpack.c.bf16 %v2599, %v2599
  %v2605 = vpack.c.bf16 %v2600, %v2600
  %v2606 = vpack.c.bf16 %v2601, %v2601
  %v2607 = vpack.c.bf16 %v2602, %v2602
  %v2609 = vsel %vm141, %v2603, 0
  %v2612 = vsel %vm145, %v2604, 0
  %v2615 = vsel %vm145, %v2605, 0
  %v2618 = vsel %vm145, %v2606, 0
  %v2621 = vsel %vm145, %v2607, 0
  %2623 = vmatpush.bf16.msra.mxu0 0
  %2624 = vmatpush.bf16.msra.mxu0 0
  %2625 = vmatpush.bf16.msra.mxu0 0
  %2626 = vmatpush.bf16.msra.mxu0 0
  %2627 = vmatpush.bf16.msra.mxu0 0
  %2628 = vmatpush.bf16.msra.mxu0 0
  %2629 = vmatpush.bf16.msra.mxu0 0
  %2630 = vmatpush.bf16.msra.mxu0 %v2612
  %2631 = vmatmul.bf16.gmra.mxu0 %v2609
  %v2632 = vpop.f32.mrf.mxu0
  %v2633 = vadd.f32 0.0, %v2632
  %v2634 = vpop.f32.mrf.mxu0
  %2635 = vdwg.mxu0
  %2636 = vmatpush.bf16.msra.mxu0 0
  %2637 = vmatpush.bf16.msra.mxu0 0
  %2638 = vmatpush.bf16.msra.mxu0 0
  %2639 = vmatpush.bf16.msra.mxu0 0
  %2640 = vmatpush.bf16.msra.mxu0 0
  %2641 = vmatpush.bf16.msra.mxu0 0
  %2642 = vmatpush.bf16.msra.mxu0 0
  %2643 = vmatpush.bf16.msra.mxu0 %v2615
  %2644 = vmatmul.bf16.gmra.mxu0 %v2609
  %v2645 = vpop.f32.mrf.mxu0
  %v2646 = vadd.f32 0.0, %v2645
  %v2647 = vpop.f32.mrf.mxu0
  %2648 = vdwg.mxu0
  %2649 = vmatpush.bf16.msra.mxu0 0
  %2650 = vmatpush.bf16.msra.mxu0 0
  %2651 = vmatpush.bf16.msra.mxu0 0
  %2652 = vmatpush.bf16.msra.mxu0 0
  %2653 = vmatpush.bf16.msra.mxu0 0
  %2654 = vmatpush.bf16.msra.mxu0 0
  %2655 = vmatpush.bf16.msra.mxu0 0
  %2656 = vmatpush.bf16.msra.mxu0 %v2618
  %2657 = vmatmul.bf16.gmra.mxu0 %v2609
  %v2658 = vpop.f32.mrf.mxu0
  %v2659 = vadd.f32 0.0, %v2658
  %v2660 = vpop.f32.mrf.mxu0
  %2661 = vdwg.mxu0
  %2662 = vmatpush.bf16.msra.mxu0 0
  %2663 = vmatpush.bf16.msra.mxu0 0
  %2664 = vmatpush.bf16.msra.mxu0 0
  %2665 = vmatpush.bf16.msra.mxu0 0
  %2666 = vmatpush.bf16.msra.mxu0 0
  %2667 = vmatpush.bf16.msra.mxu0 0
  %2668 = vmatpush.bf16.msra.mxu0 0
  %2669 = vmatpush.bf16.msra.mxu0 %v2621
  %2670 = vmatmul.bf16.gmra.mxu0 %v2609
  %v2671 = vpop.f32.mrf.mxu0
  %v2672 = vadd.f32 0.0, %v2671
  %v2673 = vpop.f32.mrf.mxu0
  %2674 = vdwg.mxu0
  %v2675 = vadd.f32 %v2583, %v2633
  %v2676 = vadd.f32 %v2584, %v2646
  %v2677 = vadd.f32 %v2585, %v2659
  %v2678 = vadd.f32 %v2586, %v2672
  %v2679 = vadd.f32 %v2675, %v2676
  %v2680 = vadd.f32 %v2679, %v2677
  %v2681 = vadd.f32 %v2680, %v2678
  %2682 = vadd.xlane.f32.xlu0 %v2681
  %v2683 = vpop.xlane.xlu0 %2682
  %v2684 = vmul.f32 %v2683, 0.001953125
  %v2685 = vsub.f32 %v2675, %v2684
  %v2686 = vsub.f32 %v2676, %v2684
  %v2687 = vsub.f32 %v2677, %v2684
  %v2688 = vsub.f32 %v2678, %v2684
  %v2689 = vmul.f32 %v2685, %v2685
  %v2690 = vmul.f32 %v2686, %v2686
  %v2691 = vmul.f32 %v2687, %v2687
  %v2692 = vmul.f32 %v2688, %v2688
  %v2693 = vadd.f32 %v2689, %v2690
  %v2694 = vadd.f32 %v2693, %v2691
  %v2695 = vadd.f32 %v2694, %v2692
  %2696 = vadd.xlane.f32.xlu0 %v2695
  %v2697 = vpop.xlane.xlu0 %2696
  %v2698 = vmul.f32 %v2697, 0.001953125
  %v2699 = vadd.f32 %v2698, 1e-05
  %v2700 = vrsqrt.pop %v2699
  %v2701 = vmul.f32 %v2700, %v2699
  %v2702 = vmul.f32 %v2701, %v2700
  %v2703 = vmul.f32 0.5, %v2702
  %v2704 = vsub.f32 1.5, %v2703
  %v2705 = vmul.f32 %v2700, %v2704
  %vm2706 = vweird.f32 %v2699
  %vm2707 = vweird.f32 %v2700
  %vm2708 = vmor %vm2706, %vm2707
  %v2709 = vsel %vm2708, %v2700, %v2705
  %v2710 = vmul.f32 %v2685, %v2709
  %v2711 = vmul.f32 %v2686, %v2709
  %v2712 = vmul.f32 %v2687, %v2709
  %v2713 = vmul.f32 %v2688, %v2709
  %v2714 = vadd.f32 %v2710, %v1003
  %v2715 = vadd.f32 %v2711, %v1004
  %v2716 = vadd.f32 %v2712, %v1005
  %v2717 = vadd.f32 %v2713, %v1006
  %v2718 = vmax.f32 %v2714, 0.0
  %v2719 = vmax.f32 %v2715, 0.0
  %v2720 = vmax.f32 %v2716, 0.0
  %v2721 = vmax.f32 %v2717, 0.0
  %s2722 = scalar_lea.vmem %s4, 64
  %2723 = vst [vmem:[%s2722] sm:$0xff] %v2718
  %2724 = vst [vmem:[%s2722 + $0x8] sm:$0xff] %v2719
  %2725 = vst [vmem:[%s2722 + $0x10] sm:$0xff] %v2720
  %2726 = vst [vmem:[%s2722 + $0x18] sm:$0xff] %v2721
  %2727 = vrot.lane.b32.xlu0 %v2718, 17
  %v2728 = vpop.permute.xlu0 %2727
  %2729 = vrot.lane.b32.xlu0 %v2719, 17
  %v2730 = vpop.permute.xlu0 %2729
  %2731 = vrot.lane.b32.xlu0 %v2720, 17
  %v2732 = vpop.permute.xlu0 %2731
  %2733 = vrot.lane.b32.xlu0 %v2721, 17
  %v2734 = vpop.permute.xlu0 %2733
  %v2735 = vsel %vm86, %v2732, %v2734
  %v2736 = vsel %vm86, %v2730, %v2732
  %v2737 = vsel %vm86, %v2728, %v2730
  %v2738 = vsel %vm86, %v2734, %v2728
  %v2739 = vmul.f32 %v2738, %v92
  %v2740 = vmul.f32 %v2737, %v93
  %v2741 = vmul.f32 %v2736, %v94
  %v2742 = vmul.f32 %v2735, %v95
  %v2743 = vld [vmem:[%s1] sm:$0xf]
  %v2744 = vpack.c.bf16 %v2739, %v2739
  %v2745 = vpack.c.bf16 %v2740, %v2740
  %v2746 = vpack.c.bf16 %v2741, %v2741
  %v2747 = vpack.c.bf16 %v2742, %v2742
  %2748 = vrot.lane.b32.xlu0 %v2718, 16
  %v2749 = vpop.permute.xlu0 %2748
  %2750 = vrot.lane.b32.xlu0 %v2719, 16
  %v2751 = vpop.permute.xlu0 %2750
  %2752 = vrot.lane.b32.xlu0 %v2720, 16
  %v2753 = vpop.permute.xlu0 %2752
  %2754 = vrot.lane.b32.xlu0 %v2721, 16
  %v2755 = vpop.permute.xlu0 %2754
  %v2756 = vsel %vm117, %v2753, %v2755
  %v2757 = vsel %vm117, %v2751, %v2753
  %v2758 = vsel %vm117, %v2749, %v2751
  %v2759 = vsel %vm117, %v2755, %v2749
  %v2760 = vmul.f32 %v2759, %v123
  %v2761 = vmul.f32 %v2758, %v124
  %v2762 = vmul.f32 %v2757, %v125
  %v2763 = vmul.f32 %v2756, %v126
  %v2764 = vld [vmem:[%s1052] sm:$0xf]
  %v2765 = vpack.c.bf16 %v2760, %v2760
  %v2766 = vpack.c.bf16 %v2761, %v2761
  %v2767 = vpack.c.bf16 %v2762, %v2762
  %v2768 = vpack.c.bf16 %v2763, %v2763
  %v2770 = vsel %vm141, %v2764, 0
  %v2773 = vsel %vm145, %v2765, 0
  %v2776 = vsel %vm145, %v2766, 0
  %v2779 = vsel %vm145, %v2767, 0
  %v2782 = vsel %vm145, %v2768, 0
  %2784 = vmatpush.bf16.msra.mxu0 0
  %2785 = vmatpush.bf16.msra.mxu0 0
  %2786 = vmatpush.bf16.msra.mxu0 0
  %2787 = vmatpush.bf16.msra.mxu0 0
  %2788 = vmatpush.bf16.msra.mxu0 0
  %2789 = vmatpush.bf16.msra.mxu0 0
  %2790 = vmatpush.bf16.msra.mxu0 0
  %2791 = vmatpush.bf16.msra.mxu0 %v2773
  %2792 = vmatmul.bf16.gmra.mxu0 %v2770
  %v2793 = vpop.f32.mrf.mxu0
  %v2794 = vadd.f32 0.0, %v2793
  %v2795 = vpop.f32.mrf.mxu0
  %2796 = vdwg.mxu0
  %2797 = vmatpush.bf16.msra.mxu0 0
  %2798 = vmatpush.bf16.msra.mxu0 0
  %2799 = vmatpush.bf16.msra.mxu0 0
  %2800 = vmatpush.bf16.msra.mxu0 0
  %2801 = vmatpush.bf16.msra.mxu0 0
  %2802 = vmatpush.bf16.msra.mxu0 0
  %2803 = vmatpush.bf16.msra.mxu0 0
  %2804 = vmatpush.bf16.msra.mxu0 %v2776
  %2805 = vmatmul.bf16.gmra.mxu0 %v2770
  %v2806 = vpop.f32.mrf.mxu0
  %v2807 = vadd.f32 0.0, %v2806
  %v2808 = vpop.f32.mrf.mxu0
  %2809 = vdwg.mxu0
  %2810 = vmatpush.bf16.msra.mxu0 0
  %2811 = vmatpush.bf16.msra.mxu0 0
  %2812 = vmatpush.bf16.msra.mxu0 0
  %2813 = vmatpush.bf16.msra.mxu0 0
  %2814 = vmatpush.bf16.msra.mxu0 0
  %2815 = vmatpush.bf16.msra.mxu0 0
  %2816 = vmatpush.bf16.msra.mxu0 0
  %2817 = vmatpush.bf16.msra.mxu0 %v2779
  %2818 = vmatmul.bf16.gmra.mxu0 %v2770
  %v2819 = vpop.f32.mrf.mxu0
  %v2820 = vadd.f32 0.0, %v2819
  %v2821 = vpop.f32.mrf.mxu0
  %2822 = vdwg.mxu0
  %2823 = vmatpush.bf16.msra.mxu0 0
  %2824 = vmatpush.bf16.msra.mxu0 0
  %2825 = vmatpush.bf16.msra.mxu0 0
  %2826 = vmatpush.bf16.msra.mxu0 0
  %2827 = vmatpush.bf16.msra.mxu0 0
  %2828 = vmatpush.bf16.msra.mxu0 0
  %2829 = vmatpush.bf16.msra.mxu0 0
  %2830 = vmatpush.bf16.msra.mxu0 %v2782
  %2831 = vmatmul.bf16.gmra.mxu0 %v2770
  %v2832 = vpop.f32.mrf.mxu0
  %v2833 = vadd.f32 0.0, %v2832
  %v2834 = vpop.f32.mrf.mxu0
  %2835 = vdwg.mxu0
  %v2837 = vsel %vm141, %v2743, 0
  %v2840 = vsel %vm145, %v2744, 0
  %v2843 = vsel %vm145, %v2745, 0
  %v2846 = vsel %vm145, %v2746, 0
  %v2849 = vsel %vm145, %v2747, 0
  %2851 = vmatpush.bf16.msra.mxu0 0
  %2852 = vmatpush.bf16.msra.mxu0 0
  %2853 = vmatpush.bf16.msra.mxu0 0
  %2854 = vmatpush.bf16.msra.mxu0 0
  %2855 = vmatpush.bf16.msra.mxu0 0
  %2856 = vmatpush.bf16.msra.mxu0 0
  %2857 = vmatpush.bf16.msra.mxu0 0
  %2858 = vmatpush.bf16.msra.mxu0 %v2840
  %2859 = vmatmul.bf16.gmra.mxu0 %v2837
  %v2860 = vpop.f32.mrf.mxu0
  %v2861 = vadd.f32 %v2794, %v2860
  %v2862 = vpop.f32.mrf.mxu0
  %2863 = vdwg.mxu0
  %2864 = vmatpush.bf16.msra.mxu0 0
  %2865 = vmatpush.bf16.msra.mxu0 0
  %2866 = vmatpush.bf16.msra.mxu0 0
  %2867 = vmatpush.bf16.msra.mxu0 0
  %2868 = vmatpush.bf16.msra.mxu0 0
  %2869 = vmatpush.bf16.msra.mxu0 0
  %2870 = vmatpush.bf16.msra.mxu0 0
  %2871 = vmatpush.bf16.msra.mxu0 %v2843
  %2872 = vmatmul.bf16.gmra.mxu0 %v2837
  %v2873 = vpop.f32.mrf.mxu0
  %v2874 = vadd.f32 %v2807, %v2873
  %v2875 = vpop.f32.mrf.mxu0
  %2876 = vdwg.mxu0
  %2877 = vmatpush.bf16.msra.mxu0 0
  %2878 = vmatpush.bf16.msra.mxu0 0
  %2879 = vmatpush.bf16.msra.mxu0 0
  %2880 = vmatpush.bf16.msra.mxu0 0
  %2881 = vmatpush.bf16.msra.mxu0 0
  %2882 = vmatpush.bf16.msra.mxu0 0
  %2883 = vmatpush.bf16.msra.mxu0 0
  %2884 = vmatpush.bf16.msra.mxu0 %v2846
  %2885 = vmatmul.bf16.gmra.mxu0 %v2837
  %v2886 = vpop.f32.mrf.mxu0
  %v2887 = vadd.f32 %v2820, %v2886
  %v2888 = vpop.f32.mrf.mxu0
  %2889 = vdwg.mxu0
  %2890 = vmatpush.bf16.msra.mxu0 0
  %2891 = vmatpush.bf16.msra.mxu0 0
  %2892 = vmatpush.bf16.msra.mxu0 0
  %2893 = vmatpush.bf16.msra.mxu0 0
  %2894 = vmatpush.bf16.msra.mxu0 0
  %2895 = vmatpush.bf16.msra.mxu0 0
  %2896 = vmatpush.bf16.msra.mxu0 0
  %2897 = vmatpush.bf16.msra.mxu0 %v2849
  %2898 = vmatmul.bf16.gmra.mxu0 %v2837
  %v2899 = vpop.f32.mrf.mxu0
  %v2900 = vadd.f32 %v2833, %v2899
  %v2901 = vpop.f32.mrf.mxu0
  %2902 = vdwg.mxu0
  %2903 = vrot.lane.b32.xlu0 %v2718, 15
  %v2904 = vpop.permute.xlu0 %2903
  %2905 = vrot.lane.b32.xlu0 %v2719, 15
  %v2906 = vpop.permute.xlu0 %2905
  %2907 = vrot.lane.b32.xlu0 %v2720, 15
  %v2908 = vpop.permute.xlu0 %2907
  %2909 = vrot.lane.b32.xlu0 %v2721, 15
  %v2910 = vpop.permute.xlu0 %2909
  %v2911 = vsel %vm285, %v2908, %v2910
  %v2912 = vsel %vm285, %v2906, %v2908
  %v2913 = vsel %vm285, %v2904, %v2906
  %v2914 = vsel %vm285, %v2910, %v2904
  %v2915 = vmul.f32 %v2914, %v291
  %v2916 = vmul.f32 %v2913, %v292
  %v2917 = vmul.f32 %v2912, %v293
  %v2918 = vmul.f32 %v2911, %v294
  %v2919 = vld [vmem:[%s1208] sm:$0xf]
  %v2920 = vpack.c.bf16 %v2915, %v2915
  %v2921 = vpack.c.bf16 %v2916, %v2916
  %v2922 = vpack.c.bf16 %v2917, %v2917
  %v2923 = vpack.c.bf16 %v2918, %v2918
  %v2925 = vsel %vm141, %v2919, 0
  %v2928 = vsel %vm145, %v2920, 0
  %v2931 = vsel %vm145, %v2921, 0
  %v2934 = vsel %vm145, %v2922, 0
  %v2937 = vsel %vm145, %v2923, 0
  %2939 = vmatpush.bf16.msra.mxu0 0
  %2940 = vmatpush.bf16.msra.mxu0 0
  %2941 = vmatpush.bf16.msra.mxu0 0
  %2942 = vmatpush.bf16.msra.mxu0 0
  %2943 = vmatpush.bf16.msra.mxu0 0
  %2944 = vmatpush.bf16.msra.mxu0 0
  %2945 = vmatpush.bf16.msra.mxu0 0
  %2946 = vmatpush.bf16.msra.mxu0 %v2928
  %2947 = vmatmul.bf16.gmra.mxu0 %v2925
  %v2948 = vpop.f32.mrf.mxu0
  %v2949 = vadd.f32 0.0, %v2948
  %v2950 = vpop.f32.mrf.mxu0
  %2951 = vdwg.mxu0
  %2952 = vmatpush.bf16.msra.mxu0 0
  %2953 = vmatpush.bf16.msra.mxu0 0
  %2954 = vmatpush.bf16.msra.mxu0 0
  %2955 = vmatpush.bf16.msra.mxu0 0
  %2956 = vmatpush.bf16.msra.mxu0 0
  %2957 = vmatpush.bf16.msra.mxu0 0
  %2958 = vmatpush.bf16.msra.mxu0 0
  %2959 = vmatpush.bf16.msra.mxu0 %v2931
  %2960 = vmatmul.bf16.gmra.mxu0 %v2925
  %v2961 = vpop.f32.mrf.mxu0
  %v2962 = vadd.f32 0.0, %v2961
  %v2963 = vpop.f32.mrf.mxu0
  %2964 = vdwg.mxu0
  %2965 = vmatpush.bf16.msra.mxu0 0
  %2966 = vmatpush.bf16.msra.mxu0 0
  %2967 = vmatpush.bf16.msra.mxu0 0
  %2968 = vmatpush.bf16.msra.mxu0 0
  %2969 = vmatpush.bf16.msra.mxu0 0
  %2970 = vmatpush.bf16.msra.mxu0 0
  %2971 = vmatpush.bf16.msra.mxu0 0
  %2972 = vmatpush.bf16.msra.mxu0 %v2934
  %2973 = vmatmul.bf16.gmra.mxu0 %v2925
  %v2974 = vpop.f32.mrf.mxu0
  %v2975 = vadd.f32 0.0, %v2974
  %v2976 = vpop.f32.mrf.mxu0
  %2977 = vdwg.mxu0
  %2978 = vmatpush.bf16.msra.mxu0 0
  %2979 = vmatpush.bf16.msra.mxu0 0
  %2980 = vmatpush.bf16.msra.mxu0 0
  %2981 = vmatpush.bf16.msra.mxu0 0
  %2982 = vmatpush.bf16.msra.mxu0 0
  %2983 = vmatpush.bf16.msra.mxu0 0
  %2984 = vmatpush.bf16.msra.mxu0 0
  %2985 = vmatpush.bf16.msra.mxu0 %v2937
  %2986 = vmatmul.bf16.gmra.mxu0 %v2925
  %v2987 = vpop.f32.mrf.mxu0
  %v2988 = vadd.f32 0.0, %v2987
  %v2989 = vpop.f32.mrf.mxu0
  %2990 = vdwg.mxu0
  %v2991 = vadd.f32 %v2861, %v2949
  %v2992 = vadd.f32 %v2874, %v2962
  %v2993 = vadd.f32 %v2887, %v2975
  %v2994 = vadd.f32 %v2900, %v2988
  %2995 = vrot.lane.b32.xlu0 %v2718, 1
  %v2996 = vpop.permute.xlu0 %2995
  %2997 = vrot.lane.b32.xlu0 %v2719, 1
  %v2998 = vpop.permute.xlu0 %2997
  %2999 = vrot.lane.b32.xlu0 %v2720, 1
  %v3000 = vpop.permute.xlu0 %2999
  %3001 = vrot.lane.b32.xlu0 %v2721, 1
  %v3002 = vpop.permute.xlu0 %3001
  %v3003 = vsel %vm388, %v3000, %v3002
  %v3004 = vsel %vm388, %v2998, %v3000
  %v3005 = vsel %vm388, %v2996, %v2998
  %v3006 = vsel %vm388, %v3002, %v2996
  %v3007 = vmul.f32 %v3006, %v394
  %v3008 = vmul.f32 %v3005, %v395
  %v3009 = vmul.f32 %v3004, %v396
  %v3010 = vmul.f32 %v3003, %v397
  %v3011 = vld [vmem:[%s1301] sm:$0xf]
  %v3012 = vpack.c.bf16 %v3007, %v3007
  %v3013 = vpack.c.bf16 %v3008, %v3008
  %v3014 = vpack.c.bf16 %v3009, %v3009
  %v3015 = vpack.c.bf16 %v3010, %v3010
  %v3017 = vsel %vm141, %v3011, 0
  %v3020 = vsel %vm145, %v3012, 0
  %v3023 = vsel %vm145, %v3013, 0
  %v3026 = vsel %vm145, %v3014, 0
  %v3029 = vsel %vm145, %v3015, 0
  %3031 = vmatpush.bf16.msra.mxu0 0
  %3032 = vmatpush.bf16.msra.mxu0 0
  %3033 = vmatpush.bf16.msra.mxu0 0
  %3034 = vmatpush.bf16.msra.mxu0 0
  %3035 = vmatpush.bf16.msra.mxu0 0
  %3036 = vmatpush.bf16.msra.mxu0 0
  %3037 = vmatpush.bf16.msra.mxu0 0
  %3038 = vmatpush.bf16.msra.mxu0 %v3020
  %3039 = vmatmul.bf16.gmra.mxu0 %v3017
  %v3040 = vpop.f32.mrf.mxu0
  %v3041 = vadd.f32 0.0, %v3040
  %v3042 = vpop.f32.mrf.mxu0
  %3043 = vdwg.mxu0
  %3044 = vmatpush.bf16.msra.mxu0 0
  %3045 = vmatpush.bf16.msra.mxu0 0
  %3046 = vmatpush.bf16.msra.mxu0 0
  %3047 = vmatpush.bf16.msra.mxu0 0
  %3048 = vmatpush.bf16.msra.mxu0 0
  %3049 = vmatpush.bf16.msra.mxu0 0
  %3050 = vmatpush.bf16.msra.mxu0 0
  %3051 = vmatpush.bf16.msra.mxu0 %v3023
  %3052 = vmatmul.bf16.gmra.mxu0 %v3017
  %v3053 = vpop.f32.mrf.mxu0
  %v3054 = vadd.f32 0.0, %v3053
  %v3055 = vpop.f32.mrf.mxu0
  %3056 = vdwg.mxu0
  %3057 = vmatpush.bf16.msra.mxu0 0
  %3058 = vmatpush.bf16.msra.mxu0 0
  %3059 = vmatpush.bf16.msra.mxu0 0
  %3060 = vmatpush.bf16.msra.mxu0 0
  %3061 = vmatpush.bf16.msra.mxu0 0
  %3062 = vmatpush.bf16.msra.mxu0 0
  %3063 = vmatpush.bf16.msra.mxu0 0
  %3064 = vmatpush.bf16.msra.mxu0 %v3026
  %3065 = vmatmul.bf16.gmra.mxu0 %v3017
  %v3066 = vpop.f32.mrf.mxu0
  %v3067 = vadd.f32 0.0, %v3066
  %v3068 = vpop.f32.mrf.mxu0
  %3069 = vdwg.mxu0
  %3070 = vmatpush.bf16.msra.mxu0 0
  %3071 = vmatpush.bf16.msra.mxu0 0
  %3072 = vmatpush.bf16.msra.mxu0 0
  %3073 = vmatpush.bf16.msra.mxu0 0
  %3074 = vmatpush.bf16.msra.mxu0 0
  %3075 = vmatpush.bf16.msra.mxu0 0
  %3076 = vmatpush.bf16.msra.mxu0 0
  %3077 = vmatpush.bf16.msra.mxu0 %v3029
  %3078 = vmatmul.bf16.gmra.mxu0 %v3017
  %v3079 = vpop.f32.mrf.mxu0
  %v3080 = vadd.f32 0.0, %v3079
  %v3081 = vpop.f32.mrf.mxu0
  %3082 = vdwg.mxu0
  %v3083 = vadd.f32 %v2991, %v3041
  %v3084 = vadd.f32 %v2992, %v3054
  %v3085 = vadd.f32 %v2993, %v3067
  %v3086 = vadd.f32 %v2994, %v3080
  %v3087 = vld [vmem:[%s1378] sm:$0xf]
  %v3088 = vpack.c.bf16 %v2718, %v2718
  %v3089 = vpack.c.bf16 %v2719, %v2719
  %v3090 = vpack.c.bf16 %v2720, %v2720
  %v3091 = vpack.c.bf16 %v2721, %v2721
  %v3093 = vsel %vm141, %v3087, 0
  %v3096 = vsel %vm145, %v3088, 0
  %v3099 = vsel %vm145, %v3089, 0
  %v3102 = vsel %vm145, %v3090, 0
  %v3105 = vsel %vm145, %v3091, 0
  %3107 = vmatpush.bf16.msra.mxu0 0
  %3108 = vmatpush.bf16.msra.mxu0 0
  %3109 = vmatpush.bf16.msra.mxu0 0
  %3110 = vmatpush.bf16.msra.mxu0 0
  %3111 = vmatpush.bf16.msra.mxu0 0
  %3112 = vmatpush.bf16.msra.mxu0 0
  %3113 = vmatpush.bf16.msra.mxu0 0
  %3114 = vmatpush.bf16.msra.mxu0 %v3096
  %3115 = vmatmul.bf16.gmra.mxu0 %v3093
  %v3116 = vpop.f32.mrf.mxu0
  %v3117 = vadd.f32 0.0, %v3116
  %v3118 = vpop.f32.mrf.mxu0
  %3119 = vdwg.mxu0
  %3120 = vmatpush.bf16.msra.mxu0 0
  %3121 = vmatpush.bf16.msra.mxu0 0
  %3122 = vmatpush.bf16.msra.mxu0 0
  %3123 = vmatpush.bf16.msra.mxu0 0
  %3124 = vmatpush.bf16.msra.mxu0 0
  %3125 = vmatpush.bf16.msra.mxu0 0
  %3126 = vmatpush.bf16.msra.mxu0 0
  %3127 = vmatpush.bf16.msra.mxu0 %v3099
  %3128 = vmatmul.bf16.gmra.mxu0 %v3093
  %v3129 = vpop.f32.mrf.mxu0
  %v3130 = vadd.f32 0.0, %v3129
  %v3131 = vpop.f32.mrf.mxu0
  %3132 = vdwg.mxu0
  %3133 = vmatpush.bf16.msra.mxu0 0
  %3134 = vmatpush.bf16.msra.mxu0 0
  %3135 = vmatpush.bf16.msra.mxu0 0
  %3136 = vmatpush.bf16.msra.mxu0 0
  %3137 = vmatpush.bf16.msra.mxu0 0
  %3138 = vmatpush.bf16.msra.mxu0 0
  %3139 = vmatpush.bf16.msra.mxu0 0
  %3140 = vmatpush.bf16.msra.mxu0 %v3102
  %3141 = vmatmul.bf16.gmra.mxu0 %v3093
  %v3142 = vpop.f32.mrf.mxu0
  %v3143 = vadd.f32 0.0, %v3142
  %v3144 = vpop.f32.mrf.mxu0
  %3145 = vdwg.mxu0
  %3146 = vmatpush.bf16.msra.mxu0 0
  %3147 = vmatpush.bf16.msra.mxu0 0
  %3148 = vmatpush.bf16.msra.mxu0 0
  %3149 = vmatpush.bf16.msra.mxu0 0
  %3150 = vmatpush.bf16.msra.mxu0 0
  %3151 = vmatpush.bf16.msra.mxu0 0
  %3152 = vmatpush.bf16.msra.mxu0 0
  %3153 = vmatpush.bf16.msra.mxu0 %v3105
  %3154 = vmatmul.bf16.gmra.mxu0 %v3093
  %v3155 = vpop.f32.mrf.mxu0
  %v3156 = vadd.f32 0.0, %v3155
  %v3157 = vpop.f32.mrf.mxu0
  %3158 = vdwg.mxu0
  %v3159 = vadd.f32 %v3083, %v3117
  %v3160 = vadd.f32 %v3084, %v3130
  %v3161 = vadd.f32 %v3085, %v3143
  %v3162 = vadd.f32 %v3086, %v3156
  %3163 = vrot.lane.b32.xlu0 %v2718, 127
  %v3164 = vpop.permute.xlu0 %3163
  %3165 = vrot.lane.b32.xlu0 %v2719, 127
  %v3166 = vpop.permute.xlu0 %3165
  %3167 = vrot.lane.b32.xlu0 %v2720, 127
  %v3168 = vpop.permute.xlu0 %3167
  %3169 = vrot.lane.b32.xlu0 %v2721, 127
  %v3170 = vpop.permute.xlu0 %3169
  %v3171 = vsel %vm568, %v3168, %v3170
  %v3172 = vsel %vm568, %v3166, %v3168
  %v3173 = vsel %vm568, %v3164, %v3166
  %v3174 = vsel %vm568, %v3170, %v3164
  %v3175 = vmul.f32 %v3173, %v574
  %v3176 = vmul.f32 %v3172, %v575
  %v3177 = vmul.f32 %v3171, %v576
  %v3178 = vmul.f32 %v3174, %v577
  %v3179 = vld [vmem:[%s1471] sm:$0xf]
  %v3180 = vpack.c.bf16 %v3175, %v3175
  %v3181 = vpack.c.bf16 %v3176, %v3176
  %v3182 = vpack.c.bf16 %v3177, %v3177
  %v3183 = vpack.c.bf16 %v3178, %v3178
  %v3185 = vsel %vm141, %v3179, 0
  %v3188 = vsel %vm145, %v3180, 0
  %v3191 = vsel %vm145, %v3181, 0
  %v3194 = vsel %vm145, %v3182, 0
  %v3197 = vsel %vm145, %v3183, 0
  %3199 = vmatpush.bf16.msra.mxu0 0
  %3200 = vmatpush.bf16.msra.mxu0 0
  %3201 = vmatpush.bf16.msra.mxu0 0
  %3202 = vmatpush.bf16.msra.mxu0 0
  %3203 = vmatpush.bf16.msra.mxu0 0
  %3204 = vmatpush.bf16.msra.mxu0 0
  %3205 = vmatpush.bf16.msra.mxu0 0
  %3206 = vmatpush.bf16.msra.mxu0 %v3188
  %3207 = vmatmul.bf16.gmra.mxu0 %v3185
  %v3208 = vpop.f32.mrf.mxu0
  %v3209 = vadd.f32 0.0, %v3208
  %v3210 = vpop.f32.mrf.mxu0
  %3211 = vdwg.mxu0
  %3212 = vmatpush.bf16.msra.mxu0 0
  %3213 = vmatpush.bf16.msra.mxu0 0
  %3214 = vmatpush.bf16.msra.mxu0 0
  %3215 = vmatpush.bf16.msra.mxu0 0
  %3216 = vmatpush.bf16.msra.mxu0 0
  %3217 = vmatpush.bf16.msra.mxu0 0
  %3218 = vmatpush.bf16.msra.mxu0 0
  %3219 = vmatpush.bf16.msra.mxu0 %v3191
  %3220 = vmatmul.bf16.gmra.mxu0 %v3185
  %v3221 = vpop.f32.mrf.mxu0
  %v3222 = vadd.f32 0.0, %v3221
  %v3223 = vpop.f32.mrf.mxu0
  %3224 = vdwg.mxu0
  %3225 = vmatpush.bf16.msra.mxu0 0
  %3226 = vmatpush.bf16.msra.mxu0 0
  %3227 = vmatpush.bf16.msra.mxu0 0
  %3228 = vmatpush.bf16.msra.mxu0 0
  %3229 = vmatpush.bf16.msra.mxu0 0
  %3230 = vmatpush.bf16.msra.mxu0 0
  %3231 = vmatpush.bf16.msra.mxu0 0
  %3232 = vmatpush.bf16.msra.mxu0 %v3194
  %3233 = vmatmul.bf16.gmra.mxu0 %v3185
  %v3234 = vpop.f32.mrf.mxu0
  %v3235 = vadd.f32 0.0, %v3234
  %v3236 = vpop.f32.mrf.mxu0
  %3237 = vdwg.mxu0
  %3238 = vmatpush.bf16.msra.mxu0 0
  %3239 = vmatpush.bf16.msra.mxu0 0
  %3240 = vmatpush.bf16.msra.mxu0 0
  %3241 = vmatpush.bf16.msra.mxu0 0
  %3242 = vmatpush.bf16.msra.mxu0 0
  %3243 = vmatpush.bf16.msra.mxu0 0
  %3244 = vmatpush.bf16.msra.mxu0 0
  %3245 = vmatpush.bf16.msra.mxu0 %v3197
  %3246 = vmatmul.bf16.gmra.mxu0 %v3185
  %v3247 = vpop.f32.mrf.mxu0
  %v3248 = vadd.f32 0.0, %v3247
  %v3249 = vpop.f32.mrf.mxu0
  %3250 = vdwg.mxu0
  %v3251 = vadd.f32 %v3159, %v3209
  %v3252 = vadd.f32 %v3160, %v3222
  %v3253 = vadd.f32 %v3161, %v3235
  %v3254 = vadd.f32 %v3162, %v3248
  %3255 = vrot.lane.b32.xlu0 %v2718, 113
  %v3256 = vpop.permute.xlu0 %3255
  %3257 = vrot.lane.b32.xlu0 %v2719, 113
  %v3258 = vpop.permute.xlu0 %3257
  %3259 = vrot.lane.b32.xlu0 %v2720, 113
  %v3260 = vpop.permute.xlu0 %3259
  %3261 = vrot.lane.b32.xlu0 %v2721, 113
  %v3262 = vpop.permute.xlu0 %3261
  %v3263 = vsel %vm671, %v3260, %v3262
  %v3264 = vsel %vm671, %v3258, %v3260
  %v3265 = vsel %vm671, %v3256, %v3258
  %v3266 = vsel %vm671, %v3262, %v3256
  %v3267 = vmul.f32 %v3265, %v677
  %v3268 = vmul.f32 %v3264, %v678
  %v3269 = vmul.f32 %v3263, %v679
  %v3270 = vmul.f32 %v3266, %v680
  %v3271 = vld [vmem:[%s1564] sm:$0xf]
  %v3272 = vpack.c.bf16 %v3267, %v3267
  %v3273 = vpack.c.bf16 %v3268, %v3268
  %v3274 = vpack.c.bf16 %v3269, %v3269
  %v3275 = vpack.c.bf16 %v3270, %v3270
  %v3277 = vsel %vm141, %v3271, 0
  %v3280 = vsel %vm145, %v3272, 0
  %v3283 = vsel %vm145, %v3273, 0
  %v3286 = vsel %vm145, %v3274, 0
  %v3289 = vsel %vm145, %v3275, 0
  %3291 = vmatpush.bf16.msra.mxu0 0
  %3292 = vmatpush.bf16.msra.mxu0 0
  %3293 = vmatpush.bf16.msra.mxu0 0
  %3294 = vmatpush.bf16.msra.mxu0 0
  %3295 = vmatpush.bf16.msra.mxu0 0
  %3296 = vmatpush.bf16.msra.mxu0 0
  %3297 = vmatpush.bf16.msra.mxu0 0
  %3298 = vmatpush.bf16.msra.mxu0 %v3280
  %3299 = vmatmul.bf16.gmra.mxu0 %v3277
  %v3300 = vpop.f32.mrf.mxu0
  %v3301 = vadd.f32 0.0, %v3300
  %v3302 = vpop.f32.mrf.mxu0
  %3303 = vdwg.mxu0
  %3304 = vmatpush.bf16.msra.mxu0 0
  %3305 = vmatpush.bf16.msra.mxu0 0
  %3306 = vmatpush.bf16.msra.mxu0 0
  %3307 = vmatpush.bf16.msra.mxu0 0
  %3308 = vmatpush.bf16.msra.mxu0 0
  %3309 = vmatpush.bf16.msra.mxu0 0
  %3310 = vmatpush.bf16.msra.mxu0 0
  %3311 = vmatpush.bf16.msra.mxu0 %v3283
  %3312 = vmatmul.bf16.gmra.mxu0 %v3277
  %v3313 = vpop.f32.mrf.mxu0
  %v3314 = vadd.f32 0.0, %v3313
  %v3315 = vpop.f32.mrf.mxu0
  %3316 = vdwg.mxu0
  %3317 = vmatpush.bf16.msra.mxu0 0
  %3318 = vmatpush.bf16.msra.mxu0 0
  %3319 = vmatpush.bf16.msra.mxu0 0
  %3320 = vmatpush.bf16.msra.mxu0 0
  %3321 = vmatpush.bf16.msra.mxu0 0
  %3322 = vmatpush.bf16.msra.mxu0 0
  %3323 = vmatpush.bf16.msra.mxu0 0
  %3324 = vmatpush.bf16.msra.mxu0 %v3286
  %3325 = vmatmul.bf16.gmra.mxu0 %v3277
  %v3326 = vpop.f32.mrf.mxu0
  %v3327 = vadd.f32 0.0, %v3326
  %v3328 = vpop.f32.mrf.mxu0
  %3329 = vdwg.mxu0
  %3330 = vmatpush.bf16.msra.mxu0 0
  %3331 = vmatpush.bf16.msra.mxu0 0
  %3332 = vmatpush.bf16.msra.mxu0 0
  %3333 = vmatpush.bf16.msra.mxu0 0
  %3334 = vmatpush.bf16.msra.mxu0 0
  %3335 = vmatpush.bf16.msra.mxu0 0
  %3336 = vmatpush.bf16.msra.mxu0 0
  %3337 = vmatpush.bf16.msra.mxu0 %v3289
  %3338 = vmatmul.bf16.gmra.mxu0 %v3277
  %v3339 = vpop.f32.mrf.mxu0
  %v3340 = vadd.f32 0.0, %v3339
  %v3341 = vpop.f32.mrf.mxu0
  %3342 = vdwg.mxu0
  %v3343 = vadd.f32 %v3251, %v3301
  %v3344 = vadd.f32 %v3252, %v3314
  %v3345 = vadd.f32 %v3253, %v3327
  %v3346 = vadd.f32 %v3254, %v3340
  %3347 = vrot.lane.b32.xlu0 %v2718, 112
  %v3348 = vpop.permute.xlu0 %3347
  %3349 = vrot.lane.b32.xlu0 %v2719, 112
  %v3350 = vpop.permute.xlu0 %3349
  %3351 = vrot.lane.b32.xlu0 %v2720, 112
  %v3352 = vpop.permute.xlu0 %3351
  %3353 = vrot.lane.b32.xlu0 %v2721, 112
  %v3354 = vpop.permute.xlu0 %3353
  %v3355 = vsel %vm774, %v3352, %v3354
  %v3356 = vsel %vm774, %v3350, %v3352
  %v3357 = vsel %vm774, %v3348, %v3350
  %v3358 = vsel %vm774, %v3354, %v3348
  %v3359 = vmul.f32 %v3357, %v780
  %v3360 = vmul.f32 %v3356, %v781
  %v3361 = vmul.f32 %v3355, %v782
  %v3362 = vmul.f32 %v3358, %v783
  %v3363 = vld [vmem:[%s1657] sm:$0xf]
  %v3364 = vpack.c.bf16 %v3359, %v3359
  %v3365 = vpack.c.bf16 %v3360, %v3360
  %v3366 = vpack.c.bf16 %v3361, %v3361
  %v3367 = vpack.c.bf16 %v3362, %v3362
  %v3369 = vsel %vm141, %v3363, 0
  %v3372 = vsel %vm145, %v3364, 0
  %v3375 = vsel %vm145, %v3365, 0
  %v3378 = vsel %vm145, %v3366, 0
  %v3381 = vsel %vm145, %v3367, 0
  %3383 = vmatpush.bf16.msra.mxu0 0
  %3384 = vmatpush.bf16.msra.mxu0 0
  %3385 = vmatpush.bf16.msra.mxu0 0
  %3386 = vmatpush.bf16.msra.mxu0 0
  %3387 = vmatpush.bf16.msra.mxu0 0
  %3388 = vmatpush.bf16.msra.mxu0 0
  %3389 = vmatpush.bf16.msra.mxu0 0
  %3390 = vmatpush.bf16.msra.mxu0 %v3372
  %3391 = vmatmul.bf16.gmra.mxu0 %v3369
  %v3392 = vpop.f32.mrf.mxu0
  %v3393 = vadd.f32 0.0, %v3392
  %v3394 = vpop.f32.mrf.mxu0
  %3395 = vdwg.mxu0
  %3396 = vmatpush.bf16.msra.mxu0 0
  %3397 = vmatpush.bf16.msra.mxu0 0
  %3398 = vmatpush.bf16.msra.mxu0 0
  %3399 = vmatpush.bf16.msra.mxu0 0
  %3400 = vmatpush.bf16.msra.mxu0 0
  %3401 = vmatpush.bf16.msra.mxu0 0
  %3402 = vmatpush.bf16.msra.mxu0 0
  %3403 = vmatpush.bf16.msra.mxu0 %v3375
  %3404 = vmatmul.bf16.gmra.mxu0 %v3369
  %v3405 = vpop.f32.mrf.mxu0
  %v3406 = vadd.f32 0.0, %v3405
  %v3407 = vpop.f32.mrf.mxu0
  %3408 = vdwg.mxu0
  %3409 = vmatpush.bf16.msra.mxu0 0
  %3410 = vmatpush.bf16.msra.mxu0 0
  %3411 = vmatpush.bf16.msra.mxu0 0
  %3412 = vmatpush.bf16.msra.mxu0 0
  %3413 = vmatpush.bf16.msra.mxu0 0
  %3414 = vmatpush.bf16.msra.mxu0 0
  %3415 = vmatpush.bf16.msra.mxu0 0
  %3416 = vmatpush.bf16.msra.mxu0 %v3378
  %3417 = vmatmul.bf16.gmra.mxu0 %v3369
  %v3418 = vpop.f32.mrf.mxu0
  %v3419 = vadd.f32 0.0, %v3418
  %v3420 = vpop.f32.mrf.mxu0
  %3421 = vdwg.mxu0
  %3422 = vmatpush.bf16.msra.mxu0 0
  %3423 = vmatpush.bf16.msra.mxu0 0
  %3424 = vmatpush.bf16.msra.mxu0 0
  %3425 = vmatpush.bf16.msra.mxu0 0
  %3426 = vmatpush.bf16.msra.mxu0 0
  %3427 = vmatpush.bf16.msra.mxu0 0
  %3428 = vmatpush.bf16.msra.mxu0 0
  %3429 = vmatpush.bf16.msra.mxu0 %v3381
  %3430 = vmatmul.bf16.gmra.mxu0 %v3369
  %v3431 = vpop.f32.mrf.mxu0
  %v3432 = vadd.f32 0.0, %v3431
  %v3433 = vpop.f32.mrf.mxu0
  %3434 = vdwg.mxu0
  %v3435 = vadd.f32 %v3343, %v3393
  %v3436 = vadd.f32 %v3344, %v3406
  %v3437 = vadd.f32 %v3345, %v3419
  %v3438 = vadd.f32 %v3346, %v3432
  %3439 = vrot.lane.b32.xlu0 %v2718, 111
  %v3440 = vpop.permute.xlu0 %3439
  %3441 = vrot.lane.b32.xlu0 %v2719, 111
  %v3442 = vpop.permute.xlu0 %3441
  %3443 = vrot.lane.b32.xlu0 %v2720, 111
  %v3444 = vpop.permute.xlu0 %3443
  %3445 = vrot.lane.b32.xlu0 %v2721, 111
  %v3446 = vpop.permute.xlu0 %3445
  %v3447 = vsel %vm877, %v3444, %v3446
  %v3448 = vsel %vm877, %v3442, %v3444
  %v3449 = vsel %vm877, %v3440, %v3442
  %v3450 = vsel %vm877, %v3446, %v3440
  %v3451 = vmul.f32 %v3449, %v883
  %v3452 = vmul.f32 %v3448, %v884
  %v3453 = vmul.f32 %v3447, %v885
  %v3454 = vmul.f32 %v3450, %v886
  %v3455 = vld [vmem:[%s1750] sm:$0xf]
  %v3456 = vpack.c.bf16 %v3451, %v3451
  %v3457 = vpack.c.bf16 %v3452, %v3452
  %v3458 = vpack.c.bf16 %v3453, %v3453
  %v3459 = vpack.c.bf16 %v3454, %v3454
  %v3461 = vsel %vm141, %v3455, 0
  %v3464 = vsel %vm145, %v3456, 0
  %v3467 = vsel %vm145, %v3457, 0
  %v3470 = vsel %vm145, %v3458, 0
  %v3473 = vsel %vm145, %v3459, 0
  %3475 = vmatpush.bf16.msra.mxu0 0
  %3476 = vmatpush.bf16.msra.mxu0 0
  %3477 = vmatpush.bf16.msra.mxu0 0
  %3478 = vmatpush.bf16.msra.mxu0 0
  %3479 = vmatpush.bf16.msra.mxu0 0
  %3480 = vmatpush.bf16.msra.mxu0 0
  %3481 = vmatpush.bf16.msra.mxu0 0
  %3482 = vmatpush.bf16.msra.mxu0 %v3464
  %3483 = vmatmul.bf16.gmra.mxu0 %v3461
  %v3484 = vpop.f32.mrf.mxu0
  %v3485 = vadd.f32 0.0, %v3484
  %v3486 = vpop.f32.mrf.mxu0
  %3487 = vdwg.mxu0
  %3488 = vmatpush.bf16.msra.mxu0 0
  %3489 = vmatpush.bf16.msra.mxu0 0
  %3490 = vmatpush.bf16.msra.mxu0 0
  %3491 = vmatpush.bf16.msra.mxu0 0
  %3492 = vmatpush.bf16.msra.mxu0 0
  %3493 = vmatpush.bf16.msra.mxu0 0
  %3494 = vmatpush.bf16.msra.mxu0 0
  %3495 = vmatpush.bf16.msra.mxu0 %v3467
  %3496 = vmatmul.bf16.gmra.mxu0 %v3461
  %v3497 = vpop.f32.mrf.mxu0
  %v3498 = vadd.f32 0.0, %v3497
  %v3499 = vpop.f32.mrf.mxu0
  %3500 = vdwg.mxu0
  %3501 = vmatpush.bf16.msra.mxu0 0
  %3502 = vmatpush.bf16.msra.mxu0 0
  %3503 = vmatpush.bf16.msra.mxu0 0
  %3504 = vmatpush.bf16.msra.mxu0 0
  %3505 = vmatpush.bf16.msra.mxu0 0
  %3506 = vmatpush.bf16.msra.mxu0 0
  %3507 = vmatpush.bf16.msra.mxu0 0
  %3508 = vmatpush.bf16.msra.mxu0 %v3470
  %3509 = vmatmul.bf16.gmra.mxu0 %v3461
  %v3510 = vpop.f32.mrf.mxu0
  %v3511 = vadd.f32 0.0, %v3510
  %v3512 = vpop.f32.mrf.mxu0
  %3513 = vdwg.mxu0
  %3514 = vmatpush.bf16.msra.mxu0 0
  %3515 = vmatpush.bf16.msra.mxu0 0
  %3516 = vmatpush.bf16.msra.mxu0 0
  %3517 = vmatpush.bf16.msra.mxu0 0
  %3518 = vmatpush.bf16.msra.mxu0 0
  %3519 = vmatpush.bf16.msra.mxu0 0
  %3520 = vmatpush.bf16.msra.mxu0 0
  %3521 = vmatpush.bf16.msra.mxu0 %v3473
  %3522 = vmatmul.bf16.gmra.mxu0 %v3461
  %v3523 = vpop.f32.mrf.mxu0
  %v3524 = vadd.f32 0.0, %v3523
  %v3525 = vpop.f32.mrf.mxu0
  %3526 = vdwg.mxu0
  %v3527 = vadd.f32 %v3435, %v3485
  %v3528 = vadd.f32 %v3436, %v3498
  %v3529 = vadd.f32 %v3437, %v3511
  %v3530 = vadd.f32 %v3438, %v3524
  %v3531 = vadd.f32 %v3527, %v3528
  %v3532 = vadd.f32 %v3531, %v3529
  %v3533 = vadd.f32 %v3532, %v3530
  %3534 = vadd.xlane.f32.xlu0 %v3533
  %v3535 = vpop.xlane.xlu0 %3534
  %v3536 = vmul.f32 %v3535, 0.001953125
  %v3537 = vsub.f32 %v3527, %v3536
  %v3538 = vsub.f32 %v3528, %v3536
  %v3539 = vsub.f32 %v3529, %v3536
  %v3540 = vsub.f32 %v3530, %v3536
  %v3541 = vmul.f32 %v3537, %v3537
  %v3542 = vmul.f32 %v3538, %v3538
  %v3543 = vmul.f32 %v3539, %v3539
  %v3544 = vmul.f32 %v3540, %v3540
  %v3545 = vadd.f32 %v3541, %v3542
  %v3546 = vadd.f32 %v3545, %v3543
  %v3547 = vadd.f32 %v3546, %v3544
  %3548 = vadd.xlane.f32.xlu0 %v3547
  %v3549 = vpop.xlane.xlu0 %3548
  %v3550 = vmul.f32 %v3549, 0.001953125
  %v3551 = vadd.f32 %v3550, 1e-05
  %v3552 = vrsqrt.pop %v3551
  %v3553 = vmul.f32 %v3552, %v3551
  %v3554 = vmul.f32 %v3553, %v3552
  %v3555 = vmul.f32 0.5, %v3554
  %v3556 = vsub.f32 1.5, %v3555
  %v3557 = vmul.f32 %v3552, %v3556
  %vm3558 = vweird.f32 %v3551
  %vm3559 = vweird.f32 %v3552
  %vm3560 = vmor %vm3558, %vm3559
  %v3561 = vsel %vm3560, %v3552, %v3557
  %v3562 = vmul.f32 %v3537, %v3561
  %v3563 = vmul.f32 %v3538, %v3561
  %v3564 = vmul.f32 %v3539, %v3561
  %v3565 = vmul.f32 %v3540, %v3561
  %v3566 = vadd.f32 %v3562, %v1003
  %v3567 = vadd.f32 %v3563, %v1004
  %v3568 = vadd.f32 %v3564, %v1005
  %v3569 = vadd.f32 %v3565, %v1006
  %v3570 = vmax.f32 %v3566, 0.0
  %v3571 = vmax.f32 %v3567, 0.0
  %v3572 = vmax.f32 %v3568, 0.0
  %v3573 = vmax.f32 %v3569, 0.0
  %s3574 = scalar_lea.vmem %s4, 96
  %3575 = vst [vmem:[%s3574] sm:$0xff] %v3570
  %3576 = vst [vmem:[%s3574 + $0x8] sm:$0xff] %v3571
  %3577 = vst [vmem:[%s3574 + $0x10] sm:$0xff] %v3572
  %3578 = vst [vmem:[%s3574 + $0x18] sm:$0xff] %v3573
  // Predicated region
  $region18: #{spiking_rcl_bn6_forward.1} parent=0 // pred_check
    _
  $region19: #{spiking_rcl_bn6_forward.1} parent=0 // pred_check_branch
    %3580 = sbr.rel (0) target = $region21
  $region20: #{spiking_rcl_bn6_forward.1} parent=0 // pred_region
    _
  $region21: #{spiking_rcl_bn6_forward.1} parent=0 // pred_fallthru
    _
  // Predicated region
  $region22: #{spiking_rcl_bn6_forward.1} parent=0 // pred_check
    _
  $region23: #{spiking_rcl_bn6_forward.1} parent=0 // pred_check_branch
    %3582 = sbr.rel (0) target = $region25
  $region24: #{spiking_rcl_bn6_forward.1} parent=0 // pred_region
    _
  $region25: #{spiking_rcl_bn6_forward.1} parent=0 // pred_fallthru
    _

</llo_original>
